<compile_context>
chip_gen: v7x
topology: tpu7x:2x2x1
jax: 0.10.0
libtpu: 0.0.40
codegen_flags: <defaults>
</compile_context>

<pallas_src>
import math
from functools import partial

import jax
import jax.numpy as jnp
from jax.experimental import pallas as pl
from jax.experimental.pallas import tpu as pltpu


def _layer_norm(x, gamma, beta, eps=1e-5):
    mu = jnp.mean(x, axis=-1, keepdims=True)
    var = jnp.mean(jnp.square(x - mu), axis=-1, keepdims=True)
    return (x - mu) * jax.lax.rsqrt(var + eps) * gamma + beta


# ----------------------------------------------------------------------------
# Fused kernel: conv+PE (step 0) -> num_layers transformer layers -> mean pool
# ----------------------------------------------------------------------------
def fused_timemae_kernel(xunf_ref, cw_ref, pe_ref, cb_ref,
                         wqkv_ref, bqkv_ref, wo_ref, bo_ref,
                         g1_ref, be1_ref,
                         w1_ref, fb1_ref, w2_ref, fb2_ref,
                         g2_ref, be2_ref,
                         o_ref, h_ref, ctx_ref, *, batch, seq, nhead):
    l = pl.program_id(0)
    R, D = h_ref.shape
    dh = D // nhead
    scale = 1.0 / math.sqrt(dh)

    # ---- grid step 0: feature extractor (Conv1d as bf16 matmul) + pos. enc.
    @pl.when(l == 0)
    def _():
        ck = xunf_ref.shape[-1]
        x2 = xunf_ref[...].reshape(R, ck)                         # (B*S, C*K) bf16
        feat = jnp.dot(x2, cw_ref[...],
                       preferred_element_type=jnp.float32)        # (R, D) f32
        # broadcast-add PE (S, D) per batch and conv bias (1, D)
        feat = feat.reshape(batch, seq, D) + pe_ref[...] + cb_ref[...]
        h_ref[...] = feat.reshape(R, D)

    x = h_ref[...]                                                 # (R, D) f32
    xb = x.astype(jnp.bfloat16)

    # ---- fused Q/K/V projection: one (R, D) x (D, 3D) matmul (lane-dense 3D)
    qkv = jnp.dot(xb, wqkv_ref[0],
                  preferred_element_type=jnp.float32) + bqkv_ref[0]   # (R, 3D)

    # ---- per-head attention (static unroll; softmax in f32); per-head context
    #      written into an (R, D) scratch at static lane offsets.
    for h in range(nhead):
        q3 = qkv[:, h * dh:(h + 1) * dh].reshape(batch, seq, dh).astype(jnp.bfloat16)
        k3 = qkv[:, D + h * dh:D + (h + 1) * dh].reshape(batch, seq, dh).astype(jnp.bfloat16)
        v3 = qkv[:, 2 * D + h * dh:2 * D + (h + 1) * dh].reshape(batch, seq, dh).astype(jnp.bfloat16)
        s = jax.lax.dot_general(q3, k3, (((2,), (2,)), ((0,), (0,))),
                                preferred_element_type=jnp.float32) * scale
        s = s - jnp.max(s, axis=-1, keepdims=True)
        p = jnp.exp(s)
        p = p * pl.reciprocal(jnp.sum(p, axis=-1, keepdims=True), approx=True)
        ctx = jax.lax.dot_general(p.astype(jnp.bfloat16), v3,
                                  (((2,), (1,)), ((0,), (0,))),
                                  preferred_element_type=jnp.float32)
        ctx_ref[:, h * dh:(h + 1) * dh] = ctx.reshape(R, dh)

    # ---- single full-width output projection; a1 residual scale folded in wo/bo
    attn = jnp.dot(ctx_ref[...].astype(jnp.bfloat16), wo_ref[0],
                   preferred_element_type=jnp.float32) + bo_ref[0]

    y = _layer_norm(x + attn, g1_ref[0], be1_ref[0])

    # ---- feed-forward (GELU); a2 residual scale folded into w2/b2
    hmid = jnp.dot(y.astype(jnp.bfloat16), w1_ref[0],
                   preferred_element_type=jnp.float32) + fb1_ref[0]
    # TODO(synk): PyTorch nn.GELU default is exact erf; tanh approximation used.
    hmid = jax.nn.gelu(hmid, approximate=True)
    z = jnp.dot(hmid.astype(jnp.bfloat16), w2_ref[0],
                preferred_element_type=jnp.float32) + fb2_ref[0]

    out = _layer_norm(y + z, g2_ref[0], be2_ref[0])
    h_ref[...] = out

    # ---- last layer: torch.mean(x, dim=1) -> (B, D) via one sublane reduction
    @pl.when(l == pl.num_programs(0) - 1)
    def _():
        o_ref[...] = jnp.mean(out.reshape(batch, seq, D), axis=1).astype(o_ref.dtype)


# ----------------------------------------------------------------------------
# Wrapper: host-side glue (im2col, weight stacking / QKV fusion / scale fold)
# ----------------------------------------------------------------------------
def timemae_forward(x, params, *, kernel_size, stride, nhead):
    B, L, C = x.shape
    S = (L - kernel_size) // stride + 1
    D = params["conv_w"].shape[-1]
    F = params["layers"][0]["w1"].shape[-1]
    CK = C * kernel_size
    R = B * S
    NL = len(params["layers"])
    assert D % nhead == 0

    # im2col glue (pure JAX): x_unf[b, s, c*K + k] = x[b, s*stride + k, c]
    idx = jnp.arange(S)[:, None] * stride + jnp.arange(kernel_size)[None, :]
    x_unf = jnp.transpose(x[:, idx, :], (0, 1, 3, 2)).reshape(B, S, CK)
    x_unf = x_unf.astype(jnp.bfloat16)

    bf16 = jnp.bfloat16
    f32 = jnp.float32

    conv_w = params["conv_w"].astype(bf16)
    pe = params["pe"].astype(f32)                     # (S, D)
    conv_b = params["conv_b"].astype(f32)             # (1, D)

    layers = params["layers"]

    def stack(name):
        return jnp.stack([lp[name] for lp in layers])

    a1 = stack("a1")                                  # (NL, 1, 1)
    a2 = stack("a2")

    # fused QKV weights / biases: (NL, D, 3D) / (NL, 1, 3D)
    wqkv = jnp.stack([jnp.concatenate([lp["wq"], lp["wk"], lp["wv"]], axis=1)
                      for lp in layers]).astype(bf16)
    bqkv = jnp.stack([jnp.concatenate([lp["bq"], lp["bk"], lp["bv"]], axis=1)
                      for lp in layers]).astype(f32)

    wo = (stack("wo") * a1).astype(bf16)              # a1 folded
    bo = (stack("bo") * a1).astype(f32)
    g1, be1 = stack("ln1_g").astype(f32), stack("ln1_b").astype(f32)
    w1 = stack("w1").astype(bf16)
    fb1 = stack("fb1").astype(f32)
    w2 = (stack("w2") * a2).astype(bf16)              # a2 folded
    fb2 = (stack("fb2") * a2).astype(f32)
    g2, be2 = stack("ln2_g").astype(f32), stack("ln2_b").astype(f32)

    lmap3 = lambda l: (l, 0, 0)
    cmap2 = lambda l: (0, 0)
    cmap3 = lambda l: (0, 0, 0)

    grid_spec = pltpu.PrefetchScalarGridSpec(
        num_scalar_prefetch=0,
        grid=(NL,),
        in_specs=[
            pl.BlockSpec((B, S, CK), cmap3),          # x_unf (resident, bf16)
            pl.BlockSpec((CK, D), cmap2),             # conv weight (bf16)
            pl.BlockSpec((S, D), cmap2),              # positional encoding
            pl.BlockSpec((1, D), cmap2),              # conv bias
            pl.BlockSpec((1, D, 3 * D), lmap3),       # fused QKV weight (streamed)
            pl.BlockSpec((1, 1, 3 * D), lmap3),       # fused QKV bias
            pl.BlockSpec((1, D, D), lmap3),           # wo (a1 folded)
            pl.BlockSpec((1, 1, D), lmap3),           # bo (a1 folded)
            pl.BlockSpec((1, 1, D), lmap3),           # ln1 gamma
            pl.BlockSpec((1, 1, D), lmap3),           # ln1 beta
            pl.BlockSpec((1, D, F), lmap3),           # ffn w1
            pl.BlockSpec((1, 1, F), lmap3),           # ffn b1
            pl.BlockSpec((1, F, D), lmap3),           # ffn w2 (a2 folded)
            pl.BlockSpec((1, 1, D), lmap3),           # ffn b2 (a2 folded)
            pl.BlockSpec((1, 1, D), lmap3),           # ln2 gamma
            pl.BlockSpec((1, 1, D), lmap3),           # ln2 beta
        ],
        out_specs=pl.BlockSpec((B, D), cmap2),
        scratch_shapes=[
            pltpu.VMEM((R, D), jnp.float32),          # resident activations
            pltpu.VMEM((R, D), jnp.float32),          # per-head ctx assembly
        ],
    )

    return pl.pallas_call(
        partial(fused_timemae_kernel, batch=B, seq=S, nhead=nhead),
        out_shape=jax.ShapeDtypeStruct((B, D), jnp.float32),
        grid_spec=grid_spec,
        compiler_params=pltpu.CompilerParams(
            dimension_semantics=("arbitrary",),
            vmem_limit_bytes=32 * 1024 * 1024,        # < v7x 64 MiB budget
        ),
    )(x_unf, conv_w, pe, conv_b,
      wqkv, bqkv, wo, bo, g1, be1, w1, fb1, w2, fb2, g2, be2)


# ----------------------------------------------------------------------------
# Pure-JAX f32 reference (same math, used only for a sanity check)
# ----------------------------------------------------------------------------
def timemae_reference(x, params, *, kernel_size, stride, nhead):
    B, L, C = x.shape
    S = (L - kernel_size) // stride + 1
    D = params["conv_w"].shape[-1]
    dh = D // nhead
    idx = jnp.arange(S)[:, None] * stride + jnp.arange(kernel_size)[None, :]
    xu = jnp.transpose(x[:, idx, :], (0, 1, 3, 2)).reshape(B, S, C * kernel_size)
    h = jnp.einsum("bsk,kd->bsd", xu, params["conv_w"]) + params["conv_b"] + params["pe"]
    for p in params["layers"]:
        q = h @ p["wq"] + p["bq"]
        k = h @ p["wk"] + p["bk"]
        v = h @ p["wv"] + p["bv"]
        qh = q.reshape(B, S, nhead, dh).transpose(0, 2, 1, 3)
        kh = k.reshape(B, S, nhead, dh).transpose(0, 2, 1, 3)
        vh = v.reshape(B, S, nhead, dh).transpose(0, 2, 1, 3)
        s = jnp.einsum("bhqd,bhkd->bhqk", qh, kh) / math.sqrt(dh)
        pr = jax.nn.softmax(s, axis=-1)
        ctx = jnp.einsum("bhqk,bhkd->bhqd", pr, vh).transpose(0, 2, 1, 3).reshape(B, S, D)
        attn = ctx @ p["wo"] + p["bo"]
        y = _layer_norm(h + p["a1"][0, 0] * attn, p["ln1_g"], p["ln1_b"])
        z = jax.nn.gelu(y @ p["w1"] + p["fb1"], approximate=True) @ p["w2"] + p["fb2"]
        h = _layer_norm(y + p["a2"][0, 0] * z, p["ln2_g"], p["ln2_b"])
    return jnp.mean(h, axis=1)


# ----------------------------------------------------------------------------
# Deterministic parameter initialization (mirrors TimeMAE.__init__ shapes)
# ----------------------------------------------------------------------------
def _xavier_normal(key, fan_in, fan_out):
    std = math.sqrt(2.0 / (fan_in + fan_out))
    return jax.random.normal(key, (fan_in, fan_out), jnp.float32) * std


def sinusoidal_pe(seq_len, d_model):
    pos = jnp.arange(seq_len, dtype=jnp.float32)[:, None]
    i = jnp.arange(0, d_model, 2, dtype=jnp.float32)
    div = jnp.exp(-math.log(10000.0) * i / d_model)
    pe = jnp.zeros((seq_len, d_model), jnp.float32)
    pe = pe.at[:, 0::2].set(jnp.sin(pos * div))
    pe = pe.at[:, 1::2].set(jnp.cos(pos * div))
    return pe


def init_params(key, *, num_features, d_model, nhead, dim_feedforward,
                num_layers, kernel_size, seq_len):
    keys = iter(jax.random.split(key, 1 + 6 * num_layers))

    params = {
        # Conv1d(num_features, d_model, kernel_size) flattened to (C*K, D)
        "conv_w": _xavier_normal(next(keys), num_features * kernel_size, d_model),
        "conv_b": jnp.full((1, d_model), 0.1, jnp.float32),
        "pe": sinusoidal_pe(seq_len, d_model),
        "layers": [],
    }
    for _ in range(num_layers):
        layer = {
            "wq": _xavier_normal(next(keys), d_model, d_model),
            "bq": jnp.full((1, d_model), 0.1, jnp.float32),
            "wk": _xavier_normal(next(keys), d_model, d_model),
            "bk": jnp.full((1, d_model), 0.1, jnp.float32),
            "wv": _xavier_normal(next(keys), d_model, d_model),
            "bv": jnp.full((1, d_model), 0.1, jnp.float32),
            "wo": _xavier_normal(next(keys), d_model, d_model),
            "bo": jnp.full((1, d_model), 0.1, jnp.float32),
            "a1": jnp.ones((1, 1), jnp.float32),      # enable_res_param scale
            "ln1_g": jnp.ones((1, d_model), jnp.float32),
            "ln1_b": jnp.zeros((1, d_model), jnp.float32),
            "w1": _xavier_normal(next(keys), d_model, dim_feedforward),
            "fb1": jnp.full((1, dim_feedforward), 0.1, jnp.float32),
            "w2": _xavier_normal(next(keys), dim_feedforward, d_model),
            "fb2": jnp.full((1, d_model), 0.1, jnp.float32),
            "a2": jnp.ones((1, 1), jnp.float32),
            "ln2_g": jnp.ones((1, d_model), jnp.float32),
            "ln2_b": jnp.zeros((1, d_model), jnp.float32),
        }
        params["layers"].append(layer)
    return params


if __name__ == "__main__":
    # Small, forward-consistent shapes (lane-dense d_model / dim_feedforward).
    batch = 2
    origin_seq_len = 64
    num_features = 1                 # feature_extractor built with num_features=1
    d_model = 128
    nhead = 4
    dim_feedforward = 256
    num_layers = 2
    kernel_size = 8
    stride = 8
    seq_len = (origin_seq_len - kernel_size) // stride + 1   # == 8

    key = jax.random.PRNGKey(0)
    kx, kp = jax.random.split(key)
    x = jax.random.normal(kx, (batch, origin_seq_len, num_features), jnp.float32)

    params = init_params(kp, num_features=num_features, d_model=d_model,
                         nhead=nhead, dim_feedforward=dim_feedforward,
                         num_layers=num_layers, kernel_size=kernel_size,
                         seq_len=seq_len)

    fwd = jax.jit(partial(timemae_forward, kernel_size=kernel_size,
                          stride=stride, nhead=nhead))
    out = jax.block_until_ready(fwd(x, params))
    assert out.shape == (batch, d_model), out.shape
    assert bool(jnp.all(jnp.isfinite(out)))

    ref = timemae_reference(x, params, kernel_size=kernel_size, stride=stride,
                            nhead=nhead)
    max_err = float(jnp.max(jnp.abs(out - ref)))
    assert max_err < 1e-1, f"kernel mismatch vs f32 reference: {max_err}"
    print("KERNEL_OK")
</pallas_src>

<mosaic_0001>
module attributes {stable_mosaic.version = 11 : i64} {
  func.func @fused_timemae_kernel(%arg0: i32, %arg1: memref<2x8x8xbf16, #tpu.memory_space<vmem>>, %arg2: memref<8x128xbf16, #tpu.memory_space<vmem>>, %arg3: memref<8x128xf32, #tpu.memory_space<vmem>>, %arg4: memref<1x128xf32, #tpu.memory_space<vmem>>, %arg5: memref<1x128x384xbf16, #tpu.memory_space<vmem>>, %arg6: memref<1x1x384xf32, #tpu.memory_space<vmem>>, %arg7: memref<1x128x128xbf16, #tpu.memory_space<vmem>>, %arg8: memref<1x1x128xf32, #tpu.memory_space<vmem>>, %arg9: memref<1x1x128xf32, #tpu.memory_space<vmem>>, %arg10: memref<1x1x128xf32, #tpu.memory_space<vmem>>, %arg11: memref<1x128x256xbf16, #tpu.memory_space<vmem>>, %arg12: memref<1x1x256xf32, #tpu.memory_space<vmem>>, %arg13: memref<1x256x128xbf16, #tpu.memory_space<vmem>>, %arg14: memref<1x1x128xf32, #tpu.memory_space<vmem>>, %arg15: memref<1x1x128xf32, #tpu.memory_space<vmem>>, %arg16: memref<1x1x128xf32, #tpu.memory_space<vmem>>, %arg17: memref<2x128xf32, #tpu.memory_space<vmem>>, %arg18: memref<16x128xf32, #tpu.memory_space<vmem>>, %arg19: memref<16x128xf32, #tpu.memory_space<vmem>>) attributes {dimension_semantics = [#tpu.dimension_semantics<arbitrary>], iteration_bounds = array<i64: 2>, scalar_prefetch = 0 : i64, scratch_operands = 2 : i64, tpu.core_type = #tpu.core_type<tc>, window_params = [{pipeline_mode = #tpu.pipeline_mode<synchronous>, transform_indices = @transform_0, window_bounds = array<i64: 2, 8, 8>}, {pipeline_mode = #tpu.pipeline_mode<synchronous>, transform_indices = @transform_1, window_bounds = array<i64: 8, 128>}, {pipeline_mode = #tpu.pipeline_mode<synchronous>, transform_indices = @transform_2, window_bounds = array<i64: 8, 128>}, {pipeline_mode = #tpu.pipeline_mode<synchronous>, transform_indices = @transform_3, window_bounds = array<i64: 1, 128>}, {transform_indices = @transform_4, window_bounds = array<i64: 1, 128, 384>}, {transform_indices = @transform_5, window_bounds = array<i64: 1, 1, 384>}, {transform_indices = @transform_6, window_bounds = array<i64: 1, 128, 128>}, {transform_indices = @transform_7, window_bounds = array<i64: 1, 1, 128>}, {transform_indices = @transform_8, window_bounds = array<i64: 1, 1, 128>}, {transform_indices = @transform_9, window_bounds = array<i64: 1, 1, 128>}, {transform_indices = @transform_10, window_bounds = array<i64: 1, 128, 256>}, {transform_indices = @transform_11, window_bounds = array<i64: 1, 1, 256>}, {transform_indices = @transform_12, window_bounds = array<i64: 1, 256, 128>}, {transform_indices = @transform_13, window_bounds = array<i64: 1, 1, 128>}, {transform_indices = @transform_14, window_bounds = array<i64: 1, 1, 128>}, {transform_indices = @transform_15, window_bounds = array<i64: 1, 1, 128>}, {pipeline_mode = #tpu.pipeline_mode<synchronous>, transform_indices = @transform_16, window_bounds = array<i64: 2, 128>}]} {
    %c0_i32 = arith.constant 0 : i32
    %0 = arith.cmpi eq, %arg0, %c0_i32 : i32
    %1 = arith.extui %0 : i1 to i32
    %c0_i32_0 = arith.constant 0 : i32
    %2 = arith.cmpi ne, %1, %c0_i32_0 : i32
    scf.if %2 {
      %c0_85 = arith.constant 0 : index
      %c0_86 = arith.constant 0 : index
      %c0_87 = arith.constant 0 : index
      %212 = vector.load %arg1[%c0_85, %c0_86, %c0_87] : memref<2x8x8xbf16, #tpu.memory_space<vmem>>, vector<2x8x8xbf16>
      %213 = vector.shape_cast %212 : vector<2x8x8xbf16> to vector<16x8xbf16>
      %c0_88 = arith.constant 0 : index
      %c0_89 = arith.constant 0 : index
      %214 = vector.load %arg2[%c0_88, %c0_89] : memref<8x128xbf16, #tpu.memory_space<vmem>>, vector<8x128xbf16>
      %cst_90 = arith.constant dense<0.000000e+00> : vector<16x128xf32>
      %215 = tpu.matmul %213, %214, %cst_90 {dimension_numbers = #tpu.dot_dimension_numbers<[1], [0], [0], [1], [0, 0, 1, 1], [], []>} : vector<16x8xbf16>, vector<8x128xbf16>, vector<16x128xf32> -> vector<16x128xf32>
      %216 = vector.shape_cast %215 : vector<16x128xf32> to vector<2x8x128xf32>
      %c0_91 = arith.constant 0 : index
      %c0_92 = arith.constant 0 : index
      %217 = vector.load %arg3[%c0_91, %c0_92] : memref<8x128xf32, #tpu.memory_space<vmem>>, vector<8x128xf32>
      %218 = vector.shape_cast %217 : vector<8x128xf32> to vector<1x8x128xf32>
      %219 = vector.broadcast %218 : vector<1x8x128xf32> to vector<2x8x128xf32>
      %220 = arith.addf %216, %219 : vector<2x8x128xf32>
      %c0_93 = arith.constant 0 : index
      %c0_94 = arith.constant 0 : index
      %221 = vector.load %arg4[%c0_93, %c0_94] : memref<1x128xf32, #tpu.memory_space<vmem>>, vector<1x128xf32>
      %222 = vector.shape_cast %221 : vector<1x128xf32> to vector<1x1x128xf32>
      %223 = vector.broadcast %222 : vector<1x1x128xf32> to vector<2x8x128xf32>
      %224 = arith.addf %220, %223 : vector<2x8x128xf32>
      %225 = vector.shape_cast %224 : vector<2x8x128xf32> to vector<16x128xf32>
      %c0_95 = arith.constant 0 : index
      %c0_96 = arith.constant 0 : index
      %226 = vector.load %arg18[%c0_95, %c0_96] : memref<16x128xf32, #tpu.memory_space<vmem>>, vector<16x128xf32>
      tpu.vector_store %arg18[%c0_95, %c0_96], %225 {strides = array<i32>} : memref<16x128xf32, #tpu.memory_space<vmem>>, vector<16x128xf32>,
    } else {
    }
    %c0 = arith.constant 0 : index
    %c0_1 = arith.constant 0 : index
    %3 = vector.load %arg18[%c0, %c0_1] : memref<16x128xf32, #tpu.memory_space<vmem>>, vector<16x128xf32>
    %4 = arith.truncf %3 : vector<16x128xf32> to vector<16x128xbf16>
    %c0_2 = arith.constant 0 : index
    %c0_3 = arith.constant 0 : index
    %c0_4 = arith.constant 0 : index
    %5 = vector.load %arg5[%c0_2, %c0_3, %c0_4] : memref<1x128x384xbf16, #tpu.memory_space<vmem>>, vector<1x128x384xbf16>
    %6 = vector.shape_cast %5 : vector<1x128x384xbf16> to vector<128x384xbf16>
    %cst = arith.constant dense<0.000000e+00> : vector<16x384xf32>
    %7 = tpu.matmul %4, %6, %cst {dimension_numbers = #tpu.dot_dimension_numbers<[1], [0], [0], [1], [0, 0, 1, 1], [], []>} : vector<16x128xbf16>, vector<128x384xbf16>, vector<16x384xf32> -> vector<16x384xf32>
    %c0_5 = arith.constant 0 : index
    %c0_6 = arith.constant 0 : index
    %c0_7 = arith.constant 0 : index
    %8 = vector.load %arg6[%c0_5, %c0_6, %c0_7] : memref<1x1x384xf32, #tpu.memory_space<vmem>>, vector<1x1x384xf32>
    %9 = vector.shape_cast %8 : vector<1x1x384xf32> to vector<1x384xf32>
    %10 = vector.broadcast %9 : vector<1x384xf32> to vector<16x384xf32>
    %11 = arith.addf %7, %10 : vector<16x384xf32>
    %12 = vector.extract_strided_slice %11 {offsets = [0, 0], sizes = [16, 32], strides = [1, 1]} : vector<16x384xf32> to vector<16x32xf32>
    %13 = vector.shape_cast %12 : vector<16x32xf32> to vector<2x8x32xf32>
    %14 = arith.truncf %13 : vector<2x8x32xf32> to vector<2x8x32xbf16>
    %15 = vector.extract_strided_slice %11 {offsets = [0, 128], sizes = [16, 32], strides = [1, 1]} : vector<16x384xf32> to vector<16x32xf32>
    %16 = vector.shape_cast %15 : vector<16x32xf32> to vector<2x8x32xf32>
    %17 = arith.truncf %16 : vector<2x8x32xf32> to vector<2x8x32xbf16>
    %18 = vector.extract_strided_slice %11 {offsets = [0, 256], sizes = [16, 32], strides = [1, 1]} : vector<16x384xf32> to vector<16x32xf32>
    %19 = vector.shape_cast %18 : vector<16x32xf32> to vector<2x8x32xf32>
    %20 = arith.truncf %19 : vector<2x8x32xf32> to vector<2x8x32xbf16>
    %cst_8 = arith.constant dense<0.000000e+00> : vector<2x8x8xf32>
    %21 = tpu.matmul %14, %17, %cst_8 {dimension_numbers = #tpu.dot_dimension_numbers<[2], [2], [1], [1], [0, 0, 0, 1, 1, 1], [0], [0]>} : vector<2x8x32xbf16>, vector<2x8x32xbf16>, vector<2x8x8xf32> -> vector<2x8x8xf32>
    %cst_9 = arith.constant 0.176776692 : f32
    %22 = vector.broadcast %cst_9 : f32 to vector<2x8x8xf32>
    %23 = arith.mulf %21, %22 : vector<2x8x8xf32>
    %cst_10 = arith.constant dense<0xFF800000> : vector<2x8xf32>
    %24 = vector.multi_reduction <maximumf>, %23, %cst_10 [2] : vector<2x8x8xf32> to vector<2x8xf32>
    %25 = vector.shape_cast %24 : vector<2x8xf32> to vector<2x8x1xf32>
    %26 = vector.broadcast %25 : vector<2x8x1xf32> to vector<2x8x8xf32>
    %27 = arith.subf %23, %26 : vector<2x8x8xf32>
    %28 = math.exp %27 : vector<2x8x8xf32>
    %cst_11 = arith.constant dense<0.000000e+00> : vector<2x8xf32>
    %29 = vector.multi_reduction <add>, %28, %cst_11 [2] : vector<2x8x8xf32> to vector<2x8xf32>
    %30 = vector.shape_cast %29 : vector<2x8xf32> to vector<2x8x1xf32>
    %31 = tpu.reciprocal %30 {approx = true} : vector<2x8x1xf32> -> vector<2x8x1xf32>
    %32 = vector.broadcast %31 : vector<2x8x1xf32> to vector<2x8x8xf32>
    %33 = arith.mulf %28, %32 : vector<2x8x8xf32>
    %34 = arith.truncf %33 : vector<2x8x8xf32> to vector<2x8x8xbf16>
    %cst_12 = arith.constant dense<0.000000e+00> : vector<2x8x32xf32>
    %35 = tpu.matmul %34, %20, %cst_12 {dimension_numbers = #tpu.dot_dimension_numbers<[2], [1], [1], [2], [0, 0, 0, 1, 1, 2], [0], [0]>} : vector<2x8x8xbf16>, vector<2x8x32xbf16>, vector<2x8x32xf32> -> vector<2x8x32xf32>
    %36 = vector.shape_cast %35 : vector<2x8x32xf32> to vector<16x32xf32>
    %c0_13 = arith.constant 0 : index
    %c0_14 = arith.constant 0 : index
    %37 = vector.load %arg19[%c0_13, %c0_14] : memref<16x128xf32, #tpu.memory_space<vmem>>, vector<16x32xf32>
    tpu.vector_store %arg19[%c0_13, %c0_14], %36 {strides = array<i32>} : memref<16x128xf32, #tpu.memory_space<vmem>>, vector<16x32xf32>,
    %38 = vector.extract_strided_slice %11 {offsets = [0, 32], sizes = [16, 32], strides = [1, 1]} : vector<16x384xf32> to vector<16x32xf32>
    %39 = vector.shape_cast %38 : vector<16x32xf32> to vector<2x8x32xf32>
    %40 = arith.truncf %39 : vector<2x8x32xf32> to vector<2x8x32xbf16>
    %41 = vector.extract_strided_slice %11 {offsets = [0, 160], sizes = [16, 32], strides = [1, 1]} : vector<16x384xf32> to vector<16x32xf32>
    %42 = vector.shape_cast %41 : vector<16x32xf32> to vector<2x8x32xf32>
    %43 = arith.truncf %42 : vector<2x8x32xf32> to vector<2x8x32xbf16>
    %44 = vector.extract_strided_slice %11 {offsets = [0, 288], sizes = [16, 32], strides = [1, 1]} : vector<16x384xf32> to vector<16x32xf32>
    %45 = vector.shape_cast %44 : vector<16x32xf32> to vector<2x8x32xf32>
    %46 = arith.truncf %45 : vector<2x8x32xf32> to vector<2x8x32xbf16>
    %cst_15 = arith.constant dense<0.000000e+00> : vector<2x8x8xf32>
    %47 = tpu.matmul %40, %43, %cst_15 {dimension_numbers = #tpu.dot_dimension_numbers<[2], [2], [1], [1], [0, 0, 0, 1, 1, 1], [0], [0]>} : vector<2x8x32xbf16>, vector<2x8x32xbf16>, vector<2x8x8xf32> -> vector<2x8x8xf32>
    %cst_16 = arith.constant 0.176776692 : f32
    %48 = vector.broadcast %cst_16 : f32 to vector<2x8x8xf32>
    %49 = arith.mulf %47, %48 : vector<2x8x8xf32>
    %cst_17 = arith.constant dense<0xFF800000> : vector<2x8xf32>
    %50 = vector.multi_reduction <maximumf>, %49, %cst_17 [2] : vector<2x8x8xf32> to vector<2x8xf32>
    %51 = vector.shape_cast %50 : vector<2x8xf32> to vector<2x8x1xf32>
    %52 = vector.broadcast %51 : vector<2x8x1xf32> to vector<2x8x8xf32>
    %53 = arith.subf %49, %52 : vector<2x8x8xf32>
    %54 = math.exp %53 : vector<2x8x8xf32>
    %cst_18 = arith.constant dense<0.000000e+00> : vector<2x8xf32>
    %55 = vector.multi_reduction <add>, %54, %cst_18 [2] : vector<2x8x8xf32> to vector<2x8xf32>
    %56 = vector.shape_cast %55 : vector<2x8xf32> to vector<2x8x1xf32>
    %57 = tpu.reciprocal %56 {approx = true} : vector<2x8x1xf32> -> vector<2x8x1xf32>
    %58 = vector.broadcast %57 : vector<2x8x1xf32> to vector<2x8x8xf32>
    %59 = arith.mulf %54, %58 : vector<2x8x8xf32>
    %60 = arith.truncf %59 : vector<2x8x8xf32> to vector<2x8x8xbf16>
    %cst_19 = arith.constant dense<0.000000e+00> : vector<2x8x32xf32>
    %61 = tpu.matmul %60, %46, %cst_19 {dimension_numbers = #tpu.dot_dimension_numbers<[2], [1], [1], [2], [0, 0, 0, 1, 1, 2], [0], [0]>} : vector<2x8x8xbf16>, vector<2x8x32xbf16>, vector<2x8x32xf32> -> vector<2x8x32xf32>
    %62 = vector.shape_cast %61 : vector<2x8x32xf32> to vector<16x32xf32>
    %c0_20 = arith.constant 0 : index
    %c32 = arith.constant 32 : index
    %63 = vector.load %arg19[%c0_20, %c32] : memref<16x128xf32, #tpu.memory_space<vmem>>, vector<16x32xf32>
    tpu.vector_store %arg19[%c0_20, %c32], %62 {strides = array<i32>} : memref<16x128xf32, #tpu.memory_space<vmem>>, vector<16x32xf32>,
    %64 = vector.extract_strided_slice %11 {offsets = [0, 64], sizes = [16, 32], strides = [1, 1]} : vector<16x384xf32> to vector<16x32xf32>
    %65 = vector.shape_cast %64 : vector<16x32xf32> to vector<2x8x32xf32>
    %66 = arith.truncf %65 : vector<2x8x32xf32> to vector<2x8x32xbf16>
    %67 = vector.extract_strided_slice %11 {offsets = [0, 192], sizes = [16, 32], strides = [1, 1]} : vector<16x384xf32> to vector<16x32xf32>
    %68 = vector.shape_cast %67 : vector<16x32xf32> to vector<2x8x32xf32>
    %69 = arith.truncf %68 : vector<2x8x32xf32> to vector<2x8x32xbf16>
    %70 = vector.extract_strided_slice %11 {offsets = [0, 320], sizes = [16, 32], strides = [1, 1]} : vector<16x384xf32> to vector<16x32xf32>
    %71 = vector.shape_cast %70 : vector<16x32xf32> to vector<2x8x32xf32>
    %72 = arith.truncf %71 : vector<2x8x32xf32> to vector<2x8x32xbf16>
    %cst_21 = arith.constant dense<0.000000e+00> : vector<2x8x8xf32>
    %73 = tpu.matmul %66, %69, %cst_21 {dimension_numbers = #tpu.dot_dimension_numbers<[2], [2], [1], [1], [0, 0, 0, 1, 1, 1], [0], [0]>} : vector<2x8x32xbf16>, vector<2x8x32xbf16>, vector<2x8x8xf32> -> vector<2x8x8xf32>
    %cst_22 = arith.constant 0.176776692 : f32
    %74 = vector.broadcast %cst_22 : f32 to vector<2x8x8xf32>
    %75 = arith.mulf %73, %74 : vector<2x8x8xf32>
    %cst_23 = arith.constant dense<0xFF800000> : vector<2x8xf32>
    %76 = vector.multi_reduction <maximumf>, %75, %cst_23 [2] : vector<2x8x8xf32> to vector<2x8xf32>
    %77 = vector.shape_cast %76 : vector<2x8xf32> to vector<2x8x1xf32>
    %78 = vector.broadcast %77 : vector<2x8x1xf32> to vector<2x8x8xf32>
    %79 = arith.subf %75, %78 : vector<2x8x8xf32>
    %80 = math.exp %79 : vector<2x8x8xf32>
    %cst_24 = arith.constant dense<0.000000e+00> : vector<2x8xf32>
    %81 = vector.multi_reduction <add>, %80, %cst_24 [2] : vector<2x8x8xf32> to vector<2x8xf32>
    %82 = vector.shape_cast %81 : vector<2x8xf32> to vector<2x8x1xf32>
    %83 = tpu.reciprocal %82 {approx = true} : vector<2x8x1xf32> -> vector<2x8x1xf32>
    %84 = vector.broadcast %83 : vector<2x8x1xf32> to vector<2x8x8xf32>
    %85 = arith.mulf %80, %84 : vector<2x8x8xf32>
    %86 = arith.truncf %85 : vector<2x8x8xf32> to vector<2x8x8xbf16>
    %cst_25 = arith.constant dense<0.000000e+00> : vector<2x8x32xf32>
    %87 = tpu.matmul %86, %72, %cst_25 {dimension_numbers = #tpu.dot_dimension_numbers<[2], [1], [1], [2], [0, 0, 0, 1, 1, 2], [0], [0]>} : vector<2x8x8xbf16>, vector<2x8x32xbf16>, vector<2x8x32xf32> -> vector<2x8x32xf32>
    %88 = vector.shape_cast %87 : vector<2x8x32xf32> to vector<16x32xf32>
    %c0_26 = arith.constant 0 : index
    %c64 = arith.constant 64 : index
    %89 = vector.load %arg19[%c0_26, %c64] : memref<16x128xf32, #tpu.memory_space<vmem>>, vector<16x32xf32>
    tpu.vector_store %arg19[%c0_26, %c64], %88 {strides = array<i32>} : memref<16x128xf32, #tpu.memory_space<vmem>>, vector<16x32xf32>,
    %90 = vector.extract_strided_slice %11 {offsets = [0, 96], sizes = [16, 32], strides = [1, 1]} : vector<16x384xf32> to vector<16x32xf32>
    %91 = vector.shape_cast %90 : vector<16x32xf32> to vector<2x8x32xf32>
    %92 = arith.truncf %91 : vector<2x8x32xf32> to vector<2x8x32xbf16>
    %93 = vector.extract_strided_slice %11 {offsets = [0, 224], sizes = [16, 32], strides = [1, 1]} : vector<16x384xf32> to vector<16x32xf32>
    %94 = vector.shape_cast %93 : vector<16x32xf32> to vector<2x8x32xf32>
    %95 = arith.truncf %94 : vector<2x8x32xf32> to vector<2x8x32xbf16>
    %96 = vector.extract_strided_slice %11 {offsets = [0, 352], sizes = [16, 32], strides = [1, 1]} : vector<16x384xf32> to vector<16x32xf32>
    %97 = vector.shape_cast %96 : vector<16x32xf32> to vector<2x8x32xf32>
    %98 = arith.truncf %97 : vector<2x8x32xf32> to vector<2x8x32xbf16>
    %cst_27 = arith.constant dense<0.000000e+00> : vector<2x8x8xf32>
    %99 = tpu.matmul %92, %95, %cst_27 {dimension_numbers = #tpu.dot_dimension_numbers<[2], [2], [1], [1], [0, 0, 0, 1, 1, 1], [0], [0]>} : vector<2x8x32xbf16>, vector<2x8x32xbf16>, vector<2x8x8xf32> -> vector<2x8x8xf32>
    %cst_28 = arith.constant 0.176776692 : f32
    %100 = vector.broadcast %cst_28 : f32 to vector<2x8x8xf32>
    %101 = arith.mulf %99, %100 : vector<2x8x8xf32>
    %cst_29 = arith.constant dense<0xFF800000> : vector<2x8xf32>
    %102 = vector.multi_reduction <maximumf>, %101, %cst_29 [2] : vector<2x8x8xf32> to vector<2x8xf32>
    %103 = vector.shape_cast %102 : vector<2x8xf32> to vector<2x8x1xf32>
    %104 = vector.broadcast %103 : vector<2x8x1xf32> to vector<2x8x8xf32>
    %105 = arith.subf %101, %104 : vector<2x8x8xf32>
    %106 = math.exp %105 : vector<2x8x8xf32>
    %cst_30 = arith.constant dense<0.000000e+00> : vector<2x8xf32>
    %107 = vector.multi_reduction <add>, %106, %cst_30 [2] : vector<2x8x8xf32> to vector<2x8xf32>
    %108 = vector.shape_cast %107 : vector<2x8xf32> to vector<2x8x1xf32>
    %109 = tpu.reciprocal %108 {approx = true} : vector<2x8x1xf32> -> vector<2x8x1xf32>
    %110 = vector.broadcast %109 : vector<2x8x1xf32> to vector<2x8x8xf32>
    %111 = arith.mulf %106, %110 : vector<2x8x8xf32>
    %112 = arith.truncf %111 : vector<2x8x8xf32> to vector<2x8x8xbf16>
    %cst_31 = arith.constant dense<0.000000e+00> : vector<2x8x32xf32>
    %113 = tpu.matmul %112, %98, %cst_31 {dimension_numbers = #tpu.dot_dimension_numbers<[2], [1], [1], [2], [0, 0, 0, 1, 1, 2], [0], [0]>} : vector<2x8x8xbf16>, vector<2x8x32xbf16>, vector<2x8x32xf32> -> vector<2x8x32xf32>
    %114 = vector.shape_cast %113 : vector<2x8x32xf32> to vector<16x32xf32>
    %c0_32 = arith.constant 0 : index
    %c96 = arith.constant 96 : index
    %115 = vector.load %arg19[%c0_32, %c96] : memref<16x128xf32, #tpu.memory_space<vmem>>, vector<16x32xf32>
    tpu.vector_store %arg19[%c0_32, %c96], %114 {strides = array<i32>} : memref<16x128xf32, #tpu.memory_space<vmem>>, vector<16x32xf32>,
    %c0_33 = arith.constant 0 : index
    %c0_34 = arith.constant 0 : index
    %116 = vector.load %arg19[%c0_33, %c0_34] : memref<16x128xf32, #tpu.memory_space<vmem>>, vector<16x128xf32>
    %117 = arith.truncf %116 : vector<16x128xf32> to vector<16x128xbf16>
    %c0_35 = arith.constant 0 : index
    %c0_36 = arith.constant 0 : index
    %c0_37 = arith.constant 0 : index
    %118 = vector.load %arg7[%c0_35, %c0_36, %c0_37] : memref<1x128x128xbf16, #tpu.memory_space<vmem>>, vector<1x128x128xbf16>
    %119 = vector.shape_cast %118 : vector<1x128x128xbf16> to vector<128x128xbf16>
    %cst_38 = arith.constant dense<0.000000e+00> : vector<16x128xf32>
    %120 = tpu.matmul %117, %119, %cst_38 {dimension_numbers = #tpu.dot_dimension_numbers<[1], [0], [0], [1], [0, 0, 1, 1], [], []>} : vector<16x128xbf16>, vector<128x128xbf16>, vector<16x128xf32> -> vector<16x128xf32>
    %c0_39 = arith.constant 0 : index
    %c0_40 = arith.constant 0 : index
    %c0_41 = arith.constant 0 : index
    %121 = vector.load %arg8[%c0_39, %c0_40, %c0_41] : memref<1x1x128xf32, #tpu.memory_space<vmem>>, vector<1x1x128xf32>
    %122 = vector.shape_cast %121 : vector<1x1x128xf32> to vector<1x128xf32>
    %123 = vector.broadcast %122 : vector<1x128xf32> to vector<16x128xf32>
    %124 = arith.addf %120, %123 : vector<16x128xf32>
    %125 = arith.addf %3, %124 : vector<16x128xf32>
    %c0_42 = arith.constant 0 : index
    %c0_43 = arith.constant 0 : index
    %c0_44 = arith.constant 0 : index
    %126 = vector.load %arg9[%c0_42, %c0_43, %c0_44] : memref<1x1x128xf32, #tpu.memory_space<vmem>>, vector<1x1x128xf32>
    %127 = vector.shape_cast %126 : vector<1x1x128xf32> to vector<1x128xf32>
    %c0_45 = arith.constant 0 : index
    %c0_46 = arith.constant 0 : index
    %c0_47 = arith.constant 0 : index
    %128 = vector.load %arg10[%c0_45, %c0_46, %c0_47] : memref<1x1x128xf32, #tpu.memory_space<vmem>>, vector<1x1x128xf32>
    %129 = vector.shape_cast %128 : vector<1x1x128xf32> to vector<1x128xf32>
    %cst_48 = arith.constant dense<0.000000e+00> : vector<16xf32>
    %130 = vector.multi_reduction <add>, %125, %cst_48 [1] : vector<16x128xf32> to vector<16xf32>
    %131 = vector.shape_cast %130 : vector<16xf32> to vector<16x1xf32>
    %cst_49 = arith.constant 1.280000e+02 : f32
    %132 = vector.broadcast %cst_49 : f32 to vector<16x1xf32>
    %133 = arith.divf %131, %132 : vector<16x1xf32>
    %134 = vector.broadcast %133 : vector<16x1xf32> to vector<16x128xf32>
    %135 = arith.subf %125, %134 : vector<16x128xf32>
    %136 = arith.mulf %135, %135 : vector<16x128xf32>
    %cst_50 = arith.constant dense<0.000000e+00> : vector<16xf32>
    %137 = vector.multi_reduction <add>, %136, %cst_50 [1] : vector<16x128xf32> to vector<16xf32>
    %138 = vector.shape_cast %137 : vector<16xf32> to vector<16x1xf32>
    %cst_51 = arith.constant 1.280000e+02 : f32
    %139 = vector.broadcast %cst_51 : f32 to vector<16x1xf32>
    %140 = arith.divf %138, %139 : vector<16x1xf32>
    %141 = vector.broadcast %133 : vector<16x1xf32> to vector<16x128xf32>
    %142 = arith.subf %125, %141 : vector<16x128xf32>
    %cst_52 = arith.constant 9.99999974E-6 : f32
    %143 = vector.broadcast %cst_52 : f32 to vector<16x1xf32>
    %144 = arith.addf %140, %143 : vector<16x1xf32>
    %145 = math.rsqrt %144 : vector<16x1xf32>
    %146 = vector.broadcast %145 : vector<16x1xf32> to vector<16x128xf32>
    %147 = arith.mulf %142, %146 : vector<16x128xf32>
    %148 = vector.broadcast %127 : vector<1x128xf32> to vector<16x128xf32>
    %149 = arith.mulf %147, %148 : vector<16x128xf32>
    %150 = vector.broadcast %129 : vector<1x128xf32> to vector<16x128xf32>
    %151 = arith.addf %149, %150 : vector<16x128xf32>
    %152 = arith.truncf %151 : vector<16x128xf32> to vector<16x128xbf16>
    %c0_53 = arith.constant 0 : index
    %c0_54 = arith.constant 0 : index
    %c0_55 = arith.constant 0 : index
    %153 = vector.load %arg11[%c0_53, %c0_54, %c0_55] : memref<1x128x256xbf16, #tpu.memory_space<vmem>>, vector<1x128x256xbf16>
    %154 = vector.shape_cast %153 : vector<1x128x256xbf16> to vector<128x256xbf16>
    %cst_56 = arith.constant dense<0.000000e+00> : vector<16x256xf32>
    %155 = tpu.matmul %152, %154, %cst_56 {dimension_numbers = #tpu.dot_dimension_numbers<[1], [0], [0], [1], [0, 0, 1, 1], [], []>} : vector<16x128xbf16>, vector<128x256xbf16>, vector<16x256xf32> -> vector<16x256xf32>
    %c0_57 = arith.constant 0 : index
    %c0_58 = arith.constant 0 : index
    %c0_59 = arith.constant 0 : index
    %156 = vector.load %arg12[%c0_57, %c0_58, %c0_59] : memref<1x1x256xf32, #tpu.memory_space<vmem>>, vector<1x1x256xf32>
    %157 = vector.shape_cast %156 : vector<1x1x256xf32> to vector<1x256xf32>
    %158 = vector.broadcast %157 : vector<1x256xf32> to vector<16x256xf32>
    %159 = arith.addf %155, %158 : vector<16x256xf32>
    %160 = arith.mulf %159, %159 : vector<16x256xf32>
    %161 = arith.mulf %159, %160 : vector<16x256xf32>
    %cst_60 = arith.constant 4.471500e-02 : f32
    %162 = vector.broadcast %cst_60 : f32 to vector<16x256xf32>
    %163 = arith.mulf %162, %161 : vector<16x256xf32>
    %164 = arith.addf %159, %163 : vector<16x256xf32>
    %cst_61 = arith.constant 0.797884583 : f32
    %165 = vector.broadcast %cst_61 : f32 to vector<16x256xf32>
    %166 = arith.mulf %165, %164 : vector<16x256xf32>
    %167 = math.tanh %166 : vector<16x256xf32>
    %cst_62 = arith.constant 1.000000e+00 : f32
    %168 = vector.broadcast %cst_62 : f32 to vector<16x256xf32>
    %169 = arith.addf %168, %167 : vector<16x256xf32>
    %cst_63 = arith.constant 5.000000e-01 : f32
    %170 = vector.broadcast %cst_63 : f32 to vector<16x256xf32>
    %171 = arith.mulf %170, %169 : vector<16x256xf32>
    %172 = arith.mulf %159, %171 : vector<16x256xf32>
    %173 = arith.truncf %172 : vector<16x256xf32> to vector<16x256xbf16>
    %c0_64 = arith.constant 0 : index
    %c0_65 = arith.constant 0 : index
    %c0_66 = arith.constant 0 : index
    %174 = vector.load %arg13[%c0_64, %c0_65, %c0_66] : memref<1x256x128xbf16, #tpu.memory_space<vmem>>, vector<1x256x128xbf16>
    %175 = vector.shape_cast %174 : vector<1x256x128xbf16> to vector<256x128xbf16>
    %cst_67 = arith.constant dense<0.000000e+00> : vector<16x128xf32>
    %176 = tpu.matmul %173, %175, %cst_67 {dimension_numbers = #tpu.dot_dimension_numbers<[1], [0], [0], [1], [0, 0, 1, 1], [], []>} : vector<16x256xbf16>, vector<256x128xbf16>, vector<16x128xf32> -> vector<16x128xf32>
    %c0_68 = arith.constant 0 : index
    %c0_69 = arith.constant 0 : index
    %c0_70 = arith.constant 0 : index
    %177 = vector.load %arg14[%c0_68, %c0_69, %c0_70] : memref<1x1x128xf32, #tpu.memory_space<vmem>>, vector<1x1x128xf32>
    %178 = vector.shape_cast %177 : vector<1x1x128xf32> to vector<1x128xf32>
    %179 = vector.broadcast %178 : vector<1x128xf32> to vector<16x128xf32>
    %180 = arith.addf %176, %179 : vector<16x128xf32>
    %181 = arith.addf %151, %180 : vector<16x128xf32>
    %c0_71 = arith.constant 0 : index
    %c0_72 = arith.constant 0 : index
    %c0_73 = arith.constant 0 : index
    %182 = vector.load %arg15[%c0_71, %c0_72, %c0_73] : memref<1x1x128xf32, #tpu.memory_space<vmem>>, vector<1x1x128xf32>
    %183 = vector.shape_cast %182 : vector<1x1x128xf32> to vector<1x128xf32>
    %c0_74 = arith.constant 0 : index
    %c0_75 = arith.constant 0 : index
    %c0_76 = arith.constant 0 : index
    %184 = vector.load %arg16[%c0_74, %c0_75, %c0_76] : memref<1x1x128xf32, #tpu.memory_space<vmem>>, vector<1x1x128xf32>
    %185 = vector.shape_cast %184 : vector<1x1x128xf32> to vector<1x128xf32>
    %cst_77 = arith.constant dense<0.000000e+00> : vector<16xf32>
    %186 = vector.multi_reduction <add>, %181, %cst_77 [1] : vector<16x128xf32> to vector<16xf32>
    %187 = vector.shape_cast %186 : vector<16xf32> to vector<16x1xf32>
    %cst_78 = arith.constant 1.280000e+02 : f32
    %188 = vector.broadcast %cst_78 : f32 to vector<16x1xf32>
    %189 = arith.divf %187, %188 : vector<16x1xf32>
    %190 = vector.broadcast %189 : vector<16x1xf32> to vector<16x128xf32>
    %191 = arith.subf %181, %190 : vector<16x128xf32>
    %192 = arith.mulf %191, %191 : vector<16x128xf32>
    %cst_79 = arith.constant dense<0.000000e+00> : vector<16xf32>
    %193 = vector.multi_reduction <add>, %192, %cst_79 [1] : vector<16x128xf32> to vector<16xf32>
    %194 = vector.shape_cast %193 : vector<16xf32> to vector<16x1xf32>
    %cst_80 = arith.constant 1.280000e+02 : f32
    %195 = vector.broadcast %cst_80 : f32 to vector<16x1xf32>
    %196 = arith.divf %194, %195 : vector<16x1xf32>
    %197 = vector.broadcast %189 : vector<16x1xf32> to vector<16x128xf32>
    %198 = arith.subf %181, %197 : vector<16x128xf32>
    %cst_81 = arith.constant 9.99999974E-6 : f32
    %199 = vector.broadcast %cst_81 : f32 to vector<16x1xf32>
    %200 = arith.addf %196, %199 : vector<16x1xf32>
    %201 = math.rsqrt %200 : vector<16x1xf32>
    %202 = vector.broadcast %201 : vector<16x1xf32> to vector<16x128xf32>
    %203 = arith.mulf %198, %202 : vector<16x128xf32>
    %204 = vector.broadcast %183 : vector<1x128xf32> to vector<16x128xf32>
    %205 = arith.mulf %203, %204 : vector<16x128xf32>
    %206 = vector.broadcast %185 : vector<1x128xf32> to vector<16x128xf32>
    %207 = arith.addf %205, %206 : vector<16x128xf32>
    %c0_82 = arith.constant 0 : index
    %c0_83 = arith.constant 0 : index
    %208 = vector.load %arg18[%c0_82, %c0_83] : memref<16x128xf32, #tpu.memory_space<vmem>>, vector<16x128xf32>
    tpu.vector_store %arg18[%c0_82, %c0_83], %207 {strides = array<i32>} : memref<16x128xf32, #tpu.memory_space<vmem>>, vector<16x128xf32>,
    %c1_i32 = arith.constant 1 : i32
    %209 = arith.cmpi eq, %arg0, %c1_i32 : i32
    %210 = arith.extui %209 : i1 to i32
    %c0_i32_84 = arith.constant 0 : i32
    %211 = arith.cmpi ne, %210, %c0_i32_84 : i32
    scf.if %211 {
      %212 = vector.shape_cast %207 : vector<16x128xf32> to vector<2x8x128xf32>
      %cst_85 = arith.constant dense<0.000000e+00> : vector<2x128xf32>
      %213 = vector.multi_reduction <add>, %212, %cst_85 [1] : vector<2x8x128xf32> to vector<2x128xf32>
      %cst_86 = arith.constant 8.000000e+00 : f32
      %214 = vector.broadcast %cst_86 : f32 to vector<2x128xf32>
      %215 = arith.divf %213, %214 : vector<2x128xf32>
      %c0_87 = arith.constant 0 : index
      %c0_88 = arith.constant 0 : index
      %216 = vector.load %arg17[%c0_87, %c0_88] : memref<2x128xf32, #tpu.memory_space<vmem>>, vector<2x128xf32>
      tpu.vector_store %arg17[%c0_87, %c0_88], %215 {strides = array<i32>} : memref<2x128xf32, #tpu.memory_space<vmem>>, vector<2x128xf32>,
    } else {
    }
    return
  }
  func.func @transform_0(%arg0: i32) -> (i32, i32, i32) {
    %c0_i32 = arith.constant 0 : i32
    %c0_i32_0 = arith.constant 0 : i32
    %c0_i32_1 = arith.constant 0 : i32
    %c0_i32_2 = arith.constant 0 : i32
    return %c0_i32, %c0_i32_0, %c0_i32_1 : i32, i32, i32
  }
  func.func @transform_1(%arg0: i32) -> (i32, i32) {
    %c0_i32 = arith.constant 0 : i32
    %c0_i32_0 = arith.constant 0 : i32
    %c0_i32_1 = arith.constant 0 : i32
    return %c0_i32, %c0_i32_0 : i32, i32
  }
  func.func @transform_2(%arg0: i32) -> (i32, i32) {
    %c0_i32 = arith.constant 0 : i32
    %c0_i32_0 = arith.constant 0 : i32
    %c0_i32_1 = arith.constant 0 : i32
    return %c0_i32, %c0_i32_0 : i32, i32
  }
  func.func @transform_3(%arg0: i32) -> (i32, i32) {
    %c0_i32 = arith.constant 0 : i32
    %c0_i32_0 = arith.constant 0 : i32
    %c0_i32_1 = arith.constant 0 : i32
    return %c0_i32, %c0_i32_0 : i32, i32
  }
  func.func @transform_4(%arg0: i32) -> (i32, i32, i32) {
    %c0_i32 = arith.constant 0 : i32
    %c0_i32_0 = arith.constant 0 : i32
    %c0_i32_1 = arith.constant 0 : i32
    return %arg0, %c0_i32, %c0_i32_0 : i32, i32, i32
  }
  func.func @transform_5(%arg0: i32) -> (i32, i32, i32) {
    %c0_i32 = arith.constant 0 : i32
    %c0_i32_0 = arith.constant 0 : i32
    %c0_i32_1 = arith.constant 0 : i32
    return %arg0, %c0_i32, %c0_i32_0 : i32, i32, i32
  }
  func.func @transform_6(%arg0: i32) -> (i32, i32, i32) {
    %c0_i32 = arith.constant 0 : i32
    %c0_i32_0 = arith.constant 0 : i32
    %c0_i32_1 = arith.constant 0 : i32
    return %arg0, %c0_i32, %c0_i32_0 : i32, i32, i32
  }
  func.func @transform_7(%arg0: i32) -> (i32, i32, i32) {
    %c0_i32 = arith.constant 0 : i32
    %c0_i32_0 = arith.constant 0 : i32
    %c0_i32_1 = arith.constant 0 : i32
    return %arg0, %c0_i32, %c0_i32_0 : i32, i32, i32
  }
  func.func @transform_8(%arg0: i32) -> (i32, i32, i32) {
    %c0_i32 = arith.constant 0 : i32
    %c0_i32_0 = arith.constant 0 : i32
    %c0_i32_1 = arith.constant 0 : i32
    return %arg0, %c0_i32, %c0_i32_0 : i32, i32, i32
  }
  func.func @transform_9(%arg0: i32) -> (i32, i32, i32) {
    %c0_i32 = arith.constant 0 : i32
    %c0_i32_0 = arith.constant 0 : i32
    %c0_i32_1 = arith.constant 0 : i32
    return %arg0, %c0_i32, %c0_i32_0 : i32, i32, i32
  }
  func.func @transform_10(%arg0: i32) -> (i32, i32, i32) {
    %c0_i32 = arith.constant 0 : i32
    %c0_i32_0 = arith.constant 0 : i32
    %c0_i32_1 = arith.constant 0 : i32
    return %arg0, %c0_i32, %c0_i32_0 : i32, i32, i32
  }
  func.func @transform_11(%arg0: i32) -> (i32, i32, i32) {
    %c0_i32 = arith.constant 0 : i32
    %c0_i32_0 = arith.constant 0 : i32
    %c0_i32_1 = arith.constant 0 : i32
    return %arg0, %c0_i32, %c0_i32_0 : i32, i32, i32
  }
  func.func @transform_12(%arg0: i32) -> (i32, i32, i32) {
    %c0_i32 = arith.constant 0 : i32
    %c0_i32_0 = arith.constant 0 : i32
    %c0_i32_1 = arith.constant 0 : i32
    return %arg0, %c0_i32, %c0_i32_0 : i32, i32, i32
  }
  func.func @transform_13(%arg0: i32) -> (i32, i32, i32) {
    %c0_i32 = arith.constant 0 : i32
    %c0_i32_0 = arith.constant 0 : i32
    %c0_i32_1 = arith.constant 0 : i32
    return %arg0, %c0_i32, %c0_i32_0 : i32, i32, i32
  }
  func.func @transform_14(%arg0: i32) -> (i32, i32, i32) {
    %c0_i32 = arith.constant 0 : i32
    %c0_i32_0 = arith.constant 0 : i32
    %c0_i32_1 = arith.constant 0 : i32
    return %arg0, %c0_i32, %c0_i32_0 : i32, i32, i32
  }
  func.func @transform_15(%arg0: i32) -> (i32, i32, i32) {
    %c0_i32 = arith.constant 0 : i32
    %c0_i32_0 = arith.constant 0 : i32
    %c0_i32_1 = arith.constant 0 : i32
    return %arg0, %c0_i32, %c0_i32_0 : i32, i32, i32
  }
  func.func @transform_16(%arg0: i32) -> (i32, i32) {
    %c0_i32 = arith.constant 0 : i32
    %c0_i32_0 = arith.constant 0 : i32
    %c0_i32_1 = arith.constant 0 : i32
    return %c0_i32, %c0_i32_0 : i32, i32
  }
}

</mosaic_0001>

<llo_original>
// kernel: timemae_forward.1
$region0: #{timemae_forward.1}
  #allocation0 [shape = 'u32[]', space=smem, size = 0x4, offset = 0x4, fixed_abs, tag = 'smem constant byte address 0x4 - core index']
  #allocation1 [shape = 'u32[144,128]{1,0:T(1,128)}', space=vmem, size = 0x12000, scoped, tag = 'internal scratch']
  #allocation2 [shape = 'f32[16,128]{1,0:T(8,128)}', space=vmem, size = 0x2000, scoped, tag = 'scratch operand']
  #allocation3 [shape = 'f32[16,128]{1,0:T(8,128)}', space=vmem, size = 0x2000, scoped, tag = 'scratch operand']
  %s0 = inlined_call_operand.vmem [shape: bf16[2,8,8], index: 0, kind: input, shape index: {}]
  %s1 = inlined_call_operand.vmem [shape: bf16[8,128], index: 1, kind: input, shape index: {}]
  %s2 = inlined_call_operand.vmem [shape: f32[8,128], index: 2, kind: input, shape index: {}]
  %s3 = inlined_call_operand.vmem [shape: f32[1,128], index: 3, kind: input, shape index: {}]
  %s4 = inlined_call_operand.vmem [shape: bf16[2,128,384], index: 4, kind: input, shape index: {}]
  %s5 = inlined_call_operand.vmem [shape: f32[2,1,384], index: 5, kind: input, shape index: {}]
  %s6 = inlined_call_operand.vmem [shape: bf16[2,128,128], index: 6, kind: input, shape index: {}]
  %s7 = inlined_call_operand.vmem [shape: f32[2,1,128], index: 7, kind: input, shape index: {}]
  %s8 = inlined_call_operand.vmem [shape: f32[2,1,128], index: 8, kind: input, shape index: {}]
  %s9 = inlined_call_operand.vmem [shape: f32[2,1,128], index: 9, kind: input, shape index: {}]
  %s10 = inlined_call_operand.vmem [shape: bf16[2,128,256], index: 10, kind: input, shape index: {}]
  %s11 = inlined_call_operand.vmem [shape: f32[2,1,256], index: 11, kind: input, shape index: {}]
  %s12 = inlined_call_operand.vmem [shape: bf16[2,256,128], index: 12, kind: input, shape index: {}]
  %s13 = inlined_call_operand.vmem [shape: f32[2,1,128], index: 13, kind: input, shape index: {}]
  %s14 = inlined_call_operand.vmem [shape: f32[2,1,128], index: 14, kind: input, shape index: {}]
  %s15 = inlined_call_operand.vmem [shape: f32[2,1,128], index: 15, kind: input, shape index: {}]
  %s16 = inlined_call_operand.hbm [shape: f32[2,128], index: 16, kind: output, shape index: {}]
  %s17 = sld [smem:[#allocation0]]
  $region105: #{timemae_forward.1} parent=0
    _
  %s19 = ssub.s32 1, %s17
  %s20 = scalar_select 0, %s19, %s17
  $region1: #{timemae_forward.1} parent=0
    #allocation4 [shape = 'u8[1024]{0}', space=vmem, size = 0x400, scoped, tag = 'output window, operand 0, single buffered']
    #allocation5 [shape = 's32[2]{0}', space=sflag, size = 0x8, scoped, tag = 'scoped memory for timemae_forward.1']
    %21 = vsyncpa [#allocation5], 0
    loop: start=0, step=1, limit=4
    $region2: #{timemae_forward.1} parent=1 // loop_pre_header
      _
    $region3: #{timemae_forward.1} parent=1 // loop_header
      %s23 = sphi 0, %s27
      %p24 = scmp.ge.s32.totalorder %s23, 4
      %s31 = sphi 0, %s31
      %s33 = sphi 0, %s31
      %s34 = sphi 0, %s33
      %s48 = sphi 0, %s34
      %s52 = sphi 0, %s52
      %s54 = sphi 0, %s52
      %s55 = sphi 0, %s54
      %s69 = sphi 0, %s55
      %s73 = sphi 0, %s73
      %s75 = sphi 0, %s73
      %s76 = sphi 0, %s75
      %s90 = sphi 0, %s76
      %s94 = sphi 0, %s94
      %s96 = sphi 0, %s94
      %s97 = sphi 0, %s96
      %s111 = sphi 0, %s97
      %s117 = sphi 0, %s119
      %s120 = sphi 0, %s117
      %s121 = sphi 0, %s120
      %s137 = sphi 0, %s121
      %s143 = sphi 0, %s145
      %s146 = sphi 0, %s143
      %s147 = sphi 0, %s146
      %s163 = sphi 0, %s147
      %s169 = sphi 0, %s171
      %s172 = sphi 0, %s169
      %s173 = sphi 0, %s172
      %s189 = sphi 0, %s173
      %s195 = sphi 0, %s197
      %s198 = sphi 0, %s195
      %s199 = sphi 0, %s198
      %s215 = sphi 0, %s199
      %s221 = sphi 0, %s223
      %s224 = sphi 0, %s221
      %s225 = sphi 0, %s224
      %s241 = sphi 0, %s225
      %s247 = sphi 0, %s249
      %s250 = sphi 0, %s247
      %s251 = sphi 0, %s250
      %s267 = sphi 0, %s251
      %s273 = sphi 0, %s275
      %s276 = sphi 0, %s273
      %s277 = sphi 0, %s276
      %s293 = sphi 0, %s277
      %s299 = sphi 0, %s301
      %s302 = sphi 0, %s299
      %s303 = sphi 0, %s302
      %s319 = sphi 0, %s303
      %s325 = sphi 0, %s327
      %s328 = sphi 0, %s325
      %s329 = sphi 0, %s328
      %s345 = sphi 0, %s329
      %s351 = sphi 0, %s353
      %s354 = sphi 0, %s351
      %s355 = sphi 0, %s354
      %s371 = sphi 0, %s355
      %s377 = sphi 0, %s379
      %s380 = sphi 0, %s377
      %s381 = sphi 0, %s380
      %s397 = sphi 0, %s381
      %s403 = sphi 0, %s405
      %s406 = sphi 0, %s403
      %s407 = sphi 0, %s406
      %s423 = sphi 0, %s407
      %s427 = sphi 0, %s427
      %s429 = sphi 0, %s427
      %s430 = sphi 0, %s429
      %s444 = sphi 0, %s430
    $region4: #{timemae_forward.1} parent=1 // loop_header_branch
      %26 = sbr.rel (%p24) target = $region8
    $region5: #{timemae_forward.1} parent=1 // loop_body
      %s28 = ssub.s32 %s23, 1
      %s29 = ssub.s32 %s23, 2
      %s30 = sadd.s32 %s23, 1
      %s32 = sadd.s32 %s31, 1
      %p35 = scmp.eq.s32.totalorder %s23, 1
      %p36 = scmp.ne.s32.totalorder %s31, %s33
      %p37 = scmp.eq.s32.totalorder %s23, 0
      %p38 = por %p36, %p37
      %p39 = scmp.ne.s32.totalorder %s31, %s33
      %p40 = scmp.eq.s32.totalorder %s28, 1
      %p41 = por %p39, %p40
      %p42 = scmp.ne.s32.totalorder %s33, %s34
      %p43 = scmp.eq.s32.totalorder %s28, 0
      %p44 = por %p42, %p43
      %p45 = scmp.ne.s32.totalorder %s33, %s34
      %p46 = scmp.eq.s32.totalorder %s29, 1
      %p47 = por %p45, %p46
      %p49 = scmp.ne.s32.totalorder %s34, %s48
      %p50 = scmp.eq.s32.totalorder %s29, 0
      %p51 = por %p49, %p50
      %s53 = sadd.s32 %s52, 1
      %p56 = scmp.eq.s32.totalorder %s23, 1
      %p57 = scmp.ne.s32.totalorder %s52, %s54
      %p58 = scmp.eq.s32.totalorder %s23, 0
      %p59 = por %p57, %p58
      %p60 = scmp.ne.s32.totalorder %s52, %s54
      %p61 = scmp.eq.s32.totalorder %s28, 1
      %p62 = por %p60, %p61
      %p63 = scmp.ne.s32.totalorder %s54, %s55
      %p64 = scmp.eq.s32.totalorder %s28, 0
      %p65 = por %p63, %p64
      %p66 = scmp.ne.s32.totalorder %s54, %s55
      %p67 = scmp.eq.s32.totalorder %s29, 1
      %p68 = por %p66, %p67
      %p70 = scmp.ne.s32.totalorder %s55, %s69
      %p71 = scmp.eq.s32.totalorder %s29, 0
      %p72 = por %p70, %p71
      %s74 = sadd.s32 %s73, 1
      %p77 = scmp.eq.s32.totalorder %s23, 1
      %p78 = scmp.ne.s32.totalorder %s73, %s75
      %p79 = scmp.eq.s32.totalorder %s23, 0
      %p80 = por %p78, %p79
      %p81 = scmp.ne.s32.totalorder %s73, %s75
      %p82 = scmp.eq.s32.totalorder %s28, 1
      %p83 = por %p81, %p82
      %p84 = scmp.ne.s32.totalorder %s75, %s76
      %p85 = scmp.eq.s32.totalorder %s28, 0
      %p86 = por %p84, %p85
      %p87 = scmp.ne.s32.totalorder %s75, %s76
      %p88 = scmp.eq.s32.totalorder %s29, 1
      %p89 = por %p87, %p88
      %p91 = scmp.ne.s32.totalorder %s76, %s90
      %p92 = scmp.eq.s32.totalorder %s29, 0
      %p93 = por %p91, %p92
      %s95 = sadd.s32 %s94, 1
      %p98 = scmp.eq.s32.totalorder %s23, 1
      %p99 = scmp.ne.s32.totalorder %s94, %s96
      %p100 = scmp.eq.s32.totalorder %s23, 0
      %p101 = por %p99, %p100
      %p102 = scmp.ne.s32.totalorder %s94, %s96
      %p103 = scmp.eq.s32.totalorder %s28, 1
      %p104 = por %p102, %p103
      %p105 = scmp.ne.s32.totalorder %s96, %s97
      %p106 = scmp.eq.s32.totalorder %s28, 0
      %p107 = por %p105, %p106
      %p108 = scmp.ne.s32.totalorder %s96, %s97
      %p109 = scmp.eq.s32.totalorder %s29, 1
      %p110 = por %p108, %p109
      %p112 = scmp.ne.s32.totalorder %s97, %s111
      %p113 = scmp.eq.s32.totalorder %s29, 0
      %p114 = por %p112, %p113
      %s115 = ssub.s32 %s23, %s30
      %p116 = scmp.eq.s32.totalorder %s115, 0
      %s118 = sadd.s32 %s117, 1
      %s119 = scalar_select %p116, %s117, %s118
      %p122 = pneg %p116
      %p123 = scmp.eq.s32.totalorder %s23, 1
      %p124 = por %p122, %p123
      %p125 = scmp.ne.s32.totalorder %s117, %s120
      %p126 = scmp.eq.s32.totalorder %s23, 0
      %p127 = por %p125, %p126
      %p128 = scmp.ne.s32.totalorder %s117, %s120
      %p129 = scmp.eq.s32.totalorder %s28, 1
      %p130 = por %p128, %p129
      %p131 = scmp.ne.s32.totalorder %s120, %s121
      %p132 = scmp.eq.s32.totalorder %s28, 0
      %p133 = por %p131, %p132
      %p134 = scmp.ne.s32.totalorder %s120, %s121
      %p135 = scmp.eq.s32.totalorder %s29, 1
      %p136 = por %p134, %p135
      %p138 = scmp.ne.s32.totalorder %s121, %s137
      %p139 = scmp.eq.s32.totalorder %s29, 0
      %p140 = por %p138, %p139
      %s141 = ssub.s32 %s23, %s30
      %p142 = scmp.eq.s32.totalorder %s141, 0
      %s144 = sadd.s32 %s143, 1
      %s145 = scalar_select %p142, %s143, %s144
      %p148 = pneg %p142
      %p149 = scmp.eq.s32.totalorder %s23, 1
      %p150 = por %p148, %p149
      %p151 = scmp.ne.s32.totalorder %s143, %s146
      %p152 = scmp.eq.s32.totalorder %s23, 0
      %p153 = por %p151, %p152
      %p154 = scmp.ne.s32.totalorder %s143, %s146
      %p155 = scmp.eq.s32.totalorder %s28, 1
      %p156 = por %p154, %p155
      %p157 = scmp.ne.s32.totalorder %s146, %s147
      %p158 = scmp.eq.s32.totalorder %s28, 0
      %p159 = por %p157, %p158
      %p160 = scmp.ne.s32.totalorder %s146, %s147
      %p161 = scmp.eq.s32.totalorder %s29, 1
      %p162 = por %p160, %p161
      %p164 = scmp.ne.s32.totalorder %s147, %s163
      %p165 = scmp.eq.s32.totalorder %s29, 0
      %p166 = por %p164, %p165
      %s167 = ssub.s32 %s23, %s30
      %p168 = scmp.eq.s32.totalorder %s167, 0
      %s170 = sadd.s32 %s169, 1
      %s171 = scalar_select %p168, %s169, %s170
      %p174 = pneg %p168
      %p175 = scmp.eq.s32.totalorder %s23, 1
      %p176 = por %p174, %p175
      %p177 = scmp.ne.s32.totalorder %s169, %s172
      %p178 = scmp.eq.s32.totalorder %s23, 0
      %p179 = por %p177, %p178
      %p180 = scmp.ne.s32.totalorder %s169, %s172
      %p181 = scmp.eq.s32.totalorder %s28, 1
      %p182 = por %p180, %p181
      %p183 = scmp.ne.s32.totalorder %s172, %s173
      %p184 = scmp.eq.s32.totalorder %s28, 0
      %p185 = por %p183, %p184
      %p186 = scmp.ne.s32.totalorder %s172, %s173
      %p187 = scmp.eq.s32.totalorder %s29, 1
      %p188 = por %p186, %p187
      %p190 = scmp.ne.s32.totalorder %s173, %s189
      %p191 = scmp.eq.s32.totalorder %s29, 0
      %p192 = por %p190, %p191
      %s193 = ssub.s32 %s23, %s30
      %p194 = scmp.eq.s32.totalorder %s193, 0
      %s196 = sadd.s32 %s195, 1
      %s197 = scalar_select %p194, %s195, %s196
      %p200 = pneg %p194
      %p201 = scmp.eq.s32.totalorder %s23, 1
      %p202 = por %p200, %p201
      %p203 = scmp.ne.s32.totalorder %s195, %s198
      %p204 = scmp.eq.s32.totalorder %s23, 0
      %p205 = por %p203, %p204
      %p206 = scmp.ne.s32.totalorder %s195, %s198
      %p207 = scmp.eq.s32.totalorder %s28, 1
      %p208 = por %p206, %p207
      %p209 = scmp.ne.s32.totalorder %s198, %s199
      %p210 = scmp.eq.s32.totalorder %s28, 0
      %p211 = por %p209, %p210
      %p212 = scmp.ne.s32.totalorder %s198, %s199
      %p213 = scmp.eq.s32.totalorder %s29, 1
      %p214 = por %p212, %p213
      %p216 = scmp.ne.s32.totalorder %s199, %s215
      %p217 = scmp.eq.s32.totalorder %s29, 0
      %p218 = por %p216, %p217
      %s219 = ssub.s32 %s23, %s30
      %p220 = scmp.eq.s32.totalorder %s219, 0
      %s222 = sadd.s32 %s221, 1
      %s223 = scalar_select %p220, %s221, %s222
      %p226 = pneg %p220
      %p227 = scmp.eq.s32.totalorder %s23, 1
      %p228 = por %p226, %p227
      %p229 = scmp.ne.s32.totalorder %s221, %s224
      %p230 = scmp.eq.s32.totalorder %s23, 0
      %p231 = por %p229, %p230
      %p232 = scmp.ne.s32.totalorder %s221, %s224
      %p233 = scmp.eq.s32.totalorder %s28, 1
      %p234 = por %p232, %p233
      %p235 = scmp.ne.s32.totalorder %s224, %s225
      %p236 = scmp.eq.s32.totalorder %s28, 0
      %p237 = por %p235, %p236
      %p238 = scmp.ne.s32.totalorder %s224, %s225
      %p239 = scmp.eq.s32.totalorder %s29, 1
      %p240 = por %p238, %p239
      %p242 = scmp.ne.s32.totalorder %s225, %s241
      %p243 = scmp.eq.s32.totalorder %s29, 0
      %p244 = por %p242, %p243
      %s245 = ssub.s32 %s23, %s30
      %p246 = scmp.eq.s32.totalorder %s245, 0
      %s248 = sadd.s32 %s247, 1
      %s249 = scalar_select %p246, %s247, %s248
      %p252 = pneg %p246
      %p253 = scmp.eq.s32.totalorder %s23, 1
      %p254 = por %p252, %p253
      %p255 = scmp.ne.s32.totalorder %s247, %s250
      %p256 = scmp.eq.s32.totalorder %s23, 0
      %p257 = por %p255, %p256
      %p258 = scmp.ne.s32.totalorder %s247, %s250
      %p259 = scmp.eq.s32.totalorder %s28, 1
      %p260 = por %p258, %p259
      %p261 = scmp.ne.s32.totalorder %s250, %s251
      %p262 = scmp.eq.s32.totalorder %s28, 0
      %p263 = por %p261, %p262
      %p264 = scmp.ne.s32.totalorder %s250, %s251
      %p265 = scmp.eq.s32.totalorder %s29, 1
      %p266 = por %p264, %p265
      %p268 = scmp.ne.s32.totalorder %s251, %s267
      %p269 = scmp.eq.s32.totalorder %s29, 0
      %p270 = por %p268, %p269
      %s271 = ssub.s32 %s23, %s30
      %p272 = scmp.eq.s32.totalorder %s271, 0
      %s274 = sadd.s32 %s273, 1
      %s275 = scalar_select %p272, %s273, %s274
      %p278 = pneg %p272
      %p279 = scmp.eq.s32.totalorder %s23, 1
      %p280 = por %p278, %p279
      %p281 = scmp.ne.s32.totalorder %s273, %s276
      %p282 = scmp.eq.s32.totalorder %s23, 0
      %p283 = por %p281, %p282
      %p284 = scmp.ne.s32.totalorder %s273, %s276
      %p285 = scmp.eq.s32.totalorder %s28, 1
      %p286 = por %p284, %p285
      %p287 = scmp.ne.s32.totalorder %s276, %s277
      %p288 = scmp.eq.s32.totalorder %s28, 0
      %p289 = por %p287, %p288
      %p290 = scmp.ne.s32.totalorder %s276, %s277
      %p291 = scmp.eq.s32.totalorder %s29, 1
      %p292 = por %p290, %p291
      %p294 = scmp.ne.s32.totalorder %s277, %s293
      %p295 = scmp.eq.s32.totalorder %s29, 0
      %p296 = por %p294, %p295
      %s297 = ssub.s32 %s23, %s30
      %p298 = scmp.eq.s32.totalorder %s297, 0
      %s300 = sadd.s32 %s299, 1
      %s301 = scalar_select %p298, %s299, %s300
      %p304 = pneg %p298
      %p305 = scmp.eq.s32.totalorder %s23, 1
      %p306 = por %p304, %p305
      %p307 = scmp.ne.s32.totalorder %s299, %s302
      %p308 = scmp.eq.s32.totalorder %s23, 0
      %p309 = por %p307, %p308
      %p310 = scmp.ne.s32.totalorder %s299, %s302
      %p311 = scmp.eq.s32.totalorder %s28, 1
      %p312 = por %p310, %p311
      %p313 = scmp.ne.s32.totalorder %s302, %s303
      %p314 = scmp.eq.s32.totalorder %s28, 0
      %p315 = por %p313, %p314
      %p316 = scmp.ne.s32.totalorder %s302, %s303
      %p317 = scmp.eq.s32.totalorder %s29, 1
      %p318 = por %p316, %p317
      %p320 = scmp.ne.s32.totalorder %s303, %s319
      %p321 = scmp.eq.s32.totalorder %s29, 0
      %p322 = por %p320, %p321
      %s323 = ssub.s32 %s23, %s30
      %p324 = scmp.eq.s32.totalorder %s323, 0
      %s326 = sadd.s32 %s325, 1
      %s327 = scalar_select %p324, %s325, %s326
      %p330 = pneg %p324
      %p331 = scmp.eq.s32.totalorder %s23, 1
      %p332 = por %p330, %p331
      %p333 = scmp.ne.s32.totalorder %s325, %s328
      %p334 = scmp.eq.s32.totalorder %s23, 0
      %p335 = por %p333, %p334
      %p336 = scmp.ne.s32.totalorder %s325, %s328
      %p337 = scmp.eq.s32.totalorder %s28, 1
      %p338 = por %p336, %p337
      %p339 = scmp.ne.s32.totalorder %s328, %s329
      %p340 = scmp.eq.s32.totalorder %s28, 0
      %p341 = por %p339, %p340
      %p342 = scmp.ne.s32.totalorder %s328, %s329
      %p343 = scmp.eq.s32.totalorder %s29, 1
      %p344 = por %p342, %p343
      %p346 = scmp.ne.s32.totalorder %s329, %s345
      %p347 = scmp.eq.s32.totalorder %s29, 0
      %p348 = por %p346, %p347
      %s349 = ssub.s32 %s23, %s30
      %p350 = scmp.eq.s32.totalorder %s349, 0
      %s352 = sadd.s32 %s351, 1
      %s353 = scalar_select %p350, %s351, %s352
      %p356 = pneg %p350
      %p357 = scmp.eq.s32.totalorder %s23, 1
      %p358 = por %p356, %p357
      %p359 = scmp.ne.s32.totalorder %s351, %s354
      %p360 = scmp.eq.s32.totalorder %s23, 0
      %p361 = por %p359, %p360
      %p362 = scmp.ne.s32.totalorder %s351, %s354
      %p363 = scmp.eq.s32.totalorder %s28, 1
      %p364 = por %p362, %p363
      %p365 = scmp.ne.s32.totalorder %s354, %s355
      %p366 = scmp.eq.s32.totalorder %s28, 0
      %p367 = por %p365, %p366
      %p368 = scmp.ne.s32.totalorder %s354, %s355
      %p369 = scmp.eq.s32.totalorder %s29, 1
      %p370 = por %p368, %p369
      %p372 = scmp.ne.s32.totalorder %s355, %s371
      %p373 = scmp.eq.s32.totalorder %s29, 0
      %p374 = por %p372, %p373
      %s375 = ssub.s32 %s23, %s30
      %p376 = scmp.eq.s32.totalorder %s375, 0
      %s378 = sadd.s32 %s377, 1
      %s379 = scalar_select %p376, %s377, %s378
      %p382 = pneg %p376
      %p383 = scmp.eq.s32.totalorder %s23, 1
      %p384 = por %p382, %p383
      %p385 = scmp.ne.s32.totalorder %s377, %s380
      %p386 = scmp.eq.s32.totalorder %s23, 0
      %p387 = por %p385, %p386
      %p388 = scmp.ne.s32.totalorder %s377, %s380
      %p389 = scmp.eq.s32.totalorder %s28, 1
      %p390 = por %p388, %p389
      %p391 = scmp.ne.s32.totalorder %s380, %s381
      %p392 = scmp.eq.s32.totalorder %s28, 0
      %p393 = por %p391, %p392
      %p394 = scmp.ne.s32.totalorder %s380, %s381
      %p395 = scmp.eq.s32.totalorder %s29, 1
      %p396 = por %p394, %p395
      %p398 = scmp.ne.s32.totalorder %s381, %s397
      %p399 = scmp.eq.s32.totalorder %s29, 0
      %p400 = por %p398, %p399
      %s401 = ssub.s32 %s23, %s30
      %p402 = scmp.eq.s32.totalorder %s401, 0
      %s404 = sadd.s32 %s403, 1
      %s405 = scalar_select %p402, %s403, %s404
      %p408 = pneg %p402
      %p409 = scmp.eq.s32.totalorder %s23, 1
      %p410 = por %p408, %p409
      %p411 = scmp.ne.s32.totalorder %s403, %s406
      %p412 = scmp.eq.s32.totalorder %s23, 0
      %p413 = por %p411, %p412
      %p414 = scmp.ne.s32.totalorder %s403, %s406
      %p415 = scmp.eq.s32.totalorder %s28, 1
      %p416 = por %p414, %p415
      %p417 = scmp.ne.s32.totalorder %s406, %s407
      %p418 = scmp.eq.s32.totalorder %s28, 0
      %p419 = por %p417, %p418
      %p420 = scmp.ne.s32.totalorder %s406, %s407
      %p421 = scmp.eq.s32.totalorder %s29, 1
      %p422 = por %p420, %p421
      %p424 = scmp.ne.s32.totalorder %s407, %s423
      %p425 = scmp.eq.s32.totalorder %s29, 0
      %p426 = por %p424, %p425
      %s428 = sadd.s32 %s427, 1
      %p431 = scmp.eq.s32.totalorder %s23, 1
      %p432 = scmp.ne.s32.totalorder %s427, %s429
      %p433 = scmp.eq.s32.totalorder %s23, 0
      %p434 = por %p432, %p433
      %p435 = scmp.ne.s32.totalorder %s427, %s429
      %p436 = scmp.eq.s32.totalorder %s28, 1
      %p437 = por %p435, %p436
      %p438 = scmp.ne.s32.totalorder %s429, %s430
      %p439 = scmp.eq.s32.totalorder %s28, 0
      %p440 = por %p438, %p439
      %p441 = scmp.ne.s32.totalorder %s429, %s430
      %p442 = scmp.eq.s32.totalorder %s29, 1
      %p443 = por %p441, %p442
      %p445 = scmp.ne.s32.totalorder %s430, %s444
      %p446 = scmp.eq.s32.totalorder %s29, 0
      %p447 = por %p445, %p446
      %p448 = scmp.le.s32.totalorder 1, %s23
      %p449 = scmp.lt.s32.totalorder %s23, 3
      %p450 = pnand %p448, %p449
      %p451 = pneg %p450
      // Predicated region
      $region9: #{timemae_forward.1} parent=5 // pred_check
        _
      $region10: #{timemae_forward.1} parent=5 // pred_check_branch
        %453 = sbr.rel (%p450) target = $region12
      $region11: #{timemae_forward.1} parent=5 // pred_region
        %s454 = ssub.s32 %s23, 1
        // Predicated region
        $region13: #{timemae_forward.1} parent=11 // pred_check
          %p455 = pneg %p44
        $region14: #{timemae_forward.1} parent=11 // pred_check_branch
          %457 = sbr.rel (%p455) target = $region16
        $region15: #{timemae_forward.1} parent=11 // pred_region
          _
        $region16: #{timemae_forward.1} parent=11 // pred_fallthru
          _
        // Predicated region
        $region17: #{timemae_forward.1} parent=11 // pred_check
          %p458 = pneg %p65
        $region18: #{timemae_forward.1} parent=11 // pred_check_branch
          %460 = sbr.rel (%p458) target = $region20
        $region19: #{timemae_forward.1} parent=11 // pred_region
          _
        $region20: #{timemae_forward.1} parent=11 // pred_fallthru
          _
        // Predicated region
        $region21: #{timemae_forward.1} parent=11 // pred_check
          %p461 = pneg %p86
        $region22: #{timemae_forward.1} parent=11 // pred_check_branch
          %463 = sbr.rel (%p461) target = $region24
        $region23: #{timemae_forward.1} parent=11 // pred_region
          _
        $region24: #{timemae_forward.1} parent=11 // pred_fallthru
          _
        // Predicated region
        $region25: #{timemae_forward.1} parent=11 // pred_check
          %p464 = pneg %p107
        $region26: #{timemae_forward.1} parent=11 // pred_check_branch
          %466 = sbr.rel (%p464) target = $region28
        $region27: #{timemae_forward.1} parent=11 // pred_region
          _
        $region28: #{timemae_forward.1} parent=11 // pred_fallthru
          _
      $region12: #{timemae_forward.1} parent=5 // pred_fallthru
        _
      %p467 = scmp.lt.s32.totalorder %s23, 2
      // Predicated region
      $region29: #{timemae_forward.1} parent=5 // pred_check
        %p468 = pneg %p467
      $region30: #{timemae_forward.1} parent=5 // pred_check_branch
        %470 = sbr.rel (%p468) target = $region32
      $region31: #{timemae_forward.1} parent=5 // pred_region
        // Predicated region
        $region33: #{timemae_forward.1} parent=31 // pred_check
          %p471 = pneg %p127
        $region34: #{timemae_forward.1} parent=31 // pred_check_branch
          %473 = sbr.rel (%p471) target = $region36
        $region35: #{timemae_forward.1} parent=31 // pred_region
          %p474 = scmp.lt.s32.totalorder %s23, 1
          %s475 = scalar_select %p474, %s23, 1
          %s476 = smul.addr %s475, 48
          %s477 = smul.addr %s476, 4
          %s478 = scalar_lea.vmem %s4, %s477
        $region36: #{timemae_forward.1} parent=31 // pred_fallthru
          _
        // Predicated region
        $region37: #{timemae_forward.1} parent=31 // pred_check
          %p479 = pneg %p153
        $region38: #{timemae_forward.1} parent=31 // pred_check_branch
          %481 = sbr.rel (%p479) target = $region40
        $region39: #{timemae_forward.1} parent=31 // pred_region
          %p482 = scmp.lt.s32.totalorder %s23, 1
          %s483 = scalar_select %p482, %s23, 1
          %s484 = smul.addr %s483, 3
          %s485 = scalar_lea.vmem %s5, %s484
        $region40: #{timemae_forward.1} parent=31 // pred_fallthru
          _
        // Predicated region
        $region41: #{timemae_forward.1} parent=31 // pred_check
          %p486 = pneg %p179
        $region42: #{timemae_forward.1} parent=31 // pred_check_branch
          %488 = sbr.rel (%p486) target = $region44
        $region43: #{timemae_forward.1} parent=31 // pred_region
          %p489 = scmp.lt.s32.totalorder %s23, 1
          %s490 = scalar_select %p489, %s23, 1
          %s491 = smul.addr %s490, 16
          %s492 = smul.addr %s491, 4
          %s493 = scalar_lea.vmem %s6, %s492
        $region44: #{timemae_forward.1} parent=31 // pred_fallthru
          _
        // Predicated region
        $region45: #{timemae_forward.1} parent=31 // pred_check
          %p494 = pneg %p205
        $region46: #{timemae_forward.1} parent=31 // pred_check_branch
          %496 = sbr.rel (%p494) target = $region48
        $region47: #{timemae_forward.1} parent=31 // pred_region
          %p497 = scmp.lt.s32.totalorder %s23, 1
          %s498 = scalar_select %p497, %s23, 1
          %s499 = scalar_lea.vmem %s7, %s498
        $region48: #{timemae_forward.1} parent=31 // pred_fallthru
          _
        // Predicated region
        $region49: #{timemae_forward.1} parent=31 // pred_check
          %p500 = pneg %p231
        $region50: #{timemae_forward.1} parent=31 // pred_check_branch
          %502 = sbr.rel (%p500) target = $region52
        $region51: #{timemae_forward.1} parent=31 // pred_region
          %p503 = scmp.lt.s32.totalorder %s23, 1
          %s504 = scalar_select %p503, %s23, 1
          %s505 = scalar_lea.vmem %s8, %s504
        $region52: #{timemae_forward.1} parent=31 // pred_fallthru
          _
        // Predicated region
        $region53: #{timemae_forward.1} parent=31 // pred_check
          %p506 = pneg %p257
        $region54: #{timemae_forward.1} parent=31 // pred_check_branch
          %508 = sbr.rel (%p506) target = $region56
        $region55: #{timemae_forward.1} parent=31 // pred_region
          %p509 = scmp.lt.s32.totalorder %s23, 1
          %s510 = scalar_select %p509, %s23, 1
          %s511 = scalar_lea.vmem %s9, %s510
        $region56: #{timemae_forward.1} parent=31 // pred_fallthru
          _
        // Predicated region
        $region57: #{timemae_forward.1} parent=31 // pred_check
          %p512 = pneg %p283
        $region58: #{timemae_forward.1} parent=31 // pred_check_branch
          %514 = sbr.rel (%p512) target = $region60
        $region59: #{timemae_forward.1} parent=31 // pred_region
          %p515 = scmp.lt.s32.totalorder %s23, 1
          %s516 = scalar_select %p515, %s23, 1
          %s517 = smul.addr %s516, 32
          %s518 = smul.addr %s517, 4
          %s519 = scalar_lea.vmem %s10, %s518
        $region60: #{timemae_forward.1} parent=31 // pred_fallthru
          _
        // Predicated region
        $region61: #{timemae_forward.1} parent=31 // pred_check
          %p520 = pneg %p309
        $region62: #{timemae_forward.1} parent=31 // pred_check_branch
          %522 = sbr.rel (%p520) target = $region64
        $region63: #{timemae_forward.1} parent=31 // pred_region
          %p523 = scmp.lt.s32.totalorder %s23, 1
          %s524 = scalar_select %p523, %s23, 1
          %s525 = smul.addr %s524, 2
          %s526 = scalar_lea.vmem %s11, %s525
        $region64: #{timemae_forward.1} parent=31 // pred_fallthru
          _
        // Predicated region
        $region65: #{timemae_forward.1} parent=31 // pred_check
          %p527 = pneg %p335
        $region66: #{timemae_forward.1} parent=31 // pred_check_branch
          %529 = sbr.rel (%p527) target = $region68
        $region67: #{timemae_forward.1} parent=31 // pred_region
          %p530 = scmp.lt.s32.totalorder %s23, 1
          %s531 = scalar_select %p530, %s23, 1
          %s532 = smul.addr %s531, 32
          %s533 = smul.addr %s532, 4
          %s534 = scalar_lea.vmem %s12, %s533
        $region68: #{timemae_forward.1} parent=31 // pred_fallthru
          _
        // Predicated region
        $region69: #{timemae_forward.1} parent=31 // pred_check
          %p535 = pneg %p361
        $region70: #{timemae_forward.1} parent=31 // pred_check_branch
          %537 = sbr.rel (%p535) target = $region72
        $region71: #{timemae_forward.1} parent=31 // pred_region
          %p538 = scmp.lt.s32.totalorder %s23, 1
          %s539 = scalar_select %p538, %s23, 1
          %s540 = scalar_lea.vmem %s13, %s539
        $region72: #{timemae_forward.1} parent=31 // pred_fallthru
          _
        // Predicated region
        $region73: #{timemae_forward.1} parent=31 // pred_check
          %p541 = pneg %p387
        $region74: #{timemae_forward.1} parent=31 // pred_check_branch
          %543 = sbr.rel (%p541) target = $region76
        $region75: #{timemae_forward.1} parent=31 // pred_region
          %p544 = scmp.lt.s32.totalorder %s23, 1
          %s545 = scalar_select %p544, %s23, 1
          %s546 = scalar_lea.vmem %s14, %s545
        $region76: #{timemae_forward.1} parent=31 // pred_fallthru
          _
        // Predicated region
        $region77: #{timemae_forward.1} parent=31 // pred_check
          %p547 = pneg %p413
        $region78: #{timemae_forward.1} parent=31 // pred_check_branch
          %549 = sbr.rel (%p547) target = $region80
        $region79: #{timemae_forward.1} parent=31 // pred_region
          %p550 = scmp.lt.s32.totalorder %s23, 1
          %s551 = scalar_select %p550, %s23, 1
          %s552 = scalar_lea.vmem %s15, %s551
        $region80: #{timemae_forward.1} parent=31 // pred_fallthru
          _
      $region32: #{timemae_forward.1} parent=5 // pred_fallthru
        _
      %p553 = scmp.le.s32.totalorder 1, %s23
      %p554 = scmp.lt.s32.totalorder %s23, 3
      %p555 = pnand %p553, %p554
      %p556 = pneg %p555
      // Predicated region
      $region81: #{timemae_forward.1} parent=5 // pred_check
        _
      $region82: #{timemae_forward.1} parent=5 // pred_check_branch
        %558 = sbr.rel (%p555) target = $region84
      $region83: #{timemae_forward.1} parent=5 // pred_region
        %s559 = ssub.s32 %s23, 1
        %p560 = pneg %p44
        %p561 = pneg %p41
        %p562 = pneg %p65
        %p563 = pneg %p62
        %p564 = pneg %p86
        %p565 = pneg %p83
        %p566 = pneg %p107
        %p567 = pneg %p104
        %p568 = scmp.lt.s32.totalorder %s28, 1
        %s569 = scalar_select %p568, %s28, 1
        %s570 = smul.addr %s569, 48
        %s571 = smul.addr %s570, 4
        %s572 = scalar_lea.vmem %s4, %s571
        %p573 = pneg %p133
        %p574 = pneg %p130
        %p575 = scmp.lt.s32.totalorder %s28, 1
        %s576 = scalar_select %p575, %s28, 1
        %s577 = smul.addr %s576, 3
        %s578 = scalar_lea.vmem %s5, %s577
        %p579 = pneg %p159
        %p580 = pneg %p156
        %p581 = scmp.lt.s32.totalorder %s28, 1
        %s582 = scalar_select %p581, %s28, 1
        %s583 = smul.addr %s582, 16
        %s584 = smul.addr %s583, 4
        %s585 = scalar_lea.vmem %s6, %s584
        %p586 = pneg %p185
        %p587 = pneg %p182
        %p588 = scmp.lt.s32.totalorder %s28, 1
        %s589 = scalar_select %p588, %s28, 1
        %s590 = scalar_lea.vmem %s7, %s589
        %p591 = pneg %p211
        %p592 = pneg %p208
        %p593 = scmp.lt.s32.totalorder %s28, 1
        %s594 = scalar_select %p593, %s28, 1
        %s595 = scalar_lea.vmem %s8, %s594
        %p596 = pneg %p237
        %p597 = pneg %p234
        %p598 = scmp.lt.s32.totalorder %s28, 1
        %s599 = scalar_select %p598, %s28, 1
        %s600 = scalar_lea.vmem %s9, %s599
        %p601 = pneg %p263
        %p602 = pneg %p260
        %p603 = scmp.lt.s32.totalorder %s28, 1
        %s604 = scalar_select %p603, %s28, 1
        %s605 = smul.addr %s604, 32
        %s606 = smul.addr %s605, 4
        %s607 = scalar_lea.vmem %s10, %s606
        %p608 = pneg %p289
        %p609 = pneg %p286
        %p610 = scmp.lt.s32.totalorder %s28, 1
        %s611 = scalar_select %p610, %s28, 1
        %s612 = smul.addr %s611, 2
        %s613 = scalar_lea.vmem %s11, %s612
        %p614 = pneg %p315
        %p615 = pneg %p312
        %p616 = scmp.lt.s32.totalorder %s28, 1
        %s617 = scalar_select %p616, %s28, 1
        %s618 = smul.addr %s617, 32
        %s619 = smul.addr %s618, 4
        %s620 = scalar_lea.vmem %s12, %s619
        %p621 = pneg %p341
        %p622 = pneg %p338
        %p623 = scmp.lt.s32.totalorder %s28, 1
        %s624 = scalar_select %p623, %s28, 1
        %s625 = scalar_lea.vmem %s13, %s624
        %p626 = pneg %p367
        %p627 = pneg %p364
        %p628 = scmp.lt.s32.totalorder %s28, 1
        %s629 = scalar_select %p628, %s28, 1
        %s630 = scalar_lea.vmem %s14, %s629
        %p631 = pneg %p393
        %p632 = pneg %p390
        %p633 = scmp.lt.s32.totalorder %s28, 1
        %s634 = scalar_select %p633, %s28, 1
        %s635 = scalar_lea.vmem %s15, %s634
        %p636 = pneg %p419
        %p637 = pneg %p416
        %p638 = pneg %p440
        %p639 = pneg %p437
        %p640 = scmp.lt.s32.totalorder %s28, 1
        %s641 = scalar_select %p640, %s28, 1
        %s642 = smul.addr %s641, 48
        %s643 = smul.addr %s642, 4
        %s644 = scalar_lea.vmem %s4, %s643
        %p645 = scmp.lt.s32.totalorder %s28, 1
        %s646 = scalar_select %p645, %s28, 1
        %s647 = smul.addr %s646, 3
        %s648 = scalar_lea.vmem %s5, %s647
        %p649 = scmp.lt.s32.totalorder %s28, 1
        %s650 = scalar_select %p649, %s28, 1
        %s651 = smul.addr %s650, 16
        %s652 = smul.addr %s651, 4
        %s653 = scalar_lea.vmem %s6, %s652
        %p654 = scmp.lt.s32.totalorder %s28, 1
        %s655 = scalar_select %p654, %s28, 1
        %s656 = scalar_lea.vmem %s7, %s655
        %p657 = scmp.lt.s32.totalorder %s28, 1
        %s658 = scalar_select %p657, %s28, 1
        %s659 = scalar_lea.vmem %s8, %s658
        %p660 = scmp.lt.s32.totalorder %s28, 1
        %s661 = scalar_select %p660, %s28, 1
        %s662 = scalar_lea.vmem %s9, %s661
        %p663 = scmp.lt.s32.totalorder %s28, 1
        %s664 = scalar_select %p663, %s28, 1
        %s665 = smul.addr %s664, 32
        %s666 = smul.addr %s665, 4
        %s667 = scalar_lea.vmem %s10, %s666
        %p668 = scmp.lt.s32.totalorder %s28, 1
        %s669 = scalar_select %p668, %s28, 1
        %s670 = smul.addr %s669, 2
        %s671 = scalar_lea.vmem %s11, %s670
        %p672 = scmp.lt.s32.totalorder %s28, 1
        %s673 = scalar_select %p672, %s28, 1
        %s674 = smul.addr %s673, 32
        %s675 = smul.addr %s674, 4
        %s676 = scalar_lea.vmem %s12, %s675
        %p677 = scmp.lt.s32.totalorder %s28, 1
        %s678 = scalar_select %p677, %s28, 1
        %s679 = scalar_lea.vmem %s13, %s678
        %p680 = scmp.lt.s32.totalorder %s28, 1
        %s681 = scalar_select %p680, %s28, 1
        %s682 = scalar_lea.vmem %s14, %s681
        %p683 = scmp.lt.s32.totalorder %s28, 1
        %s684 = scalar_select %p683, %s28, 1
        %s685 = scalar_lea.vmem %s15, %s684
        %p687 = scmp.eq.s32.totalorder %s28, 0
        // Predicated region
        $region85: #{timemae_forward.1} parent=83 // pred_check
          %p688 = pneg %p687
        $region86: #{timemae_forward.1} parent=83 // pred_check_branch
          %690 = sbr.rel (%p688) target = $region88
        $region87: #{timemae_forward.1} parent=83 // pred_region
          %v691 = vld [vmem:[%s0] sm:$0xf]
          %v692 = vld [vmem:[%s0 + $0x4] sm:$0xf]
          %v693 = vld [vmem:[%s1] sm:$0xf]
          %v696 = vunpack.c.l.b16 %v691
          %v697 = vunpack.c.l.b16 %v692
          %v698 = vpack.c.b16 %v697, %v696
          %vm699 = vcmask 64512
          %v701 = vsel %vm699, %v698, 0
          %vm703 = vcmask 1043456
          %v705 = vsel %vm703, %v693, 0
          %707 = vmatprep.subr.bf16.mxu0 0
          %708 = vmatpush1.bf16.msra.mxu0 %v705
          %709 = vmatprep.subr.bf16.mxu0 0
          %710 = vmatpush1.bf16.msra.mxu0 0
          %711 = vmatprep.subr.bf16.mxu0 0
          %712 = vmatpush1.bf16.msra.mxu0 0
          %713 = vmatprep.subr.bf16.mxu0 0
          %714 = vmatpush1.bf16.msra.mxu0 0
          %715 = vmatprep.subr.bf16.mxu0 0
          %716 = vmatpush1.bf16.msra.mxu0 0
          %717 = vmatprep.subr.bf16.mxu0 0
          %718 = vmatpush1.bf16.msra.mxu0 0
          %719 = vmatprep.subr.bf16.mxu0 0
          %720 = vmatpush1.bf16.msra.mxu0 0
          %721 = vmatprep.subr.bf16.mxu0 0
          %722 = vmatpush1.bf16.msra.mxu0 0
          %723 = vmatprep.subr.bf16.mxu0 0
          %724 = vmatpush1.bf16.msra.mxu0 0
          %725 = vmatprep.subr.bf16.mxu0 0
          %726 = vmatpush1.bf16.msra.mxu0 0
          %727 = vmatprep.subr.bf16.mxu0 0
          %728 = vmatpush1.bf16.msra.mxu0 0
          %729 = vmatprep.subr.bf16.mxu0 0
          %730 = vmatpush1.bf16.msra.mxu0 0
          %731 = vmatprep.subr.bf16.mxu0 0
          %732 = vmatpush1.bf16.msra.mxu0 0
          %733 = vmatprep.subr.bf16.mxu0 0
          %734 = vmatpush1.bf16.msra.mxu0 0
          %735 = vmatprep.subr.bf16.mxu0 0
          %736 = vmatpush1.bf16.msra.mxu0 0
          %737 = vmatprep.subr.bf16.mxu0 0
          %738 = vmatpush1.bf16.msra.mxu0 0
          %739 = vmatprep.mubr.bf16.mxu0 0
          %740 = vmatmul.mubr.bf16.gmra.mrb[0].mxu0 %v701
          %v741 = vpop.f32.mrb[0].mxu0
          %v742 = vadd.f32 0.0, %v741
          %v743 = vpop.f32.mrb[0].mxu0
          %v744 = vpop.f32.mrb[0].mxu0
          %v745 = vadd.f32 0.0, %v744
          %v746 = vpop.f32.mrb[0].mxu0
          %747 = vdwg.mxu0
          %v748 = vld [vmem:[%s2] sm:$0xff]
          %v749 = vadd.f32 %v742, %v748
          %v750 = vadd.f32 %v745, %v748
          %v751 = vld [vmem:[%s3] sm:$0x1]
          %v753 = vlaneseq
          %v754 = vshrl.u32 %v753, 7
          %v755 = vsub.s32 0, %v754
          %v756 = vrot.slane %v751, %v755
          %v758 = vadd.f32 %v749, %v756
          %v759 = vadd.f32 %v750, %v756
          %760 = vst [vmem:[#allocation2] sm:$0xff] %v758
          %761 = vst [vmem:[#allocation2 + $0x8] sm:$0xff] %v759
        $region88: #{timemae_forward.1} parent=83 // pred_fallthru
          _
        %v762 = vld [vmem:[#allocation2] sm:$0xff]
        %v763 = vld [vmem:[#allocation2 + $0x8] sm:$0xff]
        %v764 = vpack.c.bf16 %v763, %v762
        %v765 = vld [vmem:[%s644] sm:$0xff]
        %v766 = vld [vmem:[%s644 + $0x8] sm:$0xf]
        %v767 = vld [vmem:[%s644 + $0xc] sm:$0xff]
        %v768 = vld [vmem:[%s644 + $0x14] sm:$0xf]
        %v769 = vld [vmem:[%s644 + $0x18] sm:$0xff]
        %v770 = vld [vmem:[%s644 + $0x20] sm:$0xf]
        %v771 = vld [vmem:[%s644 + $0x24] sm:$0xff]
        %v772 = vld [vmem:[%s644 + $0x2c] sm:$0xf]
        %v773 = vld [vmem:[%s644 + $0x30] sm:$0xff]
        %v774 = vld [vmem:[%s644 + $0x38] sm:$0xf]
        %v775 = vld [vmem:[%s644 + $0x3c] sm:$0xff]
        %v776 = vld [vmem:[%s644 + $0x44] sm:$0xf]
        %v777 = vld [vmem:[%s644 + $0x48] sm:$0xff]
        %v778 = vld [vmem:[%s644 + $0x50] sm:$0xf]
        %v779 = vld [vmem:[%s644 + $0x54] sm:$0xff]
        %v780 = vld [vmem:[%s644 + $0x5c] sm:$0xf]
        %v781 = vld [vmem:[%s644 + $0x60] sm:$0xff]
        %v782 = vld [vmem:[%s644 + $0x68] sm:$0xf]
        %v783 = vld [vmem:[%s644 + $0x6c] sm:$0xff]
        %v784 = vld [vmem:[%s644 + $0x74] sm:$0xf]
        %v785 = vld [vmem:[%s644 + $0x78] sm:$0xff]
        %v786 = vld [vmem:[%s644 + $0x80] sm:$0xf]
        %v787 = vld [vmem:[%s644 + $0x84] sm:$0xff]
        %v788 = vld [vmem:[%s644 + $0x8c] sm:$0xf]
        %v789 = vld [vmem:[%s644 + $0x90] sm:$0xff]
        %v790 = vld [vmem:[%s644 + $0x98] sm:$0xf]
        %v791 = vld [vmem:[%s644 + $0x9c] sm:$0xff]
        %v792 = vld [vmem:[%s644 + $0xa4] sm:$0xf]
        %v793 = vld [vmem:[%s644 + $0xa8] sm:$0xff]
        %v794 = vld [vmem:[%s644 + $0xb0] sm:$0xf]
        %v795 = vld [vmem:[%s644 + $0xb4] sm:$0xff]
        %v796 = vld [vmem:[%s644 + $0xbc] sm:$0xf]
        %v797 = vld [vmem:[%s648] sm:$0x7]
        %v799 = vlaneseq
        %v800 = vshrl.u32 %v799, 7
        %v801 = vsub.s32 0, %v800
        %v802 = vrot.slane %v797, %v801
        %v803 = vlaneseq
        %v804 = vshrl.u32 %v803, 7
        %v805 = vsub.s32 1, %v804
        %v806 = vrot.slane %v797, %v805
        %v807 = vlaneseq
        %v808 = vshrl.u32 %v807, 7
        %v809 = vsub.s32 2, %v808
        %v810 = vrot.slane %v797, %v809
        %v846 = vunpack.c.l.b16 %v765
        %v847 = vunpack.c.h.b16 %v765
        %v848 = vunpack.c.l.b16 %v766
        %v849 = vunpack.c.l.b16 %v767
        %v850 = vunpack.c.h.b16 %v767
        %v851 = vunpack.c.l.b16 %v768
        %v852 = vunpack.c.l.b16 %v769
        %v853 = vunpack.c.h.b16 %v769
        %v854 = vunpack.c.l.b16 %v770
        %v855 = vunpack.c.l.b16 %v771
        %v856 = vunpack.c.h.b16 %v771
        %v857 = vunpack.c.l.b16 %v772
        %v858 = vunpack.c.l.b16 %v773
        %v859 = vunpack.c.h.b16 %v773
        %v860 = vunpack.c.l.b16 %v774
        %v861 = vunpack.c.l.b16 %v775
        %v862 = vunpack.c.h.b16 %v775
        %v863 = vunpack.c.l.b16 %v776
        %v864 = vunpack.c.l.b16 %v777
        %v865 = vunpack.c.h.b16 %v777
        %v866 = vunpack.c.l.b16 %v778
        %v867 = vunpack.c.l.b16 %v779
        %v868 = vunpack.c.h.b16 %v779
        %v869 = vunpack.c.l.b16 %v780
        %v870 = vunpack.c.l.b16 %v781
        %v871 = vunpack.c.h.b16 %v781
        %v872 = vunpack.c.l.b16 %v782
        %v873 = vunpack.c.l.b16 %v783
        %v874 = vunpack.c.h.b16 %v783
        %v875 = vunpack.c.l.b16 %v784
        %v876 = vunpack.c.l.b16 %v785
        %v877 = vunpack.c.h.b16 %v785
        %v878 = vunpack.c.l.b16 %v786
        %v879 = vunpack.c.l.b16 %v787
        %v880 = vunpack.c.h.b16 %v787
        %v881 = vunpack.c.l.b16 %v788
        %v882 = vunpack.c.l.b16 %v789
        %v883 = vunpack.c.h.b16 %v789
        %v884 = vunpack.c.l.b16 %v790
        %v885 = vunpack.c.l.b16 %v791
        %v886 = vunpack.c.h.b16 %v791
        %v887 = vunpack.c.l.b16 %v792
        %v888 = vunpack.c.l.b16 %v793
        %v889 = vunpack.c.h.b16 %v793
        %v890 = vunpack.c.l.b16 %v794
        %v891 = vunpack.c.l.b16 %v795
        %v892 = vunpack.c.h.b16 %v795
        %v893 = vunpack.c.l.b16 %v796
        %v894 = vpack.c.b16 %v849, %v846
        %v895 = vpack.c.b16 %v850, %v847
        %v896 = vpack.c.b16 %v851, %v848
        %v897 = vpack.c.b16 %v855, %v852
        %v898 = vpack.c.b16 %v856, %v853
        %v899 = vpack.c.b16 %v857, %v854
        %v900 = vpack.c.b16 %v861, %v858
        %v901 = vpack.c.b16 %v862, %v859
        %v902 = vpack.c.b16 %v863, %v860
        %v903 = vpack.c.b16 %v867, %v864
        %v904 = vpack.c.b16 %v868, %v865
        %v905 = vpack.c.b16 %v869, %v866
        %v906 = vpack.c.b16 %v873, %v870
        %v907 = vpack.c.b16 %v874, %v871
        %v908 = vpack.c.b16 %v875, %v872
        %v909 = vpack.c.b16 %v879, %v876
        %v910 = vpack.c.b16 %v880, %v877
        %v911 = vpack.c.b16 %v881, %v878
        %v912 = vpack.c.b16 %v885, %v882
        %v913 = vpack.c.b16 %v886, %v883
        %v914 = vpack.c.b16 %v887, %v884
        %v915 = vpack.c.b16 %v891, %v888
        %v916 = vpack.c.b16 %v892, %v889
        %v917 = vpack.c.b16 %v893, %v890
        %942 = vmatprep.subr.bf16.mxu0 %v895
        %943 = vmatpush1.bf16.msra.mxu0 %v894
        %944 = vmatprep.subr.bf16.mxu0 %v898
        %945 = vmatpush1.bf16.msra.mxu0 %v897
        %946 = vmatprep.subr.bf16.mxu0 %v901
        %947 = vmatpush1.bf16.msra.mxu0 %v900
        %948 = vmatprep.subr.bf16.mxu0 %v904
        %949 = vmatpush1.bf16.msra.mxu0 %v903
        %950 = vmatprep.subr.bf16.mxu0 %v907
        %951 = vmatpush1.bf16.msra.mxu0 %v906
        %952 = vmatprep.subr.bf16.mxu0 %v910
        %953 = vmatpush1.bf16.msra.mxu0 %v909
        %954 = vmatprep.subr.bf16.mxu0 %v913
        %955 = vmatpush1.bf16.msra.mxu0 %v912
        %956 = vmatprep.subr.bf16.mxu0 %v916
        %957 = vmatpush1.bf16.msra.mxu0 %v915
        %958 = vmatprep.subr.bf16.mxu0 0
        %959 = vmatpush1.bf16.msra.mxu0 0
        %960 = vmatprep.subr.bf16.mxu0 0
        %961 = vmatpush1.bf16.msra.mxu0 0
        %962 = vmatprep.subr.bf16.mxu0 0
        %963 = vmatpush1.bf16.msra.mxu0 0
        %964 = vmatprep.subr.bf16.mxu0 0
        %965 = vmatpush1.bf16.msra.mxu0 0
        %966 = vmatprep.subr.bf16.mxu0 0
        %967 = vmatpush1.bf16.msra.mxu0 0
        %968 = vmatprep.subr.bf16.mxu0 0
        %969 = vmatpush1.bf16.msra.mxu0 0
        %970 = vmatprep.subr.bf16.mxu0 0
        %971 = vmatpush1.bf16.msra.mxu0 0
        %972 = vmatprep.subr.bf16.mxu0 0
        %973 = vmatpush1.bf16.msra.mxu0 0
        %974 = vmatprep.mubr.bf16.mxu0 0
        %975 = vmatmul.mubr.bf16.gmra.mrb[0].mxu0 %v764
        %v976 = vpop.f32.mrb[0].mxu0
        %v977 = vadd.f32 %v802, %v976
        %v978 = vpop.f32.mrb[0].mxu0
        %v979 = vadd.f32 %v806, %v978
        %v980 = vpop.f32.mrb[0].mxu0
        %v981 = vadd.f32 %v802, %v980
        %v982 = vpop.f32.mrb[0].mxu0
        %v983 = vadd.f32 %v806, %v982
        %984 = vdwg.mxu0
        %985 = vmatprep.subr.bf16.mxu0 0
        %986 = vmatpush1.bf16.msra.mxu0 %v896
        %987 = vmatprep.subr.bf16.mxu0 0
        %988 = vmatpush1.bf16.msra.mxu0 %v899
        %989 = vmatprep.subr.bf16.mxu0 0
        %990 = vmatpush1.bf16.msra.mxu0 %v902
        %991 = vmatprep.subr.bf16.mxu0 0
        %992 = vmatpush1.bf16.msra.mxu0 %v905
        %993 = vmatprep.subr.bf16.mxu0 0
        %994 = vmatpush1.bf16.msra.mxu0 %v908
        %995 = vmatprep.subr.bf16.mxu0 0
        %996 = vmatpush1.bf16.msra.mxu0 %v911
        %997 = vmatprep.subr.bf16.mxu0 0
        %998 = vmatpush1.bf16.msra.mxu0 %v914
        %999 = vmatprep.subr.bf16.mxu0 0
        %1000 = vmatpush1.bf16.msra.mxu0 %v917
        %1001 = vmatprep.subr.bf16.mxu0 0
        %1002 = vmatpush1.bf16.msra.mxu0 0
        %1003 = vmatprep.subr.bf16.mxu0 0
        %1004 = vmatpush1.bf16.msra.mxu0 0
        %1005 = vmatprep.subr.bf16.mxu0 0
        %1006 = vmatpush1.bf16.msra.mxu0 0
        %1007 = vmatprep.subr.bf16.mxu0 0
        %1008 = vmatpush1.bf16.msra.mxu0 0
        %1009 = vmatprep.subr.bf16.mxu0 0
        %1010 = vmatpush1.bf16.msra.mxu0 0
        %1011 = vmatprep.subr.bf16.mxu0 0
        %1012 = vmatpush1.bf16.msra.mxu0 0
        %1013 = vmatprep.subr.bf16.mxu0 0
        %1014 = vmatpush1.bf16.msra.mxu0 0
        %1015 = vmatprep.subr.bf16.mxu0 0
        %1016 = vmatpush1.bf16.msra.mxu0 0
        %1017 = vmatprep.mubr.bf16.mxu0 0
        %1018 = vmatmul.mubr.bf16.gmra.mrb[0].mxu0 %v764
        %v1019 = vpop.f32.mrb[0].mxu0
        %v1020 = vadd.f32 %v810, %v1019
        %v1021 = vpop.f32.mrb[0].mxu0
        %v1022 = vpop.f32.mrb[0].mxu0
        %v1023 = vadd.f32 %v810, %v1022
        %v1024 = vpop.f32.mrb[0].mxu0
        %1025 = vdwg.mxu0
        %v1026 = vpack.c.bf16 %v977, %v977
        %v1027 = vpack.c.bf16 %v981, %v981
        %v1028 = vpack.c.bf16 %v979, %v979
        %v1029 = vpack.c.bf16 %v983, %v983
        %v1030 = vpack.c.bf16 %v1020, %v1020
        %v1031 = vpack.c.bf16 %v1023, %v1023
        %vm1032 = vcmask 261120
        %v1034 = vsel %vm1032, %v1026, 0
        %v1037 = vsel %vm1032, %v1028, 0
        %1039 = vmatprep.subr.bf16.mxu0 0
        %1040 = vmatpush1.bf16.xpose.msra.mxu0 %v1037
        %1041 = vmatprep.subr.bf16.mxu0 0
        %1042 = vmatpush1.bf16.xpose.msra.mxu0 0
        %1043 = vmatprep.subr.bf16.mxu0 0
        %1044 = vmatpush1.bf16.xpose.msra.mxu0 0
        %1045 = vmatprep.subr.bf16.mxu0 0
        %1046 = vmatpush1.bf16.xpose.msra.mxu0 0
        %1047 = vmatprep.subr.bf16.mxu0 0
        %1048 = vmatpush1.bf16.xpose.msra.mxu0 0
        %1049 = vmatprep.subr.bf16.mxu0 0
        %1050 = vmatpush1.bf16.xpose.msra.mxu0 0
        %1051 = vmatprep.subr.bf16.mxu0 0
        %1052 = vmatpush1.bf16.xpose.msra.mxu0 0
        %1053 = vmatprep.subr.bf16.mxu0 0
        %1054 = vmatpush1.bf16.xpose.msra.mxu0 0
        %1055 = vmatprep.subr.bf16.mxu0 0
        %1056 = vmatpush1.bf16.xpose.msra.mxu0 0
        %1057 = vmatprep.subr.bf16.mxu0 0
        %1058 = vmatpush1.bf16.xpose.msra.mxu0 0
        %1059 = vmatprep.subr.bf16.mxu0 0
        %1060 = vmatpush1.bf16.xpose.msra.mxu0 0
        %1061 = vmatprep.subr.bf16.mxu0 0
        %1062 = vmatpush1.bf16.xpose.msra.mxu0 0
        %1063 = vmatprep.subr.bf16.mxu0 0
        %1064 = vmatpush1.bf16.xpose.msra.mxu0 0
        %1065 = vmatprep.subr.bf16.mxu0 0
        %1066 = vmatpush1.bf16.xpose.msra.mxu0 0
        %1067 = vmatprep.subr.bf16.mxu0 0
        %1068 = vmatpush1.bf16.xpose.msra.mxu0 0
        %1069 = vmatprep.subr.bf16.mxu0 0
        %1070 = vmatpush1.bf16.xpose.msra.mxu0 0
        %1071 = vmatprep.mubr.bf16.mxu0 0
        %1072 = vmatmul.mubr.bf16.gmra.mrb[0].mxu0 %v1034
        %v1073 = vpop.f32.mrb[0].mxu0
        %v1074 = vadd.f32 0.0, %v1073
        %v1075 = vpop.f32.mrb[0].mxu0
        %v1076 = vpop.f32.mrb[0].mxu0
        %v1077 = vpop.f32.mrb[0].mxu0
        %1078 = vdwg.mxu0
        %v1080 = vsel %vm1032, %v1027, 0
        %v1083 = vsel %vm1032, %v1029, 0
        %1085 = vmatprep.subr.bf16.mxu0 0
        %1086 = vmatpush1.bf16.xpose.msra.mxu0 %v1083
        %1087 = vmatprep.subr.bf16.mxu0 0
        %1088 = vmatpush1.bf16.xpose.msra.mxu0 0
        %1089 = vmatprep.subr.bf16.mxu0 0
        %1090 = vmatpush1.bf16.xpose.msra.mxu0 0
        %1091 = vmatprep.subr.bf16.mxu0 0
        %1092 = vmatpush1.bf16.xpose.msra.mxu0 0
        %1093 = vmatprep.subr.bf16.mxu0 0
        %1094 = vmatpush1.bf16.xpose.msra.mxu0 0
        %1095 = vmatprep.subr.bf16.mxu0 0
        %1096 = vmatpush1.bf16.xpose.msra.mxu0 0
        %1097 = vmatprep.subr.bf16.mxu0 0
        %1098 = vmatpush1.bf16.xpose.msra.mxu0 0
        %1099 = vmatprep.subr.bf16.mxu0 0
        %1100 = vmatpush1.bf16.xpose.msra.mxu0 0
        %1101 = vmatprep.subr.bf16.mxu0 0
        %1102 = vmatpush1.bf16.xpose.msra.mxu0 0
        %1103 = vmatprep.subr.bf16.mxu0 0
        %1104 = vmatpush1.bf16.xpose.msra.mxu0 0
        %1105 = vmatprep.subr.bf16.mxu0 0
        %1106 = vmatpush1.bf16.xpose.msra.mxu0 0
        %1107 = vmatprep.subr.bf16.mxu0 0
        %1108 = vmatpush1.bf16.xpose.msra.mxu0 0
        %1109 = vmatprep.subr.bf16.mxu0 0
        %1110 = vmatpush1.bf16.xpose.msra.mxu0 0
        %1111 = vmatprep.subr.bf16.mxu0 0
        %1112 = vmatpush1.bf16.xpose.msra.mxu0 0
        %1113 = vmatprep.subr.bf16.mxu0 0
        %1114 = vmatpush1.bf16.xpose.msra.mxu0 0
        %1115 = vmatprep.subr.bf16.mxu0 0
        %1116 = vmatpush1.bf16.xpose.msra.mxu0 0
        %1117 = vmatprep.mubr.bf16.mxu0 0
        %1118 = vmatmul.mubr.bf16.gmra.mrb[0].mxu0 %v1080
        %v1119 = vpop.f32.mrb[0].mxu0
        %v1120 = vadd.f32 0.0, %v1119
        %v1121 = vpop.f32.mrb[0].mxu0
        %v1122 = vpop.f32.mrb[0].mxu0
        %v1123 = vpop.f32.mrb[0].mxu0
        %1124 = vdwg.mxu0
        %v1125 = vmul.f32 %v1074, 0.17677669
        %v1126 = vmul.f32 %v1120, 0.17677669
        %vm1127 = vcmask 64512
        %v1128 = vsel %vm1127, %v1125, -inf
        %1129 = vmax.xlane.f32.xlu0 %v1128
        %v1130 = vpop.xlane.xlu0 %1129
        %v1131 = vsel %vm1127, %v1126, -inf
        %1132 = vmax.xlane.f32.xlu0 %v1131
        %v1133 = vpop.xlane.xlu0 %1132
        %v1134 = vsub.f32 %v1125, %v1130
        %v1135 = vsub.f32 %v1126, %v1133
        %v1136 = vmul.f32 %v1134, 1.442695
        %v1137 = vpow.pop %v1136
        %v1138 = vmul.f32 %v1135, 1.442695
        %v1139 = vpow.pop %v1138
        %v1140 = vsel %vm1127, %v1137, 0.0
        %1141 = vadd.xlane.f32.xlu0 %v1140
        %v1142 = vpop.xlane.xlu0 %1141
        %v1143 = vsel %vm1127, %v1139, 0.0
        %1144 = vadd.xlane.f32.xlu0 %v1143
        %v1145 = vpop.xlane.xlu0 %1144
        %v1146 = vrcp.pop %v1142
        %v1147 = vrcp.pop %v1145
        %v1148 = vmul.f32 %v1137, %v1146
        %v1149 = vmul.f32 %v1139, %v1147
        %v1150 = vpack.c.bf16 %v1148, %v1148
        %v1151 = vpack.c.bf16 %v1149, %v1149
        %v1153 = vsel %vm1127, %v1150, 0
        %vm1155 = vcmask 1043456
        %v1157 = vsel %vm1155, %v1030, 0
        %1159 = vmatprep.subr.bf16.mxu0 0
        %1160 = vmatpush1.bf16.msra.mxu0 %v1157
        %1161 = vmatprep.subr.bf16.mxu0 0
        %1162 = vmatpush1.bf16.msra.mxu0 0
        %1163 = vmatprep.subr.bf16.mxu0 0
        %1164 = vmatpush1.bf16.msra.mxu0 0
        %1165 = vmatprep.subr.bf16.mxu0 0
        %1166 = vmatpush1.bf16.msra.mxu0 0
        %1167 = vmatprep.subr.bf16.mxu0 0
        %1168 = vmatpush1.bf16.msra.mxu0 0
        %1169 = vmatprep.subr.bf16.mxu0 0
        %1170 = vmatpush1.bf16.msra.mxu0 0
        %1171 = vmatprep.subr.bf16.mxu0 0
        %1172 = vmatpush1.bf16.msra.mxu0 0
        %1173 = vmatprep.subr.bf16.mxu0 0
        %1174 = vmatpush1.bf16.msra.mxu0 0
        %1175 = vmatprep.subr.bf16.mxu0 0
        %1176 = vmatpush1.bf16.msra.mxu0 0
        %1177 = vmatprep.subr.bf16.mxu0 0
        %1178 = vmatpush1.bf16.msra.mxu0 0
        %1179 = vmatprep.subr.bf16.mxu0 0
        %1180 = vmatpush1.bf16.msra.mxu0 0
        %1181 = vmatprep.subr.bf16.mxu0 0
        %1182 = vmatpush1.bf16.msra.mxu0 0
        %1183 = vmatprep.subr.bf16.mxu0 0
        %1184 = vmatpush1.bf16.msra.mxu0 0
        %1185 = vmatprep.subr.bf16.mxu0 0
        %1186 = vmatpush1.bf16.msra.mxu0 0
        %1187 = vmatprep.subr.bf16.mxu0 0
        %1188 = vmatpush1.bf16.msra.mxu0 0
        %1189 = vmatprep.subr.bf16.mxu0 0
        %1190 = vmatpush1.bf16.msra.mxu0 0
        %1191 = vmatprep.mubr.bf16.mxu0 0
        %1192 = vmatmul.mubr.bf16.gmra.mrb[0].mxu0 %v1153
        %v1193 = vpop.f32.mrb[0].mxu0
        %v1194 = vadd.f32 0.0, %v1193
        %v1195 = vpop.f32.mrb[0].mxu0
        %v1196 = vpop.f32.mrb[0].mxu0
        %v1197 = vpop.f32.mrb[0].mxu0
        %1198 = vdwg.mxu0
        %v1200 = vsel %vm1127, %v1151, 0
        %v1203 = vsel %vm1155, %v1031, 0
        %1205 = vmatprep.subr.bf16.mxu0 0
        %1206 = vmatpush1.bf16.msra.mxu0 %v1203
        %1207 = vmatprep.subr.bf16.mxu0 0
        %1208 = vmatpush1.bf16.msra.mxu0 0
        %1209 = vmatprep.subr.bf16.mxu0 0
        %1210 = vmatpush1.bf16.msra.mxu0 0
        %1211 = vmatprep.subr.bf16.mxu0 0
        %1212 = vmatpush1.bf16.msra.mxu0 0
        %1213 = vmatprep.subr.bf16.mxu0 0
        %1214 = vmatpush1.bf16.msra.mxu0 0
        %1215 = vmatprep.subr.bf16.mxu0 0
        %1216 = vmatpush1.bf16.msra.mxu0 0
        %1217 = vmatprep.subr.bf16.mxu0 0
        %1218 = vmatpush1.bf16.msra.mxu0 0
        %1219 = vmatprep.subr.bf16.mxu0 0
        %1220 = vmatpush1.bf16.msra.mxu0 0
        %1221 = vmatprep.subr.bf16.mxu0 0
        %1222 = vmatpush1.bf16.msra.mxu0 0
        %1223 = vmatprep.subr.bf16.mxu0 0
        %1224 = vmatpush1.bf16.msra.mxu0 0
        %1225 = vmatprep.subr.bf16.mxu0 0
        %1226 = vmatpush1.bf16.msra.mxu0 0
        %1227 = vmatprep.subr.bf16.mxu0 0
        %1228 = vmatpush1.bf16.msra.mxu0 0
        %1229 = vmatprep.subr.bf16.mxu0 0
        %1230 = vmatpush1.bf16.msra.mxu0 0
        %1231 = vmatprep.subr.bf16.mxu0 0
        %1232 = vmatpush1.bf16.msra.mxu0 0
        %1233 = vmatprep.subr.bf16.mxu0 0
        %1234 = vmatpush1.bf16.msra.mxu0 0
        %1235 = vmatprep.subr.bf16.mxu0 0
        %1236 = vmatpush1.bf16.msra.mxu0 0
        %1237 = vmatprep.mubr.bf16.mxu0 0
        %1238 = vmatmul.mubr.bf16.gmra.mrb[0].mxu0 %v1200
        %v1239 = vpop.f32.mrb[0].mxu0
        %v1240 = vadd.f32 0.0, %v1239
        %v1241 = vpop.f32.mrb[0].mxu0
        %v1242 = vpop.f32.mrb[0].mxu0
        %v1243 = vpop.f32.mrb[0].mxu0
        %1244 = vdwg.mxu0
        %1245 = vst.msk [vmem:[#allocation3] sm:$0xff] %vm1032, %v1194
        %1246 = vst.msk [vmem:[#allocation3 + $0x8] sm:$0xff] %vm1032, %v1240
        %1248 = vrot.lane.b32.xlu0 %v1026, 96
        %v1249 = vpop.permute.xlu0 %1248
        %1251 = vrot.lane.b32.xlu0 %v1028, 96
        %v1252 = vpop.permute.xlu0 %1251
        %v1254 = vsel %vm1032, %v1249, 0
        %v1257 = vsel %vm1032, %v1252, 0
        %1259 = vmatprep.subr.bf16.mxu0 0
        %1260 = vmatpush1.bf16.xpose.msra.mxu0 %v1257
        %1261 = vmatprep.subr.bf16.mxu0 0
        %1262 = vmatpush1.bf16.xpose.msra.mxu0 0
        %1263 = vmatprep.subr.bf16.mxu0 0
        %1264 = vmatpush1.bf16.xpose.msra.mxu0 0
        %1265 = vmatprep.subr.bf16.mxu0 0
        %1266 = vmatpush1.bf16.xpose.msra.mxu0 0
        %1267 = vmatprep.subr.bf16.mxu0 0
        %1268 = vmatpush1.bf16.xpose.msra.mxu0 0
        %1269 = vmatprep.subr.bf16.mxu0 0
        %1270 = vmatpush1.bf16.xpose.msra.mxu0 0
        %1271 = vmatprep.subr.bf16.mxu0 0
        %1272 = vmatpush1.bf16.xpose.msra.mxu0 0
        %1273 = vmatprep.subr.bf16.mxu0 0
        %1274 = vmatpush1.bf16.xpose.msra.mxu0 0
        %1275 = vmatprep.subr.bf16.mxu0 0
        %1276 = vmatpush1.bf16.xpose.msra.mxu0 0
        %1277 = vmatprep.subr.bf16.mxu0 0
        %1278 = vmatpush1.bf16.xpose.msra.mxu0 0
        %1279 = vmatprep.subr.bf16.mxu0 0
        %1280 = vmatpush1.bf16.xpose.msra.mxu0 0
        %1281 = vmatprep.subr.bf16.mxu0 0
        %1282 = vmatpush1.bf16.xpose.msra.mxu0 0
        %1283 = vmatprep.subr.bf16.mxu0 0
        %1284 = vmatpush1.bf16.xpose.msra.mxu0 0
        %1285 = vmatprep.subr.bf16.mxu0 0
        %1286 = vmatpush1.bf16.xpose.msra.mxu0 0
        %1287 = vmatprep.subr.bf16.mxu0 0
        %1288 = vmatpush1.bf16.xpose.msra.mxu0 0
        %1289 = vmatprep.subr.bf16.mxu0 0
        %1290 = vmatpush1.bf16.xpose.msra.mxu0 0
        %1291 = vmatprep.mubr.bf16.mxu0 0
        %1292 = vmatmul.mubr.bf16.gmra.mrb[0].mxu0 %v1254
        %v1293 = vpop.f32.mrb[0].mxu0
        %v1294 = vadd.f32 0.0, %v1293
        %v1295 = vpop.f32.mrb[0].mxu0
        %v1296 = vpop.f32.mrb[0].mxu0
        %v1297 = vpop.f32.mrb[0].mxu0
        %1298 = vdwg.mxu0
        %1300 = vrot.lane.b32.xlu0 %v1027, 96
        %v1301 = vpop.permute.xlu0 %1300
        %1303 = vrot.lane.b32.xlu0 %v1029, 96
        %v1304 = vpop.permute.xlu0 %1303
        %v1306 = vsel %vm1032, %v1301, 0
        %v1309 = vsel %vm1032, %v1304, 0
        %1311 = vmatprep.subr.bf16.mxu0 0
        %1312 = vmatpush1.bf16.xpose.msra.mxu0 %v1309
        %1313 = vmatprep.subr.bf16.mxu0 0
        %1314 = vmatpush1.bf16.xpose.msra.mxu0 0
        %1315 = vmatprep.subr.bf16.mxu0 0
        %1316 = vmatpush1.bf16.xpose.msra.mxu0 0
        %1317 = vmatprep.subr.bf16.mxu0 0
        %1318 = vmatpush1.bf16.xpose.msra.mxu0 0
        %1319 = vmatprep.subr.bf16.mxu0 0
        %1320 = vmatpush1.bf16.xpose.msra.mxu0 0
        %1321 = vmatprep.subr.bf16.mxu0 0
        %1322 = vmatpush1.bf16.xpose.msra.mxu0 0
        %1323 = vmatprep.subr.bf16.mxu0 0
        %1324 = vmatpush1.bf16.xpose.msra.mxu0 0
        %1325 = vmatprep.subr.bf16.mxu0 0
        %1326 = vmatpush1.bf16.xpose.msra.mxu0 0
        %1327 = vmatprep.subr.bf16.mxu0 0
        %1328 = vmatpush1.bf16.xpose.msra.mxu0 0
        %1329 = vmatprep.subr.bf16.mxu0 0
        %1330 = vmatpush1.bf16.xpose.msra.mxu0 0
        %1331 = vmatprep.subr.bf16.mxu0 0
        %1332 = vmatpush1.bf16.xpose.msra.mxu0 0
        %1333 = vmatprep.subr.bf16.mxu0 0
        %1334 = vmatpush1.bf16.xpose.msra.mxu0 0
        %1335 = vmatprep.subr.bf16.mxu0 0
        %1336 = vmatpush1.bf16.xpose.msra.mxu0 0
        %1337 = vmatprep.subr.bf16.mxu0 0
        %1338 = vmatpush1.bf16.xpose.msra.mxu0 0
        %1339 = vmatprep.subr.bf16.mxu0 0
        %1340 = vmatpush1.bf16.xpose.msra.mxu0 0
        %1341 = vmatprep.subr.bf16.mxu0 0
        %1342 = vmatpush1.bf16.xpose.msra.mxu0 0
        %1343 = vmatprep.mubr.bf16.mxu0 0
        %1344 = vmatmul.mubr.bf16.gmra.mrb[0].mxu0 %v1306
        %v1345 = vpop.f32.mrb[0].mxu0
        %v1346 = vadd.f32 0.0, %v1345
        %v1347 = vpop.f32.mrb[0].mxu0
        %v1348 = vpop.f32.mrb[0].mxu0
        %v1349 = vpop.f32.mrb[0].mxu0
        %1350 = vdwg.mxu0
        %v1351 = vmul.f32 %v1294, 0.17677669
        %v1352 = vmul.f32 %v1346, 0.17677669
        %v1353 = vsel %vm1127, %v1351, -inf
        %1354 = vmax.xlane.f32.xlu0 %v1353
        %v1355 = vpop.xlane.xlu0 %1354
        %v1356 = vsel %vm1127, %v1352, -inf
        %1357 = vmax.xlane.f32.xlu0 %v1356
        %v1358 = vpop.xlane.xlu0 %1357
        %v1359 = vsub.f32 %v1351, %v1355
        %v1360 = vsub.f32 %v1352, %v1358
        %v1361 = vmul.f32 %v1359, 1.442695
        %v1362 = vpow.pop %v1361
        %v1363 = vmul.f32 %v1360, 1.442695
        %v1364 = vpow.pop %v1363
        %v1365 = vsel %vm1127, %v1362, 0.0
        %1366 = vadd.xlane.f32.xlu0 %v1365
        %v1367 = vpop.xlane.xlu0 %1366
        %v1368 = vsel %vm1127, %v1364, 0.0
        %1369 = vadd.xlane.f32.xlu0 %v1368
        %v1370 = vpop.xlane.xlu0 %1369
        %v1371 = vrcp.pop %v1367
        %v1372 = vrcp.pop %v1370
        %v1373 = vmul.f32 %v1362, %v1371
        %v1374 = vmul.f32 %v1364, %v1372
        %v1375 = vpack.c.bf16 %v1373, %v1373
        %v1376 = vpack.c.bf16 %v1374, %v1374
        %1378 = vrot.lane.b32.xlu0 %v1030, 96
        %v1379 = vpop.permute.xlu0 %1378
        %v1381 = vsel %vm1127, %v1375, 0
        %v1384 = vsel %vm1155, %v1379, 0
        %1386 = vmatprep.subr.bf16.mxu0 0
        %1387 = vmatpush1.bf16.msra.mxu0 %v1384
        %1388 = vmatprep.subr.bf16.mxu0 0
        %1389 = vmatpush1.bf16.msra.mxu0 0
        %1390 = vmatprep.subr.bf16.mxu0 0
        %1391 = vmatpush1.bf16.msra.mxu0 0
        %1392 = vmatprep.subr.bf16.mxu0 0
        %1393 = vmatpush1.bf16.msra.mxu0 0
        %1394 = vmatprep.subr.bf16.mxu0 0
        %1395 = vmatpush1.bf16.msra.mxu0 0
        %1396 = vmatprep.subr.bf16.mxu0 0
        %1397 = vmatpush1.bf16.msra.mxu0 0
        %1398 = vmatprep.subr.bf16.mxu0 0
        %1399 = vmatpush1.bf16.msra.mxu0 0
        %1400 = vmatprep.subr.bf16.mxu0 0
        %1401 = vmatpush1.bf16.msra.mxu0 0
        %1402 = vmatprep.subr.bf16.mxu0 0
        %1403 = vmatpush1.bf16.msra.mxu0 0
        %1404 = vmatprep.subr.bf16.mxu0 0
        %1405 = vmatpush1.bf16.msra.mxu0 0
        %1406 = vmatprep.subr.bf16.mxu0 0
        %1407 = vmatpush1.bf16.msra.mxu0 0
        %1408 = vmatprep.subr.bf16.mxu0 0
        %1409 = vmatpush1.bf16.msra.mxu0 0
        %1410 = vmatprep.subr.bf16.mxu0 0
        %1411 = vmatpush1.bf16.msra.mxu0 0
        %1412 = vmatprep.subr.bf16.mxu0 0
        %1413 = vmatpush1.bf16.msra.mxu0 0
        %1414 = vmatprep.subr.bf16.mxu0 0
        %1415 = vmatpush1.bf16.msra.mxu0 0
        %1416 = vmatprep.subr.bf16.mxu0 0
        %1417 = vmatpush1.bf16.msra.mxu0 0
        %1418 = vmatprep.mubr.bf16.mxu0 0
        %1419 = vmatmul.mubr.bf16.gmra.mrb[0].mxu0 %v1381
        %v1420 = vpop.f32.mrb[0].mxu0
        %v1421 = vadd.f32 0.0, %v1420
        %v1422 = vpop.f32.mrb[0].mxu0
        %v1423 = vpop.f32.mrb[0].mxu0
        %v1424 = vpop.f32.mrb[0].mxu0
        %1425 = vdwg.mxu0
        %1427 = vrot.lane.b32.xlu0 %v1031, 96
        %v1428 = vpop.permute.xlu0 %1427
        %v1430 = vsel %vm1127, %v1376, 0
        %v1433 = vsel %vm1155, %v1428, 0
        %1435 = vmatprep.subr.bf16.mxu0 0
        %1436 = vmatpush1.bf16.msra.mxu0 %v1433
        %1437 = vmatprep.subr.bf16.mxu0 0
        %1438 = vmatpush1.bf16.msra.mxu0 0
        %1439 = vmatprep.subr.bf16.mxu0 0
        %1440 = vmatpush1.bf16.msra.mxu0 0
        %1441 = vmatprep.subr.bf16.mxu0 0
        %1442 = vmatpush1.bf16.msra.mxu0 0
        %1443 = vmatprep.subr.bf16.mxu0 0
        %1444 = vmatpush1.bf16.msra.mxu0 0
        %1445 = vmatprep.subr.bf16.mxu0 0
        %1446 = vmatpush1.bf16.msra.mxu0 0
        %1447 = vmatprep.subr.bf16.mxu0 0
        %1448 = vmatpush1.bf16.msra.mxu0 0
        %1449 = vmatprep.subr.bf16.mxu0 0
        %1450 = vmatpush1.bf16.msra.mxu0 0
        %1451 = vmatprep.subr.bf16.mxu0 0
        %1452 = vmatpush1.bf16.msra.mxu0 0
        %1453 = vmatprep.subr.bf16.mxu0 0
        %1454 = vmatpush1.bf16.msra.mxu0 0
        %1455 = vmatprep.subr.bf16.mxu0 0
        %1456 = vmatpush1.bf16.msra.mxu0 0
        %1457 = vmatprep.subr.bf16.mxu0 0
        %1458 = vmatpush1.bf16.msra.mxu0 0
        %1459 = vmatprep.subr.bf16.mxu0 0
        %1460 = vmatpush1.bf16.msra.mxu0 0
        %1461 = vmatprep.subr.bf16.mxu0 0
        %1462 = vmatpush1.bf16.msra.mxu0 0
        %1463 = vmatprep.subr.bf16.mxu0 0
        %1464 = vmatpush1.bf16.msra.mxu0 0
        %1465 = vmatprep.subr.bf16.mxu0 0
        %1466 = vmatpush1.bf16.msra.mxu0 0
        %1467 = vmatprep.mubr.bf16.mxu0 0
        %1468 = vmatmul.mubr.bf16.gmra.mrb[0].mxu0 %v1430
        %v1469 = vpop.f32.mrb[0].mxu0
        %v1470 = vadd.f32 0.0, %v1469
        %v1471 = vpop.f32.mrb[0].mxu0
        %v1472 = vpop.f32.mrb[0].mxu0
        %v1473 = vpop.f32.mrb[0].mxu0
        %1474 = vdwg.mxu0
        %1477 = vrot.lane.b32.xlu0 %v1421, 32
        %v1478 = vpop.permute.xlu0 %1477
        %1479 = vrot.lane.b32.xlu0 %v1470, 32
        %v1480 = vpop.permute.xlu0 %1479
        %vm1483 = vcmask 523520
        %1484 = vst.msk [vmem:[#allocation3] sm:$0xff] %vm1483, %v1478
        %1485 = vst.msk [vmem:[#allocation3 + $0x8] sm:$0xff] %vm1483, %v1480
        %1486 = vrot.lane.b32.xlu0 %v1026, 64
        %v1487 = vpop.permute.xlu0 %1486
        %1488 = vrot.lane.b32.xlu0 %v1028, 64
        %v1489 = vpop.permute.xlu0 %1488
        %v1491 = vsel %vm1032, %v1487, 0
        %v1494 = vsel %vm1032, %v1489, 0
        %1496 = vmatprep.subr.bf16.mxu0 0
        %1497 = vmatpush1.bf16.xpose.msra.mxu0 %v1494
        %1498 = vmatprep.subr.bf16.mxu0 0
        %1499 = vmatpush1.bf16.xpose.msra.mxu0 0
        %1500 = vmatprep.subr.bf16.mxu0 0
        %1501 = vmatpush1.bf16.xpose.msra.mxu0 0
        %1502 = vmatprep.subr.bf16.mxu0 0
        %1503 = vmatpush1.bf16.xpose.msra.mxu0 0
        %1504 = vmatprep.subr.bf16.mxu0 0
        %1505 = vmatpush1.bf16.xpose.msra.mxu0 0
        %1506 = vmatprep.subr.bf16.mxu0 0
        %1507 = vmatpush1.bf16.xpose.msra.mxu0 0
        %1508 = vmatprep.subr.bf16.mxu0 0
        %1509 = vmatpush1.bf16.xpose.msra.mxu0 0
        %1510 = vmatprep.subr.bf16.mxu0 0
        %1511 = vmatpush1.bf16.xpose.msra.mxu0 0
        %1512 = vmatprep.subr.bf16.mxu0 0
        %1513 = vmatpush1.bf16.xpose.msra.mxu0 0
        %1514 = vmatprep.subr.bf16.mxu0 0
        %1515 = vmatpush1.bf16.xpose.msra.mxu0 0
        %1516 = vmatprep.subr.bf16.mxu0 0
        %1517 = vmatpush1.bf16.xpose.msra.mxu0 0
        %1518 = vmatprep.subr.bf16.mxu0 0
        %1519 = vmatpush1.bf16.xpose.msra.mxu0 0
        %1520 = vmatprep.subr.bf16.mxu0 0
        %1521 = vmatpush1.bf16.xpose.msra.mxu0 0
        %1522 = vmatprep.subr.bf16.mxu0 0
        %1523 = vmatpush1.bf16.xpose.msra.mxu0 0
        %1524 = vmatprep.subr.bf16.mxu0 0
        %1525 = vmatpush1.bf16.xpose.msra.mxu0 0
        %1526 = vmatprep.subr.bf16.mxu0 0
        %1527 = vmatpush1.bf16.xpose.msra.mxu0 0
        %1528 = vmatprep.mubr.bf16.mxu0 0
        %1529 = vmatmul.mubr.bf16.gmra.mrb[0].mxu0 %v1491
        %v1530 = vpop.f32.mrb[0].mxu0
        %v1531 = vadd.f32 0.0, %v1530
        %v1532 = vpop.f32.mrb[0].mxu0
        %v1533 = vpop.f32.mrb[0].mxu0
        %v1534 = vpop.f32.mrb[0].mxu0
        %1535 = vdwg.mxu0
        %1536 = vrot.lane.b32.xlu0 %v1027, 64
        %v1537 = vpop.permute.xlu0 %1536
        %1538 = vrot.lane.b32.xlu0 %v1029, 64
        %v1539 = vpop.permute.xlu0 %1538
        %v1541 = vsel %vm1032, %v1537, 0
        %v1544 = vsel %vm1032, %v1539, 0
        %1546 = vmatprep.subr.bf16.mxu0 0
        %1547 = vmatpush1.bf16.xpose.msra.mxu0 %v1544
        %1548 = vmatprep.subr.bf16.mxu0 0
        %1549 = vmatpush1.bf16.xpose.msra.mxu0 0
        %1550 = vmatprep.subr.bf16.mxu0 0
        %1551 = vmatpush1.bf16.xpose.msra.mxu0 0
        %1552 = vmatprep.subr.bf16.mxu0 0
        %1553 = vmatpush1.bf16.xpose.msra.mxu0 0
        %1554 = vmatprep.subr.bf16.mxu0 0
        %1555 = vmatpush1.bf16.xpose.msra.mxu0 0
        %1556 = vmatprep.subr.bf16.mxu0 0
        %1557 = vmatpush1.bf16.xpose.msra.mxu0 0
        %1558 = vmatprep.subr.bf16.mxu0 0
        %1559 = vmatpush1.bf16.xpose.msra.mxu0 0
        %1560 = vmatprep.subr.bf16.mxu0 0
        %1561 = vmatpush1.bf16.xpose.msra.mxu0 0
        %1562 = vmatprep.subr.bf16.mxu0 0
        %1563 = vmatpush1.bf16.xpose.msra.mxu0 0
        %1564 = vmatprep.subr.bf16.mxu0 0
        %1565 = vmatpush1.bf16.xpose.msra.mxu0 0
        %1566 = vmatprep.subr.bf16.mxu0 0
        %1567 = vmatpush1.bf16.xpose.msra.mxu0 0
        %1568 = vmatprep.subr.bf16.mxu0 0
        %1569 = vmatpush1.bf16.xpose.msra.mxu0 0
        %1570 = vmatprep.subr.bf16.mxu0 0
        %1571 = vmatpush1.bf16.xpose.msra.mxu0 0
        %1572 = vmatprep.subr.bf16.mxu0 0
        %1573 = vmatpush1.bf16.xpose.msra.mxu0 0
        %1574 = vmatprep.subr.bf16.mxu0 0
        %1575 = vmatpush1.bf16.xpose.msra.mxu0 0
        %1576 = vmatprep.subr.bf16.mxu0 0
        %1577 = vmatpush1.bf16.xpose.msra.mxu0 0
        %1578 = vmatprep.mubr.bf16.mxu0 0
        %1579 = vmatmul.mubr.bf16.gmra.mrb[0].mxu0 %v1541
        %v1580 = vpop.f32.mrb[0].mxu0
        %v1581 = vadd.f32 0.0, %v1580
        %v1582 = vpop.f32.mrb[0].mxu0
        %v1583 = vpop.f32.mrb[0].mxu0
        %v1584 = vpop.f32.mrb[0].mxu0
        %1585 = vdwg.mxu0
        %v1586 = vmul.f32 %v1531, 0.17677669
        %v1587 = vmul.f32 %v1581, 0.17677669
        %v1588 = vsel %vm1127, %v1586, -inf
        %1589 = vmax.xlane.f32.xlu0 %v1588
        %v1590 = vpop.xlane.xlu0 %1589
        %v1591 = vsel %vm1127, %v1587, -inf
        %1592 = vmax.xlane.f32.xlu0 %v1591
        %v1593 = vpop.xlane.xlu0 %1592
        %v1594 = vsub.f32 %v1586, %v1590
        %v1595 = vsub.f32 %v1587, %v1593
        %v1596 = vmul.f32 %v1594, 1.442695
        %v1597 = vpow.pop %v1596
        %v1598 = vmul.f32 %v1595, 1.442695
        %v1599 = vpow.pop %v1598
        %v1600 = vsel %vm1127, %v1597, 0.0
        %1601 = vadd.xlane.f32.xlu0 %v1600
        %v1602 = vpop.xlane.xlu0 %1601
        %v1603 = vsel %vm1127, %v1599, 0.0
        %1604 = vadd.xlane.f32.xlu0 %v1603
        %v1605 = vpop.xlane.xlu0 %1604
        %v1606 = vrcp.pop %v1602
        %v1607 = vrcp.pop %v1605
        %v1608 = vmul.f32 %v1597, %v1606
        %v1609 = vmul.f32 %v1599, %v1607
        %v1610 = vpack.c.bf16 %v1608, %v1608
        %v1611 = vpack.c.bf16 %v1609, %v1609
        %1612 = vrot.lane.b32.xlu0 %v1030, 64
        %v1613 = vpop.permute.xlu0 %1612
        %v1615 = vsel %vm1127, %v1610, 0
        %v1618 = vsel %vm1155, %v1613, 0
        %1620 = vmatprep.subr.bf16.mxu0 0
        %1621 = vmatpush1.bf16.msra.mxu0 %v1618
        %1622 = vmatprep.subr.bf16.mxu0 0
        %1623 = vmatpush1.bf16.msra.mxu0 0
        %1624 = vmatprep.subr.bf16.mxu0 0
        %1625 = vmatpush1.bf16.msra.mxu0 0
        %1626 = vmatprep.subr.bf16.mxu0 0
        %1627 = vmatpush1.bf16.msra.mxu0 0
        %1628 = vmatprep.subr.bf16.mxu0 0
        %1629 = vmatpush1.bf16.msra.mxu0 0
        %1630 = vmatprep.subr.bf16.mxu0 0
        %1631 = vmatpush1.bf16.msra.mxu0 0
        %1632 = vmatprep.subr.bf16.mxu0 0
        %1633 = vmatpush1.bf16.msra.mxu0 0
        %1634 = vmatprep.subr.bf16.mxu0 0
        %1635 = vmatpush1.bf16.msra.mxu0 0
        %1636 = vmatprep.subr.bf16.mxu0 0
        %1637 = vmatpush1.bf16.msra.mxu0 0
        %1638 = vmatprep.subr.bf16.mxu0 0
        %1639 = vmatpush1.bf16.msra.mxu0 0
        %1640 = vmatprep.subr.bf16.mxu0 0
        %1641 = vmatpush1.bf16.msra.mxu0 0
        %1642 = vmatprep.subr.bf16.mxu0 0
        %1643 = vmatpush1.bf16.msra.mxu0 0
        %1644 = vmatprep.subr.bf16.mxu0 0
        %1645 = vmatpush1.bf16.msra.mxu0 0
        %1646 = vmatprep.subr.bf16.mxu0 0
        %1647 = vmatpush1.bf16.msra.mxu0 0
        %1648 = vmatprep.subr.bf16.mxu0 0
        %1649 = vmatpush1.bf16.msra.mxu0 0
        %1650 = vmatprep.subr.bf16.mxu0 0
        %1651 = vmatpush1.bf16.msra.mxu0 0
        %1652 = vmatprep.mubr.bf16.mxu0 0
        %1653 = vmatmul.mubr.bf16.gmra.mrb[0].mxu0 %v1615
        %v1654 = vpop.f32.mrb[0].mxu0
        %v1655 = vadd.f32 0.0, %v1654
        %v1656 = vpop.f32.mrb[0].mxu0
        %v1657 = vpop.f32.mrb[0].mxu0
        %v1658 = vpop.f32.mrb[0].mxu0
        %1659 = vdwg.mxu0
        %1660 = vrot.lane.b32.xlu0 %v1031, 64
        %v1661 = vpop.permute.xlu0 %1660
        %v1663 = vsel %vm1127, %v1611, 0
        %v1666 = vsel %vm1155, %v1661, 0
        %1668 = vmatprep.subr.bf16.mxu0 0
        %1669 = vmatpush1.bf16.msra.mxu0 %v1666
        %1670 = vmatprep.subr.bf16.mxu0 0
        %1671 = vmatpush1.bf16.msra.mxu0 0
        %1672 = vmatprep.subr.bf16.mxu0 0
        %1673 = vmatpush1.bf16.msra.mxu0 0
        %1674 = vmatprep.subr.bf16.mxu0 0
        %1675 = vmatpush1.bf16.msra.mxu0 0
        %1676 = vmatprep.subr.bf16.mxu0 0
        %1677 = vmatpush1.bf16.msra.mxu0 0
        %1678 = vmatprep.subr.bf16.mxu0 0
        %1679 = vmatpush1.bf16.msra.mxu0 0
        %1680 = vmatprep.subr.bf16.mxu0 0
        %1681 = vmatpush1.bf16.msra.mxu0 0
        %1682 = vmatprep.subr.bf16.mxu0 0
        %1683 = vmatpush1.bf16.msra.mxu0 0
        %1684 = vmatprep.subr.bf16.mxu0 0
        %1685 = vmatpush1.bf16.msra.mxu0 0
        %1686 = vmatprep.subr.bf16.mxu0 0
        %1687 = vmatpush1.bf16.msra.mxu0 0
        %1688 = vmatprep.subr.bf16.mxu0 0
        %1689 = vmatpush1.bf16.msra.mxu0 0
        %1690 = vmatprep.subr.bf16.mxu0 0
        %1691 = vmatpush1.bf16.msra.mxu0 0
        %1692 = vmatprep.subr.bf16.mxu0 0
        %1693 = vmatpush1.bf16.msra.mxu0 0
        %1694 = vmatprep.subr.bf16.mxu0 0
        %1695 = vmatpush1.bf16.msra.mxu0 0
        %1696 = vmatprep.subr.bf16.mxu0 0
        %1697 = vmatpush1.bf16.msra.mxu0 0
        %1698 = vmatprep.subr.bf16.mxu0 0
        %1699 = vmatpush1.bf16.msra.mxu0 0
        %1700 = vmatprep.mubr.bf16.mxu0 0
        %1701 = vmatmul.mubr.bf16.gmra.mrb[0].mxu0 %v1663
        %v1702 = vpop.f32.mrb[0].mxu0
        %v1703 = vadd.f32 0.0, %v1702
        %v1704 = vpop.f32.mrb[0].mxu0
        %v1705 = vpop.f32.mrb[0].mxu0
        %v1706 = vpop.f32.mrb[0].mxu0
        %1707 = vdwg.mxu0
        %1710 = vrot.lane.b32.xlu0 %v1655, 64
        %v1711 = vpop.permute.xlu0 %1710
        %1712 = vrot.lane.b32.xlu0 %v1703, 64
        %v1713 = vpop.permute.xlu0 %1712
        %vm1716 = vcmask 785920
        %1717 = vst.msk [vmem:[#allocation3] sm:$0xff] %vm1716, %v1711
        %1718 = vst.msk [vmem:[#allocation3 + $0x8] sm:$0xff] %vm1716, %v1713
        %1719 = vrot.lane.b32.xlu0 %v1026, 32
        %v1720 = vpop.permute.xlu0 %1719
        %1721 = vrot.lane.b32.xlu0 %v1028, 32
        %v1722 = vpop.permute.xlu0 %1721
        %v1724 = vsel %vm1032, %v1720, 0
        %v1727 = vsel %vm1032, %v1722, 0
        %1729 = vmatprep.subr.bf16.mxu0 0
        %1730 = vmatpush1.bf16.xpose.msra.mxu0 %v1727
        %1731 = vmatprep.subr.bf16.mxu0 0
        %1732 = vmatpush1.bf16.xpose.msra.mxu0 0
        %1733 = vmatprep.subr.bf16.mxu0 0
        %1734 = vmatpush1.bf16.xpose.msra.mxu0 0
        %1735 = vmatprep.subr.bf16.mxu0 0
        %1736 = vmatpush1.bf16.xpose.msra.mxu0 0
        %1737 = vmatprep.subr.bf16.mxu0 0
        %1738 = vmatpush1.bf16.xpose.msra.mxu0 0
        %1739 = vmatprep.subr.bf16.mxu0 0
        %1740 = vmatpush1.bf16.xpose.msra.mxu0 0
        %1741 = vmatprep.subr.bf16.mxu0 0
        %1742 = vmatpush1.bf16.xpose.msra.mxu0 0
        %1743 = vmatprep.subr.bf16.mxu0 0
        %1744 = vmatpush1.bf16.xpose.msra.mxu0 0
        %1745 = vmatprep.subr.bf16.mxu0 0
        %1746 = vmatpush1.bf16.xpose.msra.mxu0 0
        %1747 = vmatprep.subr.bf16.mxu0 0
        %1748 = vmatpush1.bf16.xpose.msra.mxu0 0
        %1749 = vmatprep.subr.bf16.mxu0 0
        %1750 = vmatpush1.bf16.xpose.msra.mxu0 0
        %1751 = vmatprep.subr.bf16.mxu0 0
        %1752 = vmatpush1.bf16.xpose.msra.mxu0 0
        %1753 = vmatprep.subr.bf16.mxu0 0
        %1754 = vmatpush1.bf16.xpose.msra.mxu0 0
        %1755 = vmatprep.subr.bf16.mxu0 0
        %1756 = vmatpush1.bf16.xpose.msra.mxu0 0
        %1757 = vmatprep.subr.bf16.mxu0 0
        %1758 = vmatpush1.bf16.xpose.msra.mxu0 0
        %1759 = vmatprep.subr.bf16.mxu0 0
        %1760 = vmatpush1.bf16.xpose.msra.mxu0 0
        %1761 = vmatprep.mubr.bf16.mxu0 0
        %1762 = vmatmul.mubr.bf16.gmra.mrb[0].mxu0 %v1724
        %v1763 = vpop.f32.mrb[0].mxu0
        %v1764 = vadd.f32 0.0, %v1763
        %v1765 = vpop.f32.mrb[0].mxu0
        %v1766 = vpop.f32.mrb[0].mxu0
        %v1767 = vpop.f32.mrb[0].mxu0
        %1768 = vdwg.mxu0
        %1769 = vrot.lane.b32.xlu0 %v1027, 32
        %v1770 = vpop.permute.xlu0 %1769
        %1771 = vrot.lane.b32.xlu0 %v1029, 32
        %v1772 = vpop.permute.xlu0 %1771
        %v1774 = vsel %vm1032, %v1770, 0
        %v1777 = vsel %vm1032, %v1772, 0
        %1779 = vmatprep.subr.bf16.mxu0 0
        %1780 = vmatpush1.bf16.xpose.msra.mxu0 %v1777
        %1781 = vmatprep.subr.bf16.mxu0 0
        %1782 = vmatpush1.bf16.xpose.msra.mxu0 0
        %1783 = vmatprep.subr.bf16.mxu0 0
        %1784 = vmatpush1.bf16.xpose.msra.mxu0 0
        %1785 = vmatprep.subr.bf16.mxu0 0
        %1786 = vmatpush1.bf16.xpose.msra.mxu0 0
        %1787 = vmatprep.subr.bf16.mxu0 0
        %1788 = vmatpush1.bf16.xpose.msra.mxu0 0
        %1789 = vmatprep.subr.bf16.mxu0 0
        %1790 = vmatpush1.bf16.xpose.msra.mxu0 0
        %1791 = vmatprep.subr.bf16.mxu0 0
        %1792 = vmatpush1.bf16.xpose.msra.mxu0 0
        %1793 = vmatprep.subr.bf16.mxu0 0
        %1794 = vmatpush1.bf16.xpose.msra.mxu0 0
        %1795 = vmatprep.subr.bf16.mxu0 0
        %1796 = vmatpush1.bf16.xpose.msra.mxu0 0
        %1797 = vmatprep.subr.bf16.mxu0 0
        %1798 = vmatpush1.bf16.xpose.msra.mxu0 0
        %1799 = vmatprep.subr.bf16.mxu0 0
        %1800 = vmatpush1.bf16.xpose.msra.mxu0 0
        %1801 = vmatprep.subr.bf16.mxu0 0
        %1802 = vmatpush1.bf16.xpose.msra.mxu0 0
        %1803 = vmatprep.subr.bf16.mxu0 0
        %1804 = vmatpush1.bf16.xpose.msra.mxu0 0
        %1805 = vmatprep.subr.bf16.mxu0 0
        %1806 = vmatpush1.bf16.xpose.msra.mxu0 0
        %1807 = vmatprep.subr.bf16.mxu0 0
        %1808 = vmatpush1.bf16.xpose.msra.mxu0 0
        %1809 = vmatprep.subr.bf16.mxu0 0
        %1810 = vmatpush1.bf16.xpose.msra.mxu0 0
        %1811 = vmatprep.mubr.bf16.mxu0 0
        %1812 = vmatmul.mubr.bf16.gmra.mrb[0].mxu0 %v1774
        %v1813 = vpop.f32.mrb[0].mxu0
        %v1814 = vadd.f32 0.0, %v1813
        %v1815 = vpop.f32.mrb[0].mxu0
        %v1816 = vpop.f32.mrb[0].mxu0
        %v1817 = vpop.f32.mrb[0].mxu0
        %1818 = vdwg.mxu0
        %v1819 = vmul.f32 %v1764, 0.17677669
        %v1820 = vmul.f32 %v1814, 0.17677669
        %v1821 = vsel %vm1127, %v1819, -inf
        %1822 = vmax.xlane.f32.xlu0 %v1821
        %v1823 = vpop.xlane.xlu0 %1822
        %v1824 = vsel %vm1127, %v1820, -inf
        %1825 = vmax.xlane.f32.xlu0 %v1824
        %v1826 = vpop.xlane.xlu0 %1825
        %v1827 = vsub.f32 %v1819, %v1823
        %v1828 = vsub.f32 %v1820, %v1826
        %v1829 = vmul.f32 %v1827, 1.442695
        %v1830 = vpow.pop %v1829
        %v1831 = vmul.f32 %v1828, 1.442695
        %v1832 = vpow.pop %v1831
        %v1833 = vsel %vm1127, %v1830, 0.0
        %1834 = vadd.xlane.f32.xlu0 %v1833
        %v1835 = vpop.xlane.xlu0 %1834
        %v1836 = vsel %vm1127, %v1832, 0.0
        %1837 = vadd.xlane.f32.xlu0 %v1836
        %v1838 = vpop.xlane.xlu0 %1837
        %v1839 = vrcp.pop %v1835
        %v1840 = vrcp.pop %v1838
        %v1841 = vmul.f32 %v1830, %v1839
        %v1842 = vmul.f32 %v1832, %v1840
        %v1843 = vpack.c.bf16 %v1841, %v1841
        %v1844 = vpack.c.bf16 %v1842, %v1842
        %1845 = vrot.lane.b32.xlu0 %v1030, 32
        %v1846 = vpop.permute.xlu0 %1845
        %v1848 = vsel %vm1127, %v1843, 0
        %v1851 = vsel %vm1155, %v1846, 0
        %1853 = vmatprep.subr.bf16.mxu0 0
        %1854 = vmatpush1.bf16.msra.mxu0 %v1851
        %1855 = vmatprep.subr.bf16.mxu0 0
        %1856 = vmatpush1.bf16.msra.mxu0 0
        %1857 = vmatprep.subr.bf16.mxu0 0
        %1858 = vmatpush1.bf16.msra.mxu0 0
        %1859 = vmatprep.subr.bf16.mxu0 0
        %1860 = vmatpush1.bf16.msra.mxu0 0
        %1861 = vmatprep.subr.bf16.mxu0 0
        %1862 = vmatpush1.bf16.msra.mxu0 0
        %1863 = vmatprep.subr.bf16.mxu0 0
        %1864 = vmatpush1.bf16.msra.mxu0 0
        %1865 = vmatprep.subr.bf16.mxu0 0
        %1866 = vmatpush1.bf16.msra.mxu0 0
        %1867 = vmatprep.subr.bf16.mxu0 0
        %1868 = vmatpush1.bf16.msra.mxu0 0
        %1869 = vmatprep.subr.bf16.mxu0 0
        %1870 = vmatpush1.bf16.msra.mxu0 0
        %1871 = vmatprep.subr.bf16.mxu0 0
        %1872 = vmatpush1.bf16.msra.mxu0 0
        %1873 = vmatprep.subr.bf16.mxu0 0
        %1874 = vmatpush1.bf16.msra.mxu0 0
        %1875 = vmatprep.subr.bf16.mxu0 0
        %1876 = vmatpush1.bf16.msra.mxu0 0
        %1877 = vmatprep.subr.bf16.mxu0 0
        %1878 = vmatpush1.bf16.msra.mxu0 0
        %1879 = vmatprep.subr.bf16.mxu0 0
        %1880 = vmatpush1.bf16.msra.mxu0 0
        %1881 = vmatprep.subr.bf16.mxu0 0
        %1882 = vmatpush1.bf16.msra.mxu0 0
        %1883 = vmatprep.subr.bf16.mxu0 0
        %1884 = vmatpush1.bf16.msra.mxu0 0
        %1885 = vmatprep.mubr.bf16.mxu0 0
        %1886 = vmatmul.mubr.bf16.gmra.mrb[0].mxu0 %v1848
        %v1887 = vpop.f32.mrb[0].mxu0
        %v1888 = vadd.f32 0.0, %v1887
        %v1889 = vpop.f32.mrb[0].mxu0
        %v1890 = vpop.f32.mrb[0].mxu0
        %v1891 = vpop.f32.mrb[0].mxu0
        %1892 = vdwg.mxu0
        %1893 = vrot.lane.b32.xlu0 %v1031, 32
        %v1894 = vpop.permute.xlu0 %1893
        %v1896 = vsel %vm1127, %v1844, 0
        %v1899 = vsel %vm1155, %v1894, 0
        %1901 = vmatprep.subr.bf16.mxu0 0
        %1902 = vmatpush1.bf16.msra.mxu0 %v1899
        %1903 = vmatprep.subr.bf16.mxu0 0
        %1904 = vmatpush1.bf16.msra.mxu0 0
        %1905 = vmatprep.subr.bf16.mxu0 0
        %1906 = vmatpush1.bf16.msra.mxu0 0
        %1907 = vmatprep.subr.bf16.mxu0 0
        %1908 = vmatpush1.bf16.msra.mxu0 0
        %1909 = vmatprep.subr.bf16.mxu0 0
        %1910 = vmatpush1.bf16.msra.mxu0 0
        %1911 = vmatprep.subr.bf16.mxu0 0
        %1912 = vmatpush1.bf16.msra.mxu0 0
        %1913 = vmatprep.subr.bf16.mxu0 0
        %1914 = vmatpush1.bf16.msra.mxu0 0
        %1915 = vmatprep.subr.bf16.mxu0 0
        %1916 = vmatpush1.bf16.msra.mxu0 0
        %1917 = vmatprep.subr.bf16.mxu0 0
        %1918 = vmatpush1.bf16.msra.mxu0 0
        %1919 = vmatprep.subr.bf16.mxu0 0
        %1920 = vmatpush1.bf16.msra.mxu0 0
        %1921 = vmatprep.subr.bf16.mxu0 0
        %1922 = vmatpush1.bf16.msra.mxu0 0
        %1923 = vmatprep.subr.bf16.mxu0 0
        %1924 = vmatpush1.bf16.msra.mxu0 0
        %1925 = vmatprep.subr.bf16.mxu0 0
        %1926 = vmatpush1.bf16.msra.mxu0 0
        %1927 = vmatprep.subr.bf16.mxu0 0
        %1928 = vmatpush1.bf16.msra.mxu0 0
        %1929 = vmatprep.subr.bf16.mxu0 0
        %1930 = vmatpush1.bf16.msra.mxu0 0
        %1931 = vmatprep.subr.bf16.mxu0 0
        %1932 = vmatpush1.bf16.msra.mxu0 0
        %1933 = vmatprep.mubr.bf16.mxu0 0
        %1934 = vmatmul.mubr.bf16.gmra.mrb[0].mxu0 %v1896
        %v1935 = vpop.f32.mrb[0].mxu0
        %v1936 = vadd.f32 0.0, %v1935
        %v1937 = vpop.f32.mrb[0].mxu0
        %v1938 = vpop.f32.mrb[0].mxu0
        %v1939 = vpop.f32.mrb[0].mxu0
        %1940 = vdwg.mxu0
        %1943 = vrot.lane.b32.xlu0 %v1888, 96
        %v1944 = vpop.permute.xlu0 %1943
        %1945 = vrot.lane.b32.xlu0 %v1936, 96
        %v1946 = vpop.permute.xlu0 %1945
        %vm1949 = vcmask 1048320
        %1950 = vst.msk [vmem:[#allocation3] sm:$0xff] %vm1949, %v1944
        %1951 = vst.msk [vmem:[#allocation3 + $0x8] sm:$0xff] %vm1949, %v1946
        %v1952 = vld [vmem:[#allocation3] sm:$0xff]
        %v1953 = vld [vmem:[#allocation3 + $0x8] sm:$0xff]
        %v1954 = vpack.c.bf16 %v1953, %v1952
        %v1955 = vld [vmem:[%s653] sm:$0xf]
        %v1956 = vld [vmem:[%s653 + $0x4] sm:$0xf]
        %v1957 = vld [vmem:[%s653 + $0x8] sm:$0xf]
        %v1958 = vld [vmem:[%s653 + $0xc] sm:$0xf]
        %v1959 = vld [vmem:[%s653 + $0x10] sm:$0xf]
        %v1960 = vld [vmem:[%s653 + $0x14] sm:$0xf]
        %v1961 = vld [vmem:[%s653 + $0x18] sm:$0xf]
        %v1962 = vld [vmem:[%s653 + $0x1c] sm:$0xf]
        %v1963 = vld [vmem:[%s653 + $0x20] sm:$0xf]
        %v1964 = vld [vmem:[%s653 + $0x24] sm:$0xf]
        %v1965 = vld [vmem:[%s653 + $0x28] sm:$0xf]
        %v1966 = vld [vmem:[%s653 + $0x2c] sm:$0xf]
        %v1967 = vld [vmem:[%s653 + $0x30] sm:$0xf]
        %v1968 = vld [vmem:[%s653 + $0x34] sm:$0xf]
        %v1969 = vld [vmem:[%s653 + $0x38] sm:$0xf]
        %v1970 = vld [vmem:[%s653 + $0x3c] sm:$0xf]
        %v1971 = vld [vmem:[%s656] sm:$0x1]
        %v1973 = vlaneseq
        %v1974 = vshrl.u32 %v1973, 7
        %v1975 = vsub.s32 0, %v1974
        %v1976 = vrot.slane %v1971, %v1975
        %v1994 = vunpack.c.l.b16 %v1955
        %v1995 = vunpack.c.l.b16 %v1956
        %v1996 = vunpack.c.l.b16 %v1957
        %v1997 = vunpack.c.l.b16 %v1958
        %v1998 = vunpack.c.l.b16 %v1959
        %v1999 = vunpack.c.l.b16 %v1960
        %v2000 = vunpack.c.l.b16 %v1961
        %v2001 = vunpack.c.l.b16 %v1962
        %v2002 = vunpack.c.l.b16 %v1963
        %v2003 = vunpack.c.l.b16 %v1964
        %v2004 = vunpack.c.l.b16 %v1965
        %v2005 = vunpack.c.l.b16 %v1966
        %v2006 = vunpack.c.l.b16 %v1967
        %v2007 = vunpack.c.l.b16 %v1968
        %v2008 = vunpack.c.l.b16 %v1969
        %v2009 = vunpack.c.l.b16 %v1970
        %v2010 = vpack.c.b16 %v1995, %v1994
        %v2011 = vpack.c.b16 %v1997, %v1996
        %v2012 = vpack.c.b16 %v1999, %v1998
        %v2013 = vpack.c.b16 %v2001, %v2000
        %v2014 = vpack.c.b16 %v2003, %v2002
        %v2015 = vpack.c.b16 %v2005, %v2004
        %v2016 = vpack.c.b16 %v2007, %v2006
        %v2017 = vpack.c.b16 %v2009, %v2008
        %2026 = vmatprep.subr.bf16.mxu0 0
        %2027 = vmatpush1.bf16.msra.mxu0 %v2010
        %2028 = vmatprep.subr.bf16.mxu0 0
        %2029 = vmatpush1.bf16.msra.mxu0 %v2011
        %2030 = vmatprep.subr.bf16.mxu0 0
        %2031 = vmatpush1.bf16.msra.mxu0 %v2012
        %2032 = vmatprep.subr.bf16.mxu0 0
        %2033 = vmatpush1.bf16.msra.mxu0 %v2013
        %2034 = vmatprep.subr.bf16.mxu0 0
        %2035 = vmatpush1.bf16.msra.mxu0 %v2014
        %2036 = vmatprep.subr.bf16.mxu0 0
        %2037 = vmatpush1.bf16.msra.mxu0 %v2015
        %2038 = vmatprep.subr.bf16.mxu0 0
        %2039 = vmatpush1.bf16.msra.mxu0 %v2016
        %2040 = vmatprep.subr.bf16.mxu0 0
        %2041 = vmatpush1.bf16.msra.mxu0 %v2017
        %2042 = vmatprep.subr.bf16.mxu0 0
        %2043 = vmatpush1.bf16.msra.mxu0 0
        %2044 = vmatprep.subr.bf16.mxu0 0
        %2045 = vmatpush1.bf16.msra.mxu0 0
        %2046 = vmatprep.subr.bf16.mxu0 0
        %2047 = vmatpush1.bf16.msra.mxu0 0
        %2048 = vmatprep.subr.bf16.mxu0 0
        %2049 = vmatpush1.bf16.msra.mxu0 0
        %2050 = vmatprep.subr.bf16.mxu0 0
        %2051 = vmatpush1.bf16.msra.mxu0 0
        %2052 = vmatprep.subr.bf16.mxu0 0
        %2053 = vmatpush1.bf16.msra.mxu0 0
        %2054 = vmatprep.subr.bf16.mxu0 0
        %2055 = vmatpush1.bf16.msra.mxu0 0
        %2056 = vmatprep.subr.bf16.mxu0 0
        %2057 = vmatpush1.bf16.msra.mxu0 0
        %2058 = vmatprep.mubr.bf16.mxu0 0
        %2059 = vmatmul.mubr.bf16.gmra.mrb[0].mxu0 %v1954
        %v2060 = vpop.f32.mrb[0].mxu0
        %v2061 = vadd.f32 %v1976, %v2060
        %v2062 = vpop.f32.mrb[0].mxu0
        %v2063 = vpop.f32.mrb[0].mxu0
        %v2064 = vadd.f32 %v1976, %v2063
        %v2065 = vpop.f32.mrb[0].mxu0
        %2066 = vdwg.mxu0
        %v2067 = vadd.f32 %v762, %v2061
        %v2068 = vadd.f32 %v763, %v2064
        %v2069 = vld [vmem:[%s659] sm:$0x1]
        %v2070 = vld [vmem:[%s662] sm:$0x1]
        %2071 = vadd.xlane.f32.xlu0 %v2067
        %v2072 = vpop.xlane.xlu0 %2071
        %2073 = vadd.xlane.f32.xlu0 %v2068
        %v2074 = vpop.xlane.xlu0 %2073
        %v2075 = vrcp.pop 128.0
        %v2076 = vmul.f32 %v2072, %v2075
        %v2077 = vmul.f32 %v2074, %v2075
        %v2078 = vsub.f32 %v2067, %v2076
        %v2079 = vsub.f32 %v2068, %v2077
        %v2080 = vmul.f32 %v2078, %v2078
        %v2081 = vmul.f32 %v2079, %v2079
        %2082 = vadd.xlane.f32.xlu0 %v2080
        %v2083 = vpop.xlane.xlu0 %2082
        %2084 = vadd.xlane.f32.xlu0 %v2081
        %v2085 = vpop.xlane.xlu0 %2084
        %v2086 = vmul.f32 %v2083, %v2075
        %v2087 = vmul.f32 %v2085, %v2075
        %v2088 = vadd.f32 %v2086, 1e-05
        %v2089 = vadd.f32 %v2087, 1e-05
        %v2090 = vrsqrt.pop %v2088
        %v2091 = vrsqrt.pop %v2089
        %v2092 = vmul.f32 %v2078, %v2090
        %v2093 = vmul.f32 %v2079, %v2091
        %v2095 = vlaneseq
        %v2096 = vshrl.u32 %v2095, 7
        %v2097 = vsub.s32 0, %v2096
        %v2098 = vrot.slane %v2069, %v2097
        %v2100 = vmul.f32 %v2092, %v2098
        %v2101 = vmul.f32 %v2093, %v2098
        %v2103 = vlaneseq
        %v2104 = vshrl.u32 %v2103, 7
        %v2105 = vsub.s32 0, %v2104
        %v2106 = vrot.slane %v2070, %v2105
        %v2108 = vadd.f32 %v2100, %v2106
        %v2109 = vadd.f32 %v2101, %v2106
        %v2110 = vpack.c.bf16 %v2109, %v2108
        %v2111 = vld [vmem:[%s667] sm:$0xff]
        %v2112 = vld [vmem:[%s667 + $0x8] sm:$0xff]
        %v2113 = vld [vmem:[%s667 + $0x10] sm:$0xff]
        %v2114 = vld [vmem:[%s667 + $0x18] sm:$0xff]
        %v2115 = vld [vmem:[%s667 + $0x20] sm:$0xff]
        %v2116 = vld [vmem:[%s667 + $0x28] sm:$0xff]
        %v2117 = vld [vmem:[%s667 + $0x30] sm:$0xff]
        %v2118 = vld [vmem:[%s667 + $0x38] sm:$0xff]
        %v2119 = vld [vmem:[%s667 + $0x40] sm:$0xff]
        %v2120 = vld [vmem:[%s667 + $0x48] sm:$0xff]
        %v2121 = vld [vmem:[%s667 + $0x50] sm:$0xff]
        %v2122 = vld [vmem:[%s667 + $0x58] sm:$0xff]
        %v2123 = vld [vmem:[%s667 + $0x60] sm:$0xff]
        %v2124 = vld [vmem:[%s667 + $0x68] sm:$0xff]
        %v2125 = vld [vmem:[%s667 + $0x70] sm:$0xff]
        %v2126 = vld [vmem:[%s667 + $0x78] sm:$0xff]
        %v2127 = vld [vmem:[%s671] sm:$0x3]
        %v2129 = vlaneseq
        %v2130 = vshrl.u32 %v2129, 7
        %v2131 = vsub.s32 0, %v2130
        %v2132 = vrot.slane %v2127, %v2131
        %v2133 = vlaneseq
        %v2134 = vshrl.u32 %v2133, 7
        %v2135 = vsub.s32 1, %v2134
        %v2136 = vrot.slane %v2127, %v2135
        %v2155 = vunpack.c.l.b16 %v2111
        %v2156 = vunpack.c.h.b16 %v2111
        %v2157 = vunpack.c.l.b16 %v2112
        %v2158 = vunpack.c.h.b16 %v2112
        %v2159 = vunpack.c.l.b16 %v2113
        %v2160 = vunpack.c.h.b16 %v2113
        %v2161 = vunpack.c.l.b16 %v2114
        %v2162 = vunpack.c.h.b16 %v2114
        %v2163 = vunpack.c.l.b16 %v2115
        %v2164 = vunpack.c.h.b16 %v2115
        %v2165 = vunpack.c.l.b16 %v2116
        %v2166 = vunpack.c.h.b16 %v2116
        %v2167 = vunpack.c.l.b16 %v2117
        %v2168 = vunpack.c.h.b16 %v2117
        %v2169 = vunpack.c.l.b16 %v2118
        %v2170 = vunpack.c.h.b16 %v2118
        %v2171 = vunpack.c.l.b16 %v2119
        %v2172 = vunpack.c.h.b16 %v2119
        %v2173 = vunpack.c.l.b16 %v2120
        %v2174 = vunpack.c.h.b16 %v2120
        %v2175 = vunpack.c.l.b16 %v2121
        %v2176 = vunpack.c.h.b16 %v2121
        %v2177 = vunpack.c.l.b16 %v2122
        %v2178 = vunpack.c.h.b16 %v2122
        %v2179 = vunpack.c.l.b16 %v2123
        %v2180 = vunpack.c.h.b16 %v2123
        %v2181 = vunpack.c.l.b16 %v2124
        %v2182 = vunpack.c.h.b16 %v2124
        %v2183 = vunpack.c.l.b16 %v2125
        %v2184 = vunpack.c.h.b16 %v2125
        %v2185 = vunpack.c.l.b16 %v2126
        %v2186 = vunpack.c.h.b16 %v2126
        %v2187 = vpack.c.b16 %v2157, %v2155
        %v2188 = vpack.c.b16 %v2158, %v2156
        %v2189 = vpack.c.b16 %v2161, %v2159
        %v2190 = vpack.c.b16 %v2162, %v2160
        %v2191 = vpack.c.b16 %v2165, %v2163
        %v2192 = vpack.c.b16 %v2166, %v2164
        %v2193 = vpack.c.b16 %v2169, %v2167
        %v2194 = vpack.c.b16 %v2170, %v2168
        %v2195 = vpack.c.b16 %v2173, %v2171
        %v2196 = vpack.c.b16 %v2174, %v2172
        %v2197 = vpack.c.b16 %v2177, %v2175
        %v2198 = vpack.c.b16 %v2178, %v2176
        %v2199 = vpack.c.b16 %v2181, %v2179
        %v2200 = vpack.c.b16 %v2182, %v2180
        %v2201 = vpack.c.b16 %v2185, %v2183
        %v2202 = vpack.c.b16 %v2186, %v2184
        %2219 = vmatprep.subr.bf16.mxu0 %v2188
        %2220 = vmatpush1.bf16.msra.mxu0 %v2187
        %2221 = vmatprep.subr.bf16.mxu0 %v2190
        %2222 = vmatpush1.bf16.msra.mxu0 %v2189
        %2223 = vmatprep.subr.bf16.mxu0 %v2192
        %2224 = vmatpush1.bf16.msra.mxu0 %v2191
        %2225 = vmatprep.subr.bf16.mxu0 %v2194
        %2226 = vmatpush1.bf16.msra.mxu0 %v2193
        %2227 = vmatprep.subr.bf16.mxu0 %v2196
        %2228 = vmatpush1.bf16.msra.mxu0 %v2195
        %2229 = vmatprep.subr.bf16.mxu0 %v2198
        %2230 = vmatpush1.bf16.msra.mxu0 %v2197
        %2231 = vmatprep.subr.bf16.mxu0 %v2200
        %2232 = vmatpush1.bf16.msra.mxu0 %v2199
        %2233 = vmatprep.subr.bf16.mxu0 %v2202
        %2234 = vmatpush1.bf16.msra.mxu0 %v2201
        %2235 = vmatprep.subr.bf16.mxu0 0
        %2236 = vmatpush1.bf16.msra.mxu0 0
        %2237 = vmatprep.subr.bf16.mxu0 0
        %2238 = vmatpush1.bf16.msra.mxu0 0
        %2239 = vmatprep.subr.bf16.mxu0 0
        %2240 = vmatpush1.bf16.msra.mxu0 0
        %2241 = vmatprep.subr.bf16.mxu0 0
        %2242 = vmatpush1.bf16.msra.mxu0 0
        %2243 = vmatprep.subr.bf16.mxu0 0
        %2244 = vmatpush1.bf16.msra.mxu0 0
        %2245 = vmatprep.subr.bf16.mxu0 0
        %2246 = vmatpush1.bf16.msra.mxu0 0
        %2247 = vmatprep.subr.bf16.mxu0 0
        %2248 = vmatpush1.bf16.msra.mxu0 0
        %2249 = vmatprep.subr.bf16.mxu0 0
        %2250 = vmatpush1.bf16.msra.mxu0 0
        %2251 = vmatprep.mubr.bf16.mxu0 0
        %2252 = vmatmul.mubr.bf16.gmra.mrb[0].mxu0 %v2110
        %v2253 = vpop.f32.mrb[0].mxu0
        %v2254 = vadd.f32 %v2132, %v2253
        %v2255 = vpop.f32.mrb[0].mxu0
        %v2256 = vadd.f32 %v2136, %v2255
        %v2257 = vpop.f32.mrb[0].mxu0
        %v2258 = vadd.f32 %v2132, %v2257
        %v2259 = vpop.f32.mrb[0].mxu0
        %v2260 = vadd.f32 %v2136, %v2259
        %2261 = vdwg.mxu0
        %v2262 = vmul.f32 %v2254, %v2254
        %v2263 = vmul.f32 %v2256, %v2256
        %v2264 = vmul.f32 %v2258, %v2258
        %v2265 = vmul.f32 %v2260, %v2260
        %v2266 = vmul.f32 %v2254, %v2262
        %v2267 = vmul.f32 %v2256, %v2263
        %v2268 = vmul.f32 %v2258, %v2264
        %v2269 = vmul.f32 %v2260, %v2265
        %v2270 = vmul.f32 %v2266, 0.044715
        %v2271 = vmul.f32 %v2267, 0.044715
        %v2272 = vmul.f32 %v2268, 0.044715
        %v2273 = vmul.f32 %v2269, 0.044715
        %v2274 = vadd.f32 %v2254, %v2270
        %v2275 = vadd.f32 %v2256, %v2271
        %v2276 = vadd.f32 %v2258, %v2272
        %v2277 = vadd.f32 %v2260, %v2273
        %v2278 = vmul.f32 %v2274, 0.7978846
        %v2279 = vmul.f32 %v2275, 0.7978846
        %v2280 = vmul.f32 %v2276, 0.7978846
        %v2281 = vmul.f32 %v2277, 0.7978846
        %v2282 = vtanh.pop %v2278
        %v2283 = vtanh.pop %v2279
        %v2284 = vtanh.pop %v2280
        %v2285 = vtanh.pop %v2281
        %v2286 = vadd.f32 %v2282, 1.0
        %v2287 = vadd.f32 %v2283, 1.0
        %v2288 = vadd.f32 %v2284, 1.0
        %v2289 = vadd.f32 %v2285, 1.0
        %v2290 = vmul.f32 %v2286, 0.5
        %v2291 = vmul.f32 %v2287, 0.5
        %v2292 = vmul.f32 %v2288, 0.5
        %v2293 = vmul.f32 %v2289, 0.5
        %v2294 = vmul.f32 %v2254, %v2290
        %v2295 = vmul.f32 %v2256, %v2291
        %v2296 = vmul.f32 %v2258, %v2292
        %v2297 = vmul.f32 %v2260, %v2293
        %v2298 = vpack.c.bf16 %v2296, %v2294
        %v2299 = vpack.c.bf16 %v2297, %v2295
        %v2300 = vld [vmem:[%s676] sm:$0xf]
        %v2301 = vld [vmem:[%s676 + $0x4] sm:$0xf]
        %v2302 = vld [vmem:[%s676 + $0x8] sm:$0xf]
        %v2303 = vld [vmem:[%s676 + $0xc] sm:$0xf]
        %v2304 = vld [vmem:[%s676 + $0x10] sm:$0xf]
        %v2305 = vld [vmem:[%s676 + $0x14] sm:$0xf]
        %v2306 = vld [vmem:[%s676 + $0x18] sm:$0xf]
        %v2307 = vld [vmem:[%s676 + $0x1c] sm:$0xf]
        %v2308 = vld [vmem:[%s676 + $0x20] sm:$0xf]
        %v2309 = vld [vmem:[%s676 + $0x24] sm:$0xf]
        %v2310 = vld [vmem:[%s676 + $0x28] sm:$0xf]
        %v2311 = vld [vmem:[%s676 + $0x2c] sm:$0xf]
        %v2312 = vld [vmem:[%s676 + $0x30] sm:$0xf]
        %v2313 = vld [vmem:[%s676 + $0x34] sm:$0xf]
        %v2314 = vld [vmem:[%s676 + $0x38] sm:$0xf]
        %v2315 = vld [vmem:[%s676 + $0x3c] sm:$0xf]
        %v2316 = vld [vmem:[%s676 + $0x40] sm:$0xf]
        %v2317 = vld [vmem:[%s676 + $0x44] sm:$0xf]
        %v2318 = vld [vmem:[%s676 + $0x48] sm:$0xf]
        %v2319 = vld [vmem:[%s676 + $0x4c] sm:$0xf]
        %v2320 = vld [vmem:[%s676 + $0x50] sm:$0xf]
        %v2321 = vld [vmem:[%s676 + $0x54] sm:$0xf]
        %v2322 = vld [vmem:[%s676 + $0x58] sm:$0xf]
        %v2323 = vld [vmem:[%s676 + $0x5c] sm:$0xf]
        %v2324 = vld [vmem:[%s676 + $0x60] sm:$0xf]
        %v2325 = vld [vmem:[%s676 + $0x64] sm:$0xf]
        %v2326 = vld [vmem:[%s676 + $0x68] sm:$0xf]
        %v2327 = vld [vmem:[%s676 + $0x6c] sm:$0xf]
        %v2328 = vld [vmem:[%s676 + $0x70] sm:$0xf]
        %v2329 = vld [vmem:[%s676 + $0x74] sm:$0xf]
        %v2330 = vld [vmem:[%s676 + $0x78] sm:$0xf]
        %v2331 = vld [vmem:[%s676 + $0x7c] sm:$0xf]
        %v2332 = vld [vmem:[%s679] sm:$0x1]
        %v2334 = vlaneseq
        %v2335 = vshrl.u32 %v2334, 7
        %v2336 = vsub.s32 0, %v2335
        %v2337 = vrot.slane %v2332, %v2336
        %v2371 = vunpack.c.l.b16 %v2300
        %v2372 = vunpack.c.l.b16 %v2301
        %v2373 = vunpack.c.l.b16 %v2302
        %v2374 = vunpack.c.l.b16 %v2303
        %v2375 = vunpack.c.l.b16 %v2304
        %v2376 = vunpack.c.l.b16 %v2305
        %v2377 = vunpack.c.l.b16 %v2306
        %v2378 = vunpack.c.l.b16 %v2307
        %v2379 = vunpack.c.l.b16 %v2308
        %v2380 = vunpack.c.l.b16 %v2309
        %v2381 = vunpack.c.l.b16 %v2310
        %v2382 = vunpack.c.l.b16 %v2311
        %v2383 = vunpack.c.l.b16 %v2312
        %v2384 = vunpack.c.l.b16 %v2313
        %v2385 = vunpack.c.l.b16 %v2314
        %v2386 = vunpack.c.l.b16 %v2315
        %v2387 = vunpack.c.l.b16 %v2316
        %v2388 = vunpack.c.l.b16 %v2317
        %v2389 = vunpack.c.l.b16 %v2318
        %v2390 = vunpack.c.l.b16 %v2319
        %v2391 = vunpack.c.l.b16 %v2320
        %v2392 = vunpack.c.l.b16 %v2321
        %v2393 = vunpack.c.l.b16 %v2322
        %v2394 = vunpack.c.l.b16 %v2323
        %v2395 = vunpack.c.l.b16 %v2324
        %v2396 = vunpack.c.l.b16 %v2325
        %v2397 = vunpack.c.l.b16 %v2326
        %v2398 = vunpack.c.l.b16 %v2327
        %v2399 = vunpack.c.l.b16 %v2328
        %v2400 = vunpack.c.l.b16 %v2329
        %v2401 = vunpack.c.l.b16 %v2330
        %v2402 = vunpack.c.l.b16 %v2331
        %v2403 = vpack.c.b16 %v2372, %v2371
        %v2404 = vpack.c.b16 %v2374, %v2373
        %v2405 = vpack.c.b16 %v2376, %v2375
        %v2406 = vpack.c.b16 %v2378, %v2377
        %v2407 = vpack.c.b16 %v2380, %v2379
        %v2408 = vpack.c.b16 %v2382, %v2381
        %v2409 = vpack.c.b16 %v2384, %v2383
        %v2410 = vpack.c.b16 %v2386, %v2385
        %v2411 = vpack.c.b16 %v2388, %v2387
        %v2412 = vpack.c.b16 %v2390, %v2389
        %v2413 = vpack.c.b16 %v2392, %v2391
        %v2414 = vpack.c.b16 %v2394, %v2393
        %v2415 = vpack.c.b16 %v2396, %v2395
        %v2416 = vpack.c.b16 %v2398, %v2397
        %v2417 = vpack.c.b16 %v2400, %v2399
        %v2418 = vpack.c.b16 %v2402, %v2401
        %2435 = vmatprep.subr.bf16.mxu0 0
        %2436 = vmatpush1.bf16.msra.mxu0 %v2403
        %2437 = vmatprep.subr.bf16.mxu0 0
        %2438 = vmatpush1.bf16.msra.mxu0 %v2404
        %2439 = vmatprep.subr.bf16.mxu0 0
        %2440 = vmatpush1.bf16.msra.mxu0 %v2405
        %2441 = vmatprep.subr.bf16.mxu0 0
        %2442 = vmatpush1.bf16.msra.mxu0 %v2406
        %2443 = vmatprep.subr.bf16.mxu0 0
        %2444 = vmatpush1.bf16.msra.mxu0 %v2407
        %2445 = vmatprep.subr.bf16.mxu0 0
        %2446 = vmatpush1.bf16.msra.mxu0 %v2408
        %2447 = vmatprep.subr.bf16.mxu0 0
        %2448 = vmatpush1.bf16.msra.mxu0 %v2409
        %2449 = vmatprep.subr.bf16.mxu0 0
        %2450 = vmatpush1.bf16.msra.mxu0 %v2410
        %2451 = vmatprep.subr.bf16.mxu0 0
        %2452 = vmatpush1.bf16.msra.mxu0 %v2411
        %2453 = vmatprep.subr.bf16.mxu0 0
        %2454 = vmatpush1.bf16.msra.mxu0 %v2412
        %2455 = vmatprep.subr.bf16.mxu0 0
        %2456 = vmatpush1.bf16.msra.mxu0 %v2413
        %2457 = vmatprep.subr.bf16.mxu0 0
        %2458 = vmatpush1.bf16.msra.mxu0 %v2414
        %2459 = vmatprep.subr.bf16.mxu0 0
        %2460 = vmatpush1.bf16.msra.mxu0 %v2415
        %2461 = vmatprep.subr.bf16.mxu0 0
        %2462 = vmatpush1.bf16.msra.mxu0 %v2416
        %2463 = vmatprep.subr.bf16.mxu0 0
        %2464 = vmatpush1.bf16.msra.mxu0 %v2417
        %2465 = vmatprep.subr.bf16.mxu0 0
        %2466 = vmatpush1.bf16.msra.mxu0 %v2418
        %2467 = vmatprep.mubr.bf16.mxu0 %v2299
        %2468 = vmatmul.mubr.bf16.gmra.mrb[0].mxu0 %v2298
        %v2469 = vpop.f32.mrb[0].mxu0
        %v2470 = vadd.f32 %v2337, %v2469
        %v2471 = vpop.f32.mrb[0].mxu0
        %v2472 = vpop.f32.mrb[0].mxu0
        %v2473 = vadd.f32 %v2337, %v2472
        %v2474 = vpop.f32.mrb[0].mxu0
        %2475 = vdwg.mxu0
        %v2476 = vadd.f32 %v2108, %v2470
        %v2477 = vadd.f32 %v2109, %v2473
        %v2478 = vld [vmem:[%s682] sm:$0x1]
        %v2479 = vld [vmem:[%s685] sm:$0x1]
        %2480 = vadd.xlane.f32.xlu0 %v2476
        %v2481 = vpop.xlane.xlu0 %2480
        %2482 = vadd.xlane.f32.xlu0 %v2477
        %v2483 = vpop.xlane.xlu0 %2482
        %v2484 = vmul.f32 %v2481, %v2075
        %v2485 = vmul.f32 %v2483, %v2075
        %v2486 = vsub.f32 %v2476, %v2484
        %v2487 = vsub.f32 %v2477, %v2485
        %v2488 = vmul.f32 %v2486, %v2486
        %v2489 = vmul.f32 %v2487, %v2487
        %2490 = vadd.xlane.f32.xlu0 %v2488
        %v2491 = vpop.xlane.xlu0 %2490
        %2492 = vadd.xlane.f32.xlu0 %v2489
        %v2493 = vpop.xlane.xlu0 %2492
        %v2494 = vmul.f32 %v2491, %v2075
        %v2495 = vmul.f32 %v2493, %v2075
        %v2496 = vadd.f32 %v2494, 1e-05
        %v2497 = vadd.f32 %v2495, 1e-05
        %v2498 = vrsqrt.pop %v2496
        %v2499 = vrsqrt.pop %v2497
        %v2500 = vmul.f32 %v2486, %v2498
        %v2501 = vmul.f32 %v2487, %v2499
        %v2503 = vlaneseq
        %v2504 = vshrl.u32 %v2503, 7
        %v2505 = vsub.s32 0, %v2504
        %v2506 = vrot.slane %v2478, %v2505
        %v2508 = vmul.f32 %v2500, %v2506
        %v2509 = vmul.f32 %v2501, %v2506
        %v2511 = vlaneseq
        %v2512 = vshrl.u32 %v2511, 7
        %v2513 = vsub.s32 0, %v2512
        %v2514 = vrot.slane %v2479, %v2513
        %v2516 = vadd.f32 %v2508, %v2514
        %v2517 = vadd.f32 %v2509, %v2514
        %2518 = vst [vmem:[#allocation2] sm:$0xff] %v2516
        %2519 = vst [vmem:[#allocation2 + $0x8] sm:$0xff] %v2517
        %p2520 = scmp.eq.s32.totalorder %s28, 1
        // Predicated region
        $region89: #{timemae_forward.1} parent=83 // pred_check
          %p2521 = pneg %p2520
        $region90: #{timemae_forward.1} parent=83 // pred_check_branch
          %2523 = sbr.rel (%p2521) target = $region92
        $region91: #{timemae_forward.1} parent=83 // pred_region
          %v2524 = vrot.slane %v2516, 4
          %v2525 = vadd.f32 %v2516, %v2524
          %v2526 = vrot.slane %v2525, 2
          %v2527 = vadd.f32 %v2525, %v2526
          %v2528 = vrot.slane %v2527, 1
          %v2529 = vadd.f32 %v2527, %v2528
          %v2530 = vrot.slane %v2517, 4
          %v2531 = vadd.f32 %v2517, %v2530
          %v2532 = vrot.slane %v2531, 2
          %v2533 = vadd.f32 %v2531, %v2532
          %v2534 = vrot.slane %v2533, 1
          %v2535 = vadd.f32 %v2533, %v2534
          %v2536 = vrcp.pop 8.0
          %v2537 = vmul.f32 %v2529, %v2536
          %v2538 = vmul.f32 %v2535, %v2536
          %vm2541 = vcmask 1041409
          %v2542 = vsel %vm2541, %v2538, %v2537
          %2544 = vst [vmem:[#allocation4] sm:$0x3] %v2542
        $region92: #{timemae_forward.1} parent=83 // pred_fallthru
          _
        // Predicated region
        $region93: #{timemae_forward.1} parent=83 // pred_check
          %p2545 = pneg %p437
        $region94: #{timemae_forward.1} parent=83 // pred_check_branch
          %2547 = sbr.rel (%p2545) target = $region96
        $region95: #{timemae_forward.1} parent=83 // pred_region
          %s2549 = ssub.s32 32, 32
          %2550 = vsyncadd [#allocation5], %s2549
          %s2552 = sshll.u32 [#allocation4], 4
          %s2553 = int_to_ptr.vmem [resolvable:$true] %s2552
          %2555 = dma.vmem_to_hbm [thread:$0]  %s2553, 32, %s16, [#allocation5]
        $region96: #{timemae_forward.1} parent=83 // pred_fallthru
          _
        // Predicated region
        $region97: #{timemae_forward.1} parent=83 // pred_check
          %p2556 = pneg %p437
        $region98: #{timemae_forward.1} parent=83 // pred_check_branch
          %2558 = sbr.rel (%p2556) target = $region100
        $region99: #{timemae_forward.1} parent=83 // pred_region
          %2559 = dma.done [#allocation5], 32
        $region100: #{timemae_forward.1} parent=83 // pred_fallthru
          _
      $region84: #{timemae_forward.1} parent=5 // pred_fallthru
        _
      %p2560 = scmp.le.s32.totalorder 2, %s23
      // Predicated region
      $region101: #{timemae_forward.1} parent=5 // pred_check
        %p2561 = pneg %p2560
      $region102: #{timemae_forward.1} parent=5 // pred_check_branch
        %2563 = sbr.rel (%p2561) target = $region104
      $region103: #{timemae_forward.1} parent=5 // pred_region
        %s2564 = ssub.s32 %s23, 2
      $region104: #{timemae_forward.1} parent=5 // pred_fallthru
        _
    $region6: #{timemae_forward.1} parent=1 // loop_footer
      %s27 = sadd.s32 1, %s23
    $region7: #{timemae_forward.1} parent=1 // loop_footer_branch
      %22 = sbr.rel target = $region3
    $region8: #{timemae_forward.1} parent=1 // loop_exit
      _
    %2565 = vsyncpa [#allocation5], 1
    %s2566 = scalar_lea.sflag [#allocation5], 1
    %2567 = vsyncpa %s2566, 1

</llo_original>
